<compile_context>
chip_gen: v7x
topology: tpu7x:2x2x1
jax: 0.10.0
libtpu: 0.0.40
codegen_flags: <defaults>
</compile_context>

<pallas_src>
import math

import jax
import jax.numpy as jnp
from jax import lax
from jax.experimental import pallas as pl
from jax.experimental.pallas import tpu as pltpu

D_MODEL = 32
NUM_HEADS = 4
DEPTH = D_MODEL // NUM_HEADS
D_FF = 64
MAX_REL_DIST = 10
LN_EPS = 1e-6
NEG_INF = -1e9
VEC_W = max(D_MODEL, D_FF)   # packed row-vector slab width


def _layer_norm(x, w, b, eps):
    mu = jnp.mean(x, axis=-1, keepdims=True)
    var = jnp.mean((x - mu) ** 2, axis=-1, keepdims=True)
    return (x - mu) * lax.rsqrt(var + eps) * w + b


def decoder_layer_kernel(x_ref, mask_ref, vec_ref, wqkv_ref, bqkv_ref, e_ref,
                         wo_ref, w1_ref, w2_ref, out_ref):
    D, H, dp = D_MODEL, NUM_HEADS, DEPTH
    x = x_ref[...]                               # (L, D) -- one batch element
    L = x.shape[0]

    # packed LN / bias vectors: rows [ln1w, ln1b, ln2w, ln2b, bo, b2, b1, pad]
    vec = vec_ref[...]
    ln1w, ln1b = vec[0:1, :D], vec[1:2, :D]
    ln2w, ln2b = vec[2:3, :D], vec[3:4, :D]
    bo, b2 = vec[4:5, :D], vec[5:6, :D]
    b1 = vec[6:7, :D_FF]

    # ---- sublayer 1: pre-LN + relative multi-head self-attention ----
    y = _layer_norm(x, ln1w, ln1b, LN_EPS)
    y_b = jnp.broadcast_to(y, (H, L, D))         # head-batched view (no lane slicing)

    wqkv = wqkv_ref[...]                         # (3, H, D, dp), pre-shaped in wrapper
    bqkv = bqkv_ref[...]                         # (3, H, 1, dp)
    q3 = jnp.einsum('hld,hdk->hlk', y_b, wqkv[0],
                    preferred_element_type=jnp.float32) + bqkv[0]     # (H, L, dp)
    k3 = jnp.einsum('hld,hdk->hlk', y_b, wqkv[1],
                    preferred_element_type=jnp.float32) + bqkv[1]     # (H, L, dp)
    v3 = jnp.einsum('hld,hdk->hlk', y_b, wqkv[2],
                    preferred_element_type=jnp.float32) + bqkv[2]     # (H, L, dp)
    e3 = e_ref[...]                                                   # (H, L, dp)

    qk = jnp.einsum('hqd,hkd->hqk', q3, k3, preferred_element_type=jnp.float32)  # (H, L, L)
    qe = jnp.einsum('hqd,hkd->hqk', q3, e3, preferred_element_type=jnp.float32)  # (H, L, L)

    # skew(QE^T): exact pad/reshape/slice semantics of Huang et al., expressed
    # as static circular rolls + selects on the per-batch (H, L, L) block.
    r = lax.broadcasted_iota(jnp.int32, (L, L), 0)
    c = lax.broadcasted_iota(jnp.int32, (L, L), 1)
    y_sh = jnp.roll(qe, 1, axis=-1)                      # right-roll every row by 1
    for kb in range(max(1, (L - 1).bit_length())):       # + per-row roll by r (log trick)
        amt = 1 << kb
        y_sh = jnp.where((r & amt) > 0, jnp.roll(y_sh, amt, axis=-1), y_sh)
    z_sh = jnp.roll(y_sh, -1, axis=1)                    # z[h, i, :] = y[h, i+1, :]
    srel = jnp.where(c <= r, y_sh, jnp.where(c == r + 1, 0.0, z_sh))  # (H, L, L)

    m = mask_ref[...][0]                                 # (L, L), this batch's mask
    scale = 1.0 / math.sqrt(dp)
    logits = (qk + srel) * scale + m * NEG_INF
    logits = logits - jnp.max(logits, axis=-1, keepdims=True)
    p = jnp.exp(logits)
    p = p * pl.reciprocal(jnp.sum(p, axis=-1, keepdims=True), approx=True)
    o3 = jnp.einsum('hqk,hkd->hqd', p, v3, preferred_element_type=jnp.float32)   # (H, L, dp)

    # fold heads through wo (pre-shaped (H, dp, D)): batched matmul + head sum,
    # no lane concatenate and no per-head accumulation chain.
    attn = jnp.einsum('hld,hdo->hlo', o3, wo_ref[...],
                      preferred_element_type=jnp.float32).sum(axis=0) + bo       # (L, D)
    # TODO(synk): dropout1/dropout2 are identity here (eval-mode semantics).
    attn_out = x + attn

    # ---- sublayer 2: pre-LN + pointwise FFN ----
    f = _layer_norm(attn_out, ln2w, ln2b, LN_EPS)
    hdn = jnp.maximum(jnp.dot(f, w1_ref[...], preferred_element_type=jnp.float32) + b1, 0.0)
    ffn = jnp.dot(hdn, w2_ref[...], preferred_element_type=jnp.float32) + b2

    out_ref[...] = (ffn + attn_out).astype(out_ref.dtype)


def get_required_embeddings(E_weight, seq_len, max_len):
    """Exact semantics of MultiHeadAttention.get_required_embeddings."""
    first = E_weight[0:1]
    n_first = max(seq_len - max_len, 0)
    rest = E_weight[max(max_len - seq_len, 0):max_len]
    parts = [first] * n_first + [rest]
    return jnp.concatenate(parts, axis=0)


def decoder_layer(tgt, params, tgt_mask=None):
    B, L, D = tgt.shape
    assert D == D_MODEL
    H, dp = NUM_HEADS, DEPTH
    N = B * L
    x2 = tgt.reshape(N, D)

    # per-head-shaped projection weights: (3, H, D, dp) / (3, H, 1, dp)
    def w_heads(w):   # (D, D) -> (H, D, dp)
        return w.reshape(D, H, dp).transpose(1, 0, 2)

    def b_heads(b):   # (1, D) -> (H, 1, dp)
        return b.reshape(H, 1, dp)

    wqkv3 = jnp.stack([w_heads(params["wq"]), w_heads(params["wk"]),
                       w_heads(params["wv"])], axis=0)
    bqkv3 = jnp.stack([b_heads(params["bq"]), b_heads(params["bk"]),
                       b_heads(params["bv"])], axis=0)
    wo3 = params["wo"].reshape(H, dp, D)

    # pack all (1, D)/(1, D_FF) row vectors into one (8, VEC_W) slab
    def padrow(v):
        return jnp.pad(v, ((0, 0), (0, VEC_W - v.shape[1])))

    vecs = jnp.concatenate([
        padrow(params["ln1_w"]), padrow(params["ln1_b"]),
        padrow(params["ln2_w"]), padrow(params["ln2_b"]),
        padrow(params["bo"]), padrow(params["b2"]),
        padrow(params["b1"]), jnp.zeros((1, VEC_W), jnp.float32)], axis=0)       # (8, VEC_W)

    # relative position embeddings, pre-split into heads: (H, L, dp)
    e = get_required_embeddings(params["E"], L, MAX_REL_DIST)                     # (L, D)
    e3 = e.reshape(L, H, dp).transpose(1, 0, 2)

    # per-batch additive mask slab (tiny): supports (L,L), (1,L,L), (B,L,L).
    # TODO(synk): per-head (B,H,L,L) masks are not supported by this kernel.
    if tgt_mask is None:
        mask3 = jnp.zeros((B, L, L), jnp.float32)
    else:
        mask3 = jnp.broadcast_to(jnp.asarray(tgt_mask, jnp.float32), (B, L, L))

    in_specs = [
        pl.BlockSpec((L, D), lambda b: (b, 0)),                 # x (per-batch rows)
        pl.BlockSpec((1, L, L), lambda b: (b, 0, 0)),           # mask (per batch)
        pl.BlockSpec((8, VEC_W), lambda b: (0, 0)),             # packed LN weights / biases
        pl.BlockSpec((3, H, D, dp), lambda b: (0, 0, 0, 0)),    # per-head wq|wk|wv
        pl.BlockSpec((3, H, 1, dp), lambda b: (0, 0, 0, 0)),    # per-head bq|bk|bv
        pl.BlockSpec((H, L, dp), lambda b: (0, 0, 0)),          # rel-pos embeddings
        pl.BlockSpec((H, dp, D), lambda b: (0, 0, 0)),          # wo, per head
        pl.BlockSpec((D, D_FF), lambda b: (0, 0)),              # w1
        pl.BlockSpec((D_FF, D), lambda b: (0, 0)),              # w2
    ]
    out_specs = pl.BlockSpec((L, D), lambda b: (b, 0))

    out2 = pl.pallas_call(
        decoder_layer_kernel,
        out_shape=jax.ShapeDtypeStruct((N, D), jnp.float32),
        grid=(B,),                                              # per-batch grid
        in_specs=in_specs,
        out_specs=out_specs,
        compiler_params=pltpu.CompilerParams(dimension_semantics=("parallel",)),
    )(x2, mask3, vecs, wqkv3, bqkv3, e3, wo3, params["w1"], params["w2"])
    return out2.reshape(B, L, D)


# ---------------- pure-JAX reference (mirrors the torch forward) ----------------
def ref_decoder_layer(tgt, params, tgt_mask=None):
    B, L, D = tgt.shape
    H, dp = NUM_HEADS, DEPTH

    def ln(x, w, b):
        mu = x.mean(-1, keepdims=True)
        var = ((x - mu) ** 2).mean(-1, keepdims=True)
        return (x - mu) / jnp.sqrt(var + LN_EPS) * w + b

    def skew(t):
        padded = jnp.pad(t, [(0, 0)] * (t.ndim - 1) + [(1, 0)])
        srel = padded.reshape(-1, t.shape[-1] + 1, t.shape[-2])[:, 1:]
        return srel.reshape(t.shape)

    y = ln(tgt, params["ln1_w"], params["ln1_b"])
    q = y @ params["wq"] + params["bq"]
    k = y @ params["wk"] + params["bk"]
    v = y @ params["wv"] + params["bv"]
    e = get_required_embeddings(params["E"], L, MAX_REL_DIST)

    split = lambda z: jnp.swapaxes(z.reshape(*z.shape[:-1], H, dp), -2, -3)
    q, k, v, e = split(q), split(k), split(v), split(e)

    QKt = q @ jnp.swapaxes(k, -1, -2)
    QEt = q @ jnp.swapaxes(e, -1, -2)
    logits = (QKt + skew(QEt)) / math.sqrt(dp)
    if tgt_mask is not None:
        logits = logits + tgt_mask * NEG_INF
    attn = jax.nn.softmax(logits, axis=-1) @ v            # (B, H, L, dp)
    attn = jnp.swapaxes(attn, -2, -3).reshape(B, L, D)
    attn = attn @ params["wo"] + params["bo"]
    attn_out = tgt + attn

    f = ln(attn_out, params["ln2_w"], params["ln2_b"])
    ffn = jnp.maximum(f @ params["w1"] + params["b1"], 0.0) @ params["w2"] + params["b2"]
    return ffn + attn_out


def init_params(key):
    ks = jax.random.split(key, 17)
    w = lambda k, shape, s=0.1: s * jax.random.normal(k, shape, jnp.float32)
    return dict(
        ln1_w=1.0 + 0.05 * jax.random.normal(ks[0], (1, D_MODEL), jnp.float32),
        ln1_b=0.05 * jax.random.normal(ks[1], (1, D_MODEL), jnp.float32),
        wq=w(ks[2], (D_MODEL, D_MODEL)), bq=w(ks[3], (1, D_MODEL)),
        wk=w(ks[4], (D_MODEL, D_MODEL)), bk=w(ks[5], (1, D_MODEL)),
        wv=w(ks[6], (D_MODEL, D_MODEL)), bv=w(ks[7], (1, D_MODEL)),
        E=w(ks[8], (MAX_REL_DIST, D_MODEL)),
        wo=w(ks[9], (D_MODEL, D_MODEL)), bo=w(ks[10], (1, D_MODEL)),
        ln2_w=1.0 + 0.05 * jax.random.normal(ks[11], (1, D_MODEL), jnp.float32),
        ln2_b=0.05 * jax.random.normal(ks[12], (1, D_MODEL), jnp.float32),
        w1=w(ks[13], (D_MODEL, D_FF)), b1=w(ks[14], (1, D_FF)),
        w2=w(ks[15], (D_FF, D_MODEL)), b2=w(ks[16], (1, D_MODEL)),
    )


if __name__ == "__main__":
    B, L = 2, 8
    key = jax.random.PRNGKey(0)
    kp, kx = jax.random.split(key)
    params = init_params(kp)
    tgt = jax.random.normal(kx, (B, L, D_MODEL), jnp.float32)
    tgt_mask = jnp.triu(jnp.ones((L, L), jnp.float32), k=1)   # 1 => masked (causal)

    out = jax.block_until_ready(decoder_layer(tgt, params, tgt_mask))
    assert out.shape == (B, L, D_MODEL)
    ref = ref_decoder_layer(tgt, params, tgt_mask)
    err = float(jnp.max(jnp.abs(out - ref)))
    # 1e-3 tolerance: softmax normalization uses the EUP approximate reciprocal.
    assert jnp.allclose(out, ref, rtol=1e-3, atol=1e-3), f"masked: max abs err {err}"

    out_nm = jax.block_until_ready(decoder_layer(tgt, params, None))
    ref_nm = ref_decoder_layer(tgt, params, None)
    err_nm = float(jnp.max(jnp.abs(out_nm - ref_nm)))
    assert jnp.allclose(out_nm, ref_nm, rtol=1e-3, atol=1e-3), f"unmasked: max abs err {err_nm}"

    print("KERNEL_OK")
</pallas_src>

<mosaic_0001>
module attributes {stable_mosaic.version = 11 : i64} {
  func.func @decoder_layer_kernel(%arg0: i32, %arg1: memref<8x32xf32, #tpu.memory_space<vmem>>, %arg2: memref<1x8x8xf32, #tpu.memory_space<vmem>>, %arg3: memref<8x64xf32, #tpu.memory_space<vmem>>, %arg4: memref<3x4x32x8xf32, #tpu.memory_space<vmem>>, %arg5: memref<3x4x1x8xf32, #tpu.memory_space<vmem>>, %arg6: memref<4x8x8xf32, #tpu.memory_space<vmem>>, %arg7: memref<4x8x32xf32, #tpu.memory_space<vmem>>, %arg8: memref<32x64xf32, #tpu.memory_space<vmem>>, %arg9: memref<64x32xf32, #tpu.memory_space<vmem>>, %arg10: memref<8x32xf32, #tpu.memory_space<vmem>>) attributes {dimension_semantics = [#tpu.dimension_semantics<parallel>], iteration_bounds = array<i64: 2>, scalar_prefetch = 0 : i64, scratch_operands = 0 : i64, tpu.core_type = #tpu.core_type<tc>, window_params = [{transform_indices = @transform_0, window_bounds = array<i64: 8, 32>}, {transform_indices = @transform_1, window_bounds = array<i64: 1, 8, 8>}, {pipeline_mode = #tpu.pipeline_mode<synchronous>, transform_indices = @transform_2, window_bounds = array<i64: 8, 64>}, {pipeline_mode = #tpu.pipeline_mode<synchronous>, transform_indices = @transform_3, window_bounds = array<i64: 3, 4, 32, 8>}, {pipeline_mode = #tpu.pipeline_mode<synchronous>, transform_indices = @transform_4, window_bounds = array<i64: 3, 4, 1, 8>}, {pipeline_mode = #tpu.pipeline_mode<synchronous>, transform_indices = @transform_5, window_bounds = array<i64: 4, 8, 8>}, {pipeline_mode = #tpu.pipeline_mode<synchronous>, transform_indices = @transform_6, window_bounds = array<i64: 4, 8, 32>}, {pipeline_mode = #tpu.pipeline_mode<synchronous>, transform_indices = @transform_7, window_bounds = array<i64: 32, 64>}, {pipeline_mode = #tpu.pipeline_mode<synchronous>, transform_indices = @transform_8, window_bounds = array<i64: 64, 32>}, {transform_indices = @transform_9, window_bounds = array<i64: 8, 32>}]} {
    %c0 = arith.constant 0 : index
    %c0_0 = arith.constant 0 : index
    %0 = vector.load %arg1[%c0, %c0_0] : memref<8x32xf32, #tpu.memory_space<vmem>>, vector<8x32xf32>
    %c0_1 = arith.constant 0 : index
    %c0_2 = arith.constant 0 : index
    %1 = vector.load %arg3[%c0_1, %c0_2] : memref<8x64xf32, #tpu.memory_space<vmem>>, vector<8x64xf32>
    %2 = vector.extract_strided_slice %1 {offsets = [0, 0], sizes = [1, 32], strides = [1, 1]} : vector<8x64xf32> to vector<1x32xf32>
    %3 = vector.extract_strided_slice %1 {offsets = [1, 0], sizes = [1, 32], strides = [1, 1]} : vector<8x64xf32> to vector<1x32xf32>
    %4 = vector.extract_strided_slice %1 {offsets = [2, 0], sizes = [1, 32], strides = [1, 1]} : vector<8x64xf32> to vector<1x32xf32>
    %5 = vector.extract_strided_slice %1 {offsets = [3, 0], sizes = [1, 32], strides = [1, 1]} : vector<8x64xf32> to vector<1x32xf32>
    %6 = vector.extract_strided_slice %1 {offsets = [4, 0], sizes = [1, 32], strides = [1, 1]} : vector<8x64xf32> to vector<1x32xf32>
    %7 = vector.extract_strided_slice %1 {offsets = [5, 0], sizes = [1, 32], strides = [1, 1]} : vector<8x64xf32> to vector<1x32xf32>
    %8 = vector.extract_strided_slice %1 {offsets = [6, 0], sizes = [1, 64], strides = [1, 1]} : vector<8x64xf32> to vector<1x64xf32>
    %cst = arith.constant dense<0.000000e+00> : vector<8xf32>
    %9 = vector.multi_reduction <add>, %0, %cst [1] : vector<8x32xf32> to vector<8xf32>
    %10 = vector.shape_cast %9 : vector<8xf32> to vector<8x1xf32>
    %cst_3 = arith.constant 3.200000e+01 : f32
    %11 = vector.broadcast %cst_3 : f32 to vector<8x1xf32>
    %12 = arith.divf %10, %11 : vector<8x1xf32>
    %13 = vector.broadcast %12 : vector<8x1xf32> to vector<8x32xf32>
    %14 = arith.subf %0, %13 : vector<8x32xf32>
    %15 = arith.mulf %14, %14 : vector<8x32xf32>
    %cst_4 = arith.constant dense<0.000000e+00> : vector<8xf32>
    %16 = vector.multi_reduction <add>, %15, %cst_4 [1] : vector<8x32xf32> to vector<8xf32>
    %17 = vector.shape_cast %16 : vector<8xf32> to vector<8x1xf32>
    %cst_5 = arith.constant 3.200000e+01 : f32
    %18 = vector.broadcast %cst_5 : f32 to vector<8x1xf32>
    %19 = arith.divf %17, %18 : vector<8x1xf32>
    %20 = vector.broadcast %12 : vector<8x1xf32> to vector<8x32xf32>
    %21 = arith.subf %0, %20 : vector<8x32xf32>
    %cst_6 = arith.constant 9.99999997E-7 : f32
    %22 = vector.broadcast %cst_6 : f32 to vector<8x1xf32>
    %23 = arith.addf %19, %22 : vector<8x1xf32>
    %24 = math.rsqrt %23 : vector<8x1xf32>
    %25 = vector.broadcast %24 : vector<8x1xf32> to vector<8x32xf32>
    %26 = arith.mulf %21, %25 : vector<8x32xf32>
    %27 = vector.broadcast %2 : vector<1x32xf32> to vector<8x32xf32>
    %28 = arith.mulf %26, %27 : vector<8x32xf32>
    %29 = vector.broadcast %3 : vector<1x32xf32> to vector<8x32xf32>
    %30 = arith.addf %28, %29 : vector<8x32xf32>
    %31 = vector.shape_cast %30 : vector<8x32xf32> to vector<1x8x32xf32>
    %32 = vector.broadcast %31 : vector<1x8x32xf32> to vector<4x8x32xf32>
    %c0_7 = arith.constant 0 : index
    %c0_8 = arith.constant 0 : index
    %c0_9 = arith.constant 0 : index
    %c0_10 = arith.constant 0 : index
    %33 = vector.load %arg4[%c0_7, %c0_8, %c0_9, %c0_10] : memref<3x4x32x8xf32, #tpu.memory_space<vmem>>, vector<3x4x32x8xf32>
    %c0_11 = arith.constant 0 : index
    %c0_12 = arith.constant 0 : index
    %c0_13 = arith.constant 0 : index
    %c0_14 = arith.constant 0 : index
    %34 = vector.load %arg5[%c0_11, %c0_12, %c0_13, %c0_14] : memref<3x4x1x8xf32, #tpu.memory_space<vmem>>, vector<3x4x1x8xf32>
    %35 = vector.extract_strided_slice %33 {offsets = [0, 0, 0, 0], sizes = [1, 4, 32, 8], strides = [1, 1, 1, 1]} : vector<3x4x32x8xf32> to vector<1x4x32x8xf32>
    %36 = vector.shape_cast %35 : vector<1x4x32x8xf32> to vector<4x32x8xf32>
    "tpu.trace_start"() <{level = 10 : i32, message = "hld,hdk->hlk"}> : () -> ()
    %cst_15 = arith.constant dense<0.000000e+00> : vector<4x8x8xf32>
    %37 = tpu.matmul %32, %36, %cst_15 {dimension_numbers = #tpu.dot_dimension_numbers<[2], [1], [1], [2], [0, 0, 0, 1, 1, 2], [0], [0]>} : vector<4x8x32xf32>, vector<4x32x8xf32>, vector<4x8x8xf32> -> vector<4x8x8xf32>
    "tpu.trace_stop"() : () -> ()
    %38 = vector.extract_strided_slice %34 {offsets = [0, 0, 0, 0], sizes = [1, 4, 1, 8], strides = [1, 1, 1, 1]} : vector<3x4x1x8xf32> to vector<1x4x1x8xf32>
    %39 = vector.shape_cast %38 : vector<1x4x1x8xf32> to vector<4x1x8xf32>
    %40 = vector.broadcast %39 : vector<4x1x8xf32> to vector<4x8x8xf32>
    %41 = arith.addf %37, %40 : vector<4x8x8xf32>
    %42 = vector.extract_strided_slice %33 {offsets = [1, 0, 0, 0], sizes = [1, 4, 32, 8], strides = [1, 1, 1, 1]} : vector<3x4x32x8xf32> to vector<1x4x32x8xf32>
    %43 = vector.shape_cast %42 : vector<1x4x32x8xf32> to vector<4x32x8xf32>
    "tpu.trace_start"() <{level = 10 : i32, message = "hld,hdk->hlk"}> : () -> ()
    %cst_16 = arith.constant dense<0.000000e+00> : vector<4x8x8xf32>
    %44 = tpu.matmul %32, %43, %cst_16 {dimension_numbers = #tpu.dot_dimension_numbers<[2], [1], [1], [2], [0, 0, 0, 1, 1, 2], [0], [0]>} : vector<4x8x32xf32>, vector<4x32x8xf32>, vector<4x8x8xf32> -> vector<4x8x8xf32>
    "tpu.trace_stop"() : () -> ()
    %45 = vector.extract_strided_slice %34 {offsets = [1, 0, 0, 0], sizes = [1, 4, 1, 8], strides = [1, 1, 1, 1]} : vector<3x4x1x8xf32> to vector<1x4x1x8xf32>
    %46 = vector.shape_cast %45 : vector<1x4x1x8xf32> to vector<4x1x8xf32>
    %47 = vector.broadcast %46 : vector<4x1x8xf32> to vector<4x8x8xf32>
    %48 = arith.addf %44, %47 : vector<4x8x8xf32>
    %49 = vector.extract_strided_slice %33 {offsets = [2, 0, 0, 0], sizes = [1, 4, 32, 8], strides = [1, 1, 1, 1]} : vector<3x4x32x8xf32> to vector<1x4x32x8xf32>
    %50 = vector.shape_cast %49 : vector<1x4x32x8xf32> to vector<4x32x8xf32>
    "tpu.trace_start"() <{level = 10 : i32, message = "hld,hdk->hlk"}> : () -> ()
    %cst_17 = arith.constant dense<0.000000e+00> : vector<4x8x8xf32>
    %51 = tpu.matmul %32, %50, %cst_17 {dimension_numbers = #tpu.dot_dimension_numbers<[2], [1], [1], [2], [0, 0, 0, 1, 1, 2], [0], [0]>} : vector<4x8x32xf32>, vector<4x32x8xf32>, vector<4x8x8xf32> -> vector<4x8x8xf32>
    "tpu.trace_stop"() : () -> ()
    %52 = vector.extract_strided_slice %34 {offsets = [2, 0, 0, 0], sizes = [1, 4, 1, 8], strides = [1, 1, 1, 1]} : vector<3x4x1x8xf32> to vector<1x4x1x8xf32>
    %53 = vector.shape_cast %52 : vector<1x4x1x8xf32> to vector<4x1x8xf32>
    %54 = vector.broadcast %53 : vector<4x1x8xf32> to vector<4x8x8xf32>
    %55 = arith.addf %51, %54 : vector<4x8x8xf32>
    %c0_18 = arith.constant 0 : index
    %c0_19 = arith.constant 0 : index
    %c0_20 = arith.constant 0 : index
    %56 = vector.load %arg6[%c0_18, %c0_19, %c0_20] : memref<4x8x8xf32, #tpu.memory_space<vmem>>, vector<4x8x8xf32>
    "tpu.trace_start"() <{level = 10 : i32, message = "hqd,hkd->hqk"}> : () -> ()
    %cst_21 = arith.constant dense<0.000000e+00> : vector<4x8x8xf32>
    %57 = tpu.matmul %41, %48, %cst_21 {dimension_numbers = #tpu.dot_dimension_numbers<[2], [2], [1], [1], [0, 0, 0, 1, 1, 1], [0], [0]>} : vector<4x8x8xf32>, vector<4x8x8xf32>, vector<4x8x8xf32> -> vector<4x8x8xf32>
    %cst_22 = arith.constant dense<0.000000e+00> : vector<4x8x8xf32>
    %58 = tpu.matmul %41, %56, %cst_22 {dimension_numbers = #tpu.dot_dimension_numbers<[2], [2], [1], [1], [0, 0, 0, 1, 1, 1], [0], [0]>} : vector<4x8x8xf32>, vector<4x8x8xf32>, vector<4x8x8xf32> -> vector<4x8x8xf32>
    "tpu.trace_stop"() : () -> ()
    %59 = tpu.iota {dimensions = array<i32: 0>} : vector<8x8xi32>
    %60 = tpu.iota {dimensions = array<i32: 1>} : vector<8x8xi32>
    %61 = vector.extract_strided_slice %58 {offsets = [0, 0, 7], sizes = [4, 8, 1], strides = [1, 1, 1]} : vector<4x8x8xf32> to vector<4x8x1xf32>
    %62 = vector.extract_strided_slice %58 {offsets = [0, 0, 0], sizes = [4, 8, 7], strides = [1, 1, 1]} : vector<4x8x8xf32> to vector<4x8x7xf32>
    %63 = tpu.concatenate %61, %62 in 2 : vector<4x8x1xf32>, vector<4x8x7xf32> -> vector<4x8x8xf32>
    %c1_i32 = arith.constant 1 : i32
    %64 = vector.broadcast %c1_i32 : i32 to vector<8x8xi32>
    %65 = arith.andi %59, %64 : vector<8x8xi32>
    %c0_i32 = arith.constant 0 : i32
    %66 = vector.broadcast %c0_i32 : i32 to vector<8x8xi32>
    %67 = arith.cmpi sgt, %65, %66 : vector<8x8xi32>
    %68 = vector.extract_strided_slice %63 {offsets = [0, 0, 7], sizes = [4, 8, 1], strides = [1, 1, 1]} : vector<4x8x8xf32> to vector<4x8x1xf32>
    %69 = vector.extract_strided_slice %63 {offsets = [0, 0, 0], sizes = [4, 8, 7], strides = [1, 1, 1]} : vector<4x8x8xf32> to vector<4x8x7xf32>
    %70 = tpu.concatenate %68, %69 in 2 : vector<4x8x1xf32>, vector<4x8x7xf32> -> vector<4x8x8xf32>
    %71 = vector.shape_cast %67 : vector<8x8xi1> to vector<1x8x8xi1>
    %72 = vector.broadcast %71 : vector<1x8x8xi1> to vector<4x8x8xi1>
    %73 = arith.select %72, %70, %63 : vector<4x8x8xi1>, vector<4x8x8xf32>
    %c2_i32 = arith.constant 2 : i32
    %74 = vector.broadcast %c2_i32 : i32 to vector<8x8xi32>
    %75 = arith.andi %59, %74 : vector<8x8xi32>
    %c0_i32_23 = arith.constant 0 : i32
    %76 = vector.broadcast %c0_i32_23 : i32 to vector<8x8xi32>
    %77 = arith.cmpi sgt, %75, %76 : vector<8x8xi32>
    %78 = vector.extract_strided_slice %73 {offsets = [0, 0, 6], sizes = [4, 8, 2], strides = [1, 1, 1]} : vector<4x8x8xf32> to vector<4x8x2xf32>
    %79 = vector.extract_strided_slice %73 {offsets = [0, 0, 0], sizes = [4, 8, 6], strides = [1, 1, 1]} : vector<4x8x8xf32> to vector<4x8x6xf32>
    %80 = tpu.concatenate %78, %79 in 2 : vector<4x8x2xf32>, vector<4x8x6xf32> -> vector<4x8x8xf32>
    %81 = vector.shape_cast %77 : vector<8x8xi1> to vector<1x8x8xi1>
    %82 = vector.broadcast %81 : vector<1x8x8xi1> to vector<4x8x8xi1>
    %83 = arith.select %82, %80, %73 : vector<4x8x8xi1>, vector<4x8x8xf32>
    %c4_i32 = arith.constant 4 : i32
    %84 = vector.broadcast %c4_i32 : i32 to vector<8x8xi32>
    %85 = arith.andi %59, %84 : vector<8x8xi32>
    %c0_i32_24 = arith.constant 0 : i32
    %86 = vector.broadcast %c0_i32_24 : i32 to vector<8x8xi32>
    %87 = arith.cmpi sgt, %85, %86 : vector<8x8xi32>
    %88 = vector.extract_strided_slice %83 {offsets = [0, 0, 4], sizes = [4, 8, 4], strides = [1, 1, 1]} : vector<4x8x8xf32> to vector<4x8x4xf32>
    %89 = vector.extract_strided_slice %83 {offsets = [0, 0, 0], sizes = [4, 8, 4], strides = [1, 1, 1]} : vector<4x8x8xf32> to vector<4x8x4xf32>
    %90 = tpu.concatenate %88, %89 in 2 : vector<4x8x4xf32>, vector<4x8x4xf32> -> vector<4x8x8xf32>
    %91 = vector.shape_cast %87 : vector<8x8xi1> to vector<1x8x8xi1>
    %92 = vector.broadcast %91 : vector<1x8x8xi1> to vector<4x8x8xi1>
    %93 = arith.select %92, %90, %83 : vector<4x8x8xi1>, vector<4x8x8xf32>
    %94 = vector.extract_strided_slice %93 {offsets = [0, 1, 0], sizes = [4, 7, 8], strides = [1, 1, 1]} : vector<4x8x8xf32> to vector<4x7x8xf32>
    %95 = vector.extract_strided_slice %93 {offsets = [0, 0, 0], sizes = [4, 1, 8], strides = [1, 1, 1]} : vector<4x8x8xf32> to vector<4x1x8xf32>
    %96 = tpu.concatenate %94, %95 in 1 : vector<4x7x8xf32>, vector<4x1x8xf32> -> vector<4x8x8xf32>
    %97 = arith.cmpi sle, %60, %59 : vector<8x8xi32>
    %c1_i32_25 = arith.constant 1 : i32
    %98 = vector.broadcast %c1_i32_25 : i32 to vector<8x8xi32>
    %99 = arith.addi %59, %98 : vector<8x8xi32>
    %100 = arith.cmpi eq, %60, %99 : vector<8x8xi32>
    %cst_26 = arith.constant 0.000000e+00 : f32
    %101 = vector.shape_cast %100 : vector<8x8xi1> to vector<1x8x8xi1>
    %102 = vector.broadcast %101 : vector<1x8x8xi1> to vector<4x8x8xi1>
    %103 = vector.broadcast %cst_26 : f32 to vector<4x8x8xf32>
    %104 = arith.select %102, %103, %96 : vector<4x8x8xi1>, vector<4x8x8xf32>
    %105 = vector.shape_cast %97 : vector<8x8xi1> to vector<1x8x8xi1>
    %106 = vector.broadcast %105 : vector<1x8x8xi1> to vector<4x8x8xi1>
    %107 = arith.select %106, %93, %104 : vector<4x8x8xi1>, vector<4x8x8xf32>
    %c0_27 = arith.constant 0 : index
    %c0_28 = arith.constant 0 : index
    %c0_29 = arith.constant 0 : index
    %108 = vector.load %arg2[%c0_27, %c0_28, %c0_29] : memref<1x8x8xf32, #tpu.memory_space<vmem>>, vector<1x8x8xf32>
    %109 = vector.shape_cast %108 : vector<1x8x8xf32> to vector<8x8xf32>
    %110 = arith.addf %57, %107 : vector<4x8x8xf32>
    %cst_30 = arith.constant 0.353553385 : f32
    %111 = vector.broadcast %cst_30 : f32 to vector<4x8x8xf32>
    %112 = arith.mulf %110, %111 : vector<4x8x8xf32>
    %cst_31 = arith.constant -1.000000e+09 : f32
    %113 = vector.broadcast %cst_31 : f32 to vector<8x8xf32>
    %114 = arith.mulf %109, %113 : vector<8x8xf32>
    %115 = vector.shape_cast %114 : vector<8x8xf32> to vector<1x8x8xf32>
    %116 = vector.broadcast %115 : vector<1x8x8xf32> to vector<4x8x8xf32>
    %117 = arith.addf %112, %116 : vector<4x8x8xf32>
    %cst_32 = arith.constant dense<0xFF800000> : vector<4x8xf32>
    %118 = vector.multi_reduction <maximumf>, %117, %cst_32 [2] : vector<4x8x8xf32> to vector<4x8xf32>
    %119 = vector.shape_cast %118 : vector<4x8xf32> to vector<4x8x1xf32>
    %120 = vector.broadcast %119 : vector<4x8x1xf32> to vector<4x8x8xf32>
    %121 = arith.subf %117, %120 : vector<4x8x8xf32>
    %122 = math.exp %121 : vector<4x8x8xf32>
    %cst_33 = arith.constant dense<0.000000e+00> : vector<4x8xf32>
    %123 = vector.multi_reduction <add>, %122, %cst_33 [2] : vector<4x8x8xf32> to vector<4x8xf32>
    %124 = vector.shape_cast %123 : vector<4x8xf32> to vector<4x8x1xf32>
    %125 = tpu.reciprocal %124 {approx = true} : vector<4x8x1xf32> -> vector<4x8x1xf32>
    %126 = vector.broadcast %125 : vector<4x8x1xf32> to vector<4x8x8xf32>
    %127 = arith.mulf %122, %126 : vector<4x8x8xf32>
    "tpu.trace_start"() <{level = 10 : i32, message = "hqk,hkd->hqd"}> : () -> ()
    %cst_34 = arith.constant dense<0.000000e+00> : vector<4x8x8xf32>
    %128 = tpu.matmul %127, %55, %cst_34 {dimension_numbers = #tpu.dot_dimension_numbers<[2], [1], [1], [2], [0, 0, 0, 1, 1, 2], [0], [0]>} : vector<4x8x8xf32>, vector<4x8x8xf32>, vector<4x8x8xf32> -> vector<4x8x8xf32>
    "tpu.trace_stop"() : () -> ()
    %c0_35 = arith.constant 0 : index
    %c0_36 = arith.constant 0 : index
    %c0_37 = arith.constant 0 : index
    %129 = vector.load %arg7[%c0_35, %c0_36, %c0_37] : memref<4x8x32xf32, #tpu.memory_space<vmem>>, vector<4x8x32xf32>
    "tpu.trace_start"() <{level = 10 : i32, message = "hld,hdo->hlo"}> : () -> ()
    %cst_38 = arith.constant dense<0.000000e+00> : vector<4x8x32xf32>
    %130 = tpu.matmul %128, %129, %cst_38 {dimension_numbers = #tpu.dot_dimension_numbers<[2], [1], [1], [2], [0, 0, 0, 1, 1, 2], [0], [0]>} : vector<4x8x8xf32>, vector<4x8x32xf32>, vector<4x8x32xf32> -> vector<4x8x32xf32>
    "tpu.trace_stop"() : () -> ()
    %cst_39 = arith.constant dense<0.000000e+00> : vector<8x32xf32>
    %131 = vector.multi_reduction <add>, %130, %cst_39 [0] : vector<4x8x32xf32> to vector<8x32xf32>
    %132 = vector.broadcast %6 : vector<1x32xf32> to vector<8x32xf32>
    %133 = arith.addf %131, %132 : vector<8x32xf32>
    %134 = arith.addf %0, %133 : vector<8x32xf32>
    %cst_40 = arith.constant dense<0.000000e+00> : vector<8xf32>
    %135 = vector.multi_reduction <add>, %134, %cst_40 [1] : vector<8x32xf32> to vector<8xf32>
    %136 = vector.shape_cast %135 : vector<8xf32> to vector<8x1xf32>
    %cst_41 = arith.constant 3.200000e+01 : f32
    %137 = vector.broadcast %cst_41 : f32 to vector<8x1xf32>
    %138 = arith.divf %136, %137 : vector<8x1xf32>
    %139 = vector.broadcast %138 : vector<8x1xf32> to vector<8x32xf32>
    %140 = arith.subf %134, %139 : vector<8x32xf32>
    %141 = arith.mulf %140, %140 : vector<8x32xf32>
    %cst_42 = arith.constant dense<0.000000e+00> : vector<8xf32>
    %142 = vector.multi_reduction <add>, %141, %cst_42 [1] : vector<8x32xf32> to vector<8xf32>
    %143 = vector.shape_cast %142 : vector<8xf32> to vector<8x1xf32>
    %cst_43 = arith.constant 3.200000e+01 : f32
    %144 = vector.broadcast %cst_43 : f32 to vector<8x1xf32>
    %145 = arith.divf %143, %144 : vector<8x1xf32>
    %146 = vector.broadcast %138 : vector<8x1xf32> to vector<8x32xf32>
    %147 = arith.subf %134, %146 : vector<8x32xf32>
    %cst_44 = arith.constant 9.99999997E-7 : f32
    %148 = vector.broadcast %cst_44 : f32 to vector<8x1xf32>
    %149 = arith.addf %145, %148 : vector<8x1xf32>
    %150 = math.rsqrt %149 : vector<8x1xf32>
    %151 = vector.broadcast %150 : vector<8x1xf32> to vector<8x32xf32>
    %152 = arith.mulf %147, %151 : vector<8x32xf32>
    %153 = vector.broadcast %4 : vector<1x32xf32> to vector<8x32xf32>
    %154 = arith.mulf %152, %153 : vector<8x32xf32>
    %155 = vector.broadcast %5 : vector<1x32xf32> to vector<8x32xf32>
    %156 = arith.addf %154, %155 : vector<8x32xf32>
    %c0_45 = arith.constant 0 : index
    %c0_46 = arith.constant 0 : index
    %157 = vector.load %arg8[%c0_45, %c0_46] : memref<32x64xf32, #tpu.memory_space<vmem>>, vector<32x64xf32>
    %cst_47 = arith.constant dense<0.000000e+00> : vector<8x64xf32>
    %158 = tpu.matmul %156, %157, %cst_47 {dimension_numbers = #tpu.dot_dimension_numbers<[1], [0], [0], [1], [0, 0, 1, 1], [], []>} : vector<8x32xf32>, vector<32x64xf32>, vector<8x64xf32> -> vector<8x64xf32>
    %159 = vector.broadcast %8 : vector<1x64xf32> to vector<8x64xf32>
    %160 = arith.addf %158, %159 : vector<8x64xf32>
    %cst_48 = arith.constant 0.000000e+00 : f32
    %161 = vector.broadcast %cst_48 : f32 to vector<8x64xf32>
    %162 = arith.maximumf %160, %161 : vector<8x64xf32>
    %c0_49 = arith.constant 0 : index
    %c0_50 = arith.constant 0 : index
    %163 = vector.load %arg9[%c0_49, %c0_50] : memref<64x32xf32, #tpu.memory_space<vmem>>, vector<64x32xf32>
    %cst_51 = arith.constant dense<0.000000e+00> : vector<8x32xf32>
    %164 = tpu.matmul %162, %163, %cst_51 {dimension_numbers = #tpu.dot_dimension_numbers<[1], [0], [0], [1], [0, 0, 1, 1], [], []>} : vector<8x64xf32>, vector<64x32xf32>, vector<8x32xf32> -> vector<8x32xf32>
    %165 = vector.broadcast %7 : vector<1x32xf32> to vector<8x32xf32>
    %166 = arith.addf %164, %165 : vector<8x32xf32>
    %167 = arith.addf %166, %134 : vector<8x32xf32>
    %c0_52 = arith.constant 0 : index
    %c0_53 = arith.constant 0 : index
    %168 = vector.load %arg10[%c0_52, %c0_53] : memref<8x32xf32, #tpu.memory_space<vmem>>, vector<8x32xf32>
    tpu.vector_store %arg10[%c0_52, %c0_53], %167 {strides = array<i32>} : memref<8x32xf32, #tpu.memory_space<vmem>>, vector<8x32xf32>,
    return
  }
  func.func @transform_0(%arg0: i32) -> (i32, i32) {
    %c0_i32 = arith.constant 0 : i32
    %c0_i32_0 = arith.constant 0 : i32
    return %arg0, %c0_i32 : i32, i32
  }
  func.func @transform_1(%arg0: i32) -> (i32, i32, i32) {
    %c0_i32 = arith.constant 0 : i32
    %c0_i32_0 = arith.constant 0 : i32
    %c0_i32_1 = arith.constant 0 : i32
    return %arg0, %c0_i32, %c0_i32_0 : i32, i32, i32
  }
  func.func @transform_2(%arg0: i32) -> (i32, i32) {
    %c0_i32 = arith.constant 0 : i32
    %c0_i32_0 = arith.constant 0 : i32
    %c0_i32_1 = arith.constant 0 : i32
    return %c0_i32, %c0_i32_0 : i32, i32
  }
  func.func @transform_3(%arg0: i32) -> (i32, i32, i32, i32) {
    %c0_i32 = arith.constant 0 : i32
    %c0_i32_0 = arith.constant 0 : i32
    %c0_i32_1 = arith.constant 0 : i32
    %c0_i32_2 = arith.constant 0 : i32
    %c0_i32_3 = arith.constant 0 : i32
    return %c0_i32, %c0_i32_0, %c0_i32_1, %c0_i32_2 : i32, i32, i32, i32
  }
  func.func @transform_4(%arg0: i32) -> (i32, i32, i32, i32) {
    %c0_i32 = arith.constant 0 : i32
    %c0_i32_0 = arith.constant 0 : i32
    %c0_i32_1 = arith.constant 0 : i32
    %c0_i32_2 = arith.constant 0 : i32
    %c0_i32_3 = arith.constant 0 : i32
    return %c0_i32, %c0_i32_0, %c0_i32_1, %c0_i32_2 : i32, i32, i32, i32
  }
  func.func @transform_5(%arg0: i32) -> (i32, i32, i32) {
    %c0_i32 = arith.constant 0 : i32
    %c0_i32_0 = arith.constant 0 : i32
    %c0_i32_1 = arith.constant 0 : i32
    %c0_i32_2 = arith.constant 0 : i32
    return %c0_i32, %c0_i32_0, %c0_i32_1 : i32, i32, i32
  }
  func.func @transform_6(%arg0: i32) -> (i32, i32, i32) {
    %c0_i32 = arith.constant 0 : i32
    %c0_i32_0 = arith.constant 0 : i32
    %c0_i32_1 = arith.constant 0 : i32
    %c0_i32_2 = arith.constant 0 : i32
    return %c0_i32, %c0_i32_0, %c0_i32_1 : i32, i32, i32
  }
  func.func @transform_7(%arg0: i32) -> (i32, i32) {
    %c0_i32 = arith.constant 0 : i32
    %c0_i32_0 = arith.constant 0 : i32
    %c0_i32_1 = arith.constant 0 : i32
    return %c0_i32, %c0_i32_0 : i32, i32
  }
  func.func @transform_8(%arg0: i32) -> (i32, i32) {
    %c0_i32 = arith.constant 0 : i32
    %c0_i32_0 = arith.constant 0 : i32
    %c0_i32_1 = arith.constant 0 : i32
    return %c0_i32, %c0_i32_0 : i32, i32
  }
  func.func @transform_9(%arg0: i32) -> (i32, i32) {
    %c0_i32 = arith.constant 0 : i32
    %c0_i32_0 = arith.constant 0 : i32
    return %arg0, %c0_i32 : i32, i32
  }
}

</mosaic_0001>

<llo_original>
// kernel: tpu_custom_call.1
$region0: #{tpu_custom_call.1}
  #allocation0 [shape = 'u32[]', space=smem, size = 0x4, offset = 0x4, fixed_abs, tag = 'smem constant byte address 0x4 - core index']
  #allocation1 [shape = 'u32[144,128]{1,0:T(1,128)}', space=vmem, size = 0x12000, scoped, tag = 'internal scratch']
  %s0 = inlined_call_operand.vmem [shape: f32[16,32], index: 0, kind: input, shape index: {}]
  %s1 = inlined_call_operand.vmem [shape: f32[2,8,8], index: 1, kind: input, shape index: {}]
  %s2 = inlined_call_operand.vmem [shape: f32[8,64], index: 2, kind: input, shape index: {}]
  %s3 = inlined_call_operand.vmem [shape: f32[3,4,32,8], index: 3, kind: input, shape index: {}]
  %s4 = inlined_call_operand.vmem [shape: f32[3,4,1,8], index: 4, kind: input, shape index: {}]
  %s5 = inlined_call_operand.vmem [shape: f32[4,8,8], index: 5, kind: input, shape index: {}]
  %s6 = inlined_call_operand.vmem [shape: f32[4,8,32], index: 6, kind: input, shape index: {}]
  %s7 = inlined_call_operand.vmem [shape: f32[32,64], index: 7, kind: input, shape index: {}]
  %s8 = inlined_call_operand.vmem [shape: f32[64,32], index: 8, kind: input, shape index: {}]
  %s9 = inlined_call_operand.hbm [shape: f32[16,32], index: 9, kind: output, shape index: {}]
  %s10 = sld [smem:[#allocation0]]
  $region69: #{tpu_custom_call.1} parent=0
    _
  %s12 = ssub.s32 1, %s10
  %s13 = scalar_select 0, %s12, %s10
  $region1: #{tpu_custom_call.1} parent=0
    #allocation2 [shape = 'u8[8192]{0}', space=vmem, size = 0x2000, scoped, tag = 'output window, operand 0']
    #allocation3 [shape = 's32[2]{0}', space=sflag, size = 0x8, scoped, tag = 'scoped memory for tpu_custom_call.1']
    %14 = vsyncpa [#allocation3], 0
    %s15 = scalar_lea.sflag [#allocation3], 1
    %16 = vsyncpa %s15, 0
    loop: start=0, step=1, limit=4
    $region2: #{tpu_custom_call.1} parent=1 // loop_pre_header
      _
    $region3: #{tpu_custom_call.1} parent=1 // loop_header
      %s18 = sphi 0, %s22
      %p19 = scmp.ge.s32.totalorder %s18, 4
      %s28 = sphi 0, %s30
      %s31 = sphi 0, %s28
      %s32 = sphi 0, %s31
      %s48 = sphi 0, %s32
      %s54 = sphi 0, %s56
      %s57 = sphi 0, %s54
      %s58 = sphi 0, %s57
      %s74 = sphi 0, %s58
      %s78 = sphi 0, %s78
      %s80 = sphi 0, %s78
      %s81 = sphi 0, %s80
      %s95 = sphi 0, %s81
      %s99 = sphi 0, %s99
      %s101 = sphi 0, %s99
      %s102 = sphi 0, %s101
      %s116 = sphi 0, %s102
      %s120 = sphi 0, %s120
      %s122 = sphi 0, %s120
      %s123 = sphi 0, %s122
      %s137 = sphi 0, %s123
      %s141 = sphi 0, %s141
      %s143 = sphi 0, %s141
      %s144 = sphi 0, %s143
      %s158 = sphi 0, %s144
      %s162 = sphi 0, %s162
      %s164 = sphi 0, %s162
      %s165 = sphi 0, %s164
      %s179 = sphi 0, %s165
      %s183 = sphi 0, %s183
      %s185 = sphi 0, %s183
      %s186 = sphi 0, %s185
      %s200 = sphi 0, %s186
      %s204 = sphi 0, %s204
      %s206 = sphi 0, %s204
      %s207 = sphi 0, %s206
      %s221 = sphi 0, %s207
      %s227 = sphi 0, %s229
      %s230 = sphi 0, %s227
      %s231 = sphi 0, %s230
      %s247 = sphi 0, %s231
    $region4: #{tpu_custom_call.1} parent=1 // loop_header_branch
      %21 = sbr.rel (%p19) target = $region8
    $region5: #{tpu_custom_call.1} parent=1 // loop_body
      %s23 = ssub.s32 %s18, 1
      %s24 = ssub.s32 %s18, 2
      %s25 = sadd.s32 %s18, 1
      %s26 = ssub.s32 %s18, %s25
      %p27 = scmp.eq.s32.totalorder %s26, 0
      %s29 = sadd.s32 %s28, 1
      %s30 = scalar_select %p27, %s28, %s29
      %p33 = pneg %p27
      %p34 = scmp.eq.s32.totalorder %s18, 1
      %p35 = por %p33, %p34
      %p36 = scmp.ne.s32.totalorder %s28, %s31
      %p37 = scmp.eq.s32.totalorder %s18, 0
      %p38 = por %p36, %p37
      %p39 = scmp.ne.s32.totalorder %s28, %s31
      %p40 = scmp.eq.s32.totalorder %s23, 1
      %p41 = por %p39, %p40
      %p42 = scmp.ne.s32.totalorder %s31, %s32
      %p43 = scmp.eq.s32.totalorder %s23, 0
      %p44 = por %p42, %p43
      %p45 = scmp.ne.s32.totalorder %s31, %s32
      %p46 = scmp.eq.s32.totalorder %s24, 1
      %p47 = por %p45, %p46
      %p49 = scmp.ne.s32.totalorder %s32, %s48
      %p50 = scmp.eq.s32.totalorder %s24, 0
      %p51 = por %p49, %p50
      %s52 = ssub.s32 %s18, %s25
      %p53 = scmp.eq.s32.totalorder %s52, 0
      %s55 = sadd.s32 %s54, 1
      %s56 = scalar_select %p53, %s54, %s55
      %p59 = pneg %p53
      %p60 = scmp.eq.s32.totalorder %s18, 1
      %p61 = por %p59, %p60
      %p62 = scmp.ne.s32.totalorder %s54, %s57
      %p63 = scmp.eq.s32.totalorder %s18, 0
      %p64 = por %p62, %p63
      %p65 = scmp.ne.s32.totalorder %s54, %s57
      %p66 = scmp.eq.s32.totalorder %s23, 1
      %p67 = por %p65, %p66
      %p68 = scmp.ne.s32.totalorder %s57, %s58
      %p69 = scmp.eq.s32.totalorder %s23, 0
      %p70 = por %p68, %p69
      %p71 = scmp.ne.s32.totalorder %s57, %s58
      %p72 = scmp.eq.s32.totalorder %s24, 1
      %p73 = por %p71, %p72
      %p75 = scmp.ne.s32.totalorder %s58, %s74
      %p76 = scmp.eq.s32.totalorder %s24, 0
      %p77 = por %p75, %p76
      %s79 = sadd.s32 %s78, 1
      %p82 = scmp.eq.s32.totalorder %s18, 1
      %p83 = scmp.ne.s32.totalorder %s78, %s80
      %p84 = scmp.eq.s32.totalorder %s18, 0
      %p85 = por %p83, %p84
      %p86 = scmp.ne.s32.totalorder %s78, %s80
      %p87 = scmp.eq.s32.totalorder %s23, 1
      %p88 = por %p86, %p87
      %p89 = scmp.ne.s32.totalorder %s80, %s81
      %p90 = scmp.eq.s32.totalorder %s23, 0
      %p91 = por %p89, %p90
      %p92 = scmp.ne.s32.totalorder %s80, %s81
      %p93 = scmp.eq.s32.totalorder %s24, 1
      %p94 = por %p92, %p93
      %p96 = scmp.ne.s32.totalorder %s81, %s95
      %p97 = scmp.eq.s32.totalorder %s24, 0
      %p98 = por %p96, %p97
      %s100 = sadd.s32 %s99, 1
      %p103 = scmp.eq.s32.totalorder %s18, 1
      %p104 = scmp.ne.s32.totalorder %s99, %s101
      %p105 = scmp.eq.s32.totalorder %s18, 0
      %p106 = por %p104, %p105
      %p107 = scmp.ne.s32.totalorder %s99, %s101
      %p108 = scmp.eq.s32.totalorder %s23, 1
      %p109 = por %p107, %p108
      %p110 = scmp.ne.s32.totalorder %s101, %s102
      %p111 = scmp.eq.s32.totalorder %s23, 0
      %p112 = por %p110, %p111
      %p113 = scmp.ne.s32.totalorder %s101, %s102
      %p114 = scmp.eq.s32.totalorder %s24, 1
      %p115 = por %p113, %p114
      %p117 = scmp.ne.s32.totalorder %s102, %s116
      %p118 = scmp.eq.s32.totalorder %s24, 0
      %p119 = por %p117, %p118
      %s121 = sadd.s32 %s120, 1
      %p124 = scmp.eq.s32.totalorder %s18, 1
      %p125 = scmp.ne.s32.totalorder %s120, %s122
      %p126 = scmp.eq.s32.totalorder %s18, 0
      %p127 = por %p125, %p126
      %p128 = scmp.ne.s32.totalorder %s120, %s122
      %p129 = scmp.eq.s32.totalorder %s23, 1
      %p130 = por %p128, %p129
      %p131 = scmp.ne.s32.totalorder %s122, %s123
      %p132 = scmp.eq.s32.totalorder %s23, 0
      %p133 = por %p131, %p132
      %p134 = scmp.ne.s32.totalorder %s122, %s123
      %p135 = scmp.eq.s32.totalorder %s24, 1
      %p136 = por %p134, %p135
      %p138 = scmp.ne.s32.totalorder %s123, %s137
      %p139 = scmp.eq.s32.totalorder %s24, 0
      %p140 = por %p138, %p139
      %s142 = sadd.s32 %s141, 1
      %p145 = scmp.eq.s32.totalorder %s18, 1
      %p146 = scmp.ne.s32.totalorder %s141, %s143
      %p147 = scmp.eq.s32.totalorder %s18, 0
      %p148 = por %p146, %p147
      %p149 = scmp.ne.s32.totalorder %s141, %s143
      %p150 = scmp.eq.s32.totalorder %s23, 1
      %p151 = por %p149, %p150
      %p152 = scmp.ne.s32.totalorder %s143, %s144
      %p153 = scmp.eq.s32.totalorder %s23, 0
      %p154 = por %p152, %p153
      %p155 = scmp.ne.s32.totalorder %s143, %s144
      %p156 = scmp.eq.s32.totalorder %s24, 1
      %p157 = por %p155, %p156
      %p159 = scmp.ne.s32.totalorder %s144, %s158
      %p160 = scmp.eq.s32.totalorder %s24, 0
      %p161 = por %p159, %p160
      %s163 = sadd.s32 %s162, 1
      %p166 = scmp.eq.s32.totalorder %s18, 1
      %p167 = scmp.ne.s32.totalorder %s162, %s164
      %p168 = scmp.eq.s32.totalorder %s18, 0
      %p169 = por %p167, %p168
      %p170 = scmp.ne.s32.totalorder %s162, %s164
      %p171 = scmp.eq.s32.totalorder %s23, 1
      %p172 = por %p170, %p171
      %p173 = scmp.ne.s32.totalorder %s164, %s165
      %p174 = scmp.eq.s32.totalorder %s23, 0
      %p175 = por %p173, %p174
      %p176 = scmp.ne.s32.totalorder %s164, %s165
      %p177 = scmp.eq.s32.totalorder %s24, 1
      %p178 = por %p176, %p177
      %p180 = scmp.ne.s32.totalorder %s165, %s179
      %p181 = scmp.eq.s32.totalorder %s24, 0
      %p182 = por %p180, %p181
      %s184 = sadd.s32 %s183, 1
      %p187 = scmp.eq.s32.totalorder %s18, 1
      %p188 = scmp.ne.s32.totalorder %s183, %s185
      %p189 = scmp.eq.s32.totalorder %s18, 0
      %p190 = por %p188, %p189
      %p191 = scmp.ne.s32.totalorder %s183, %s185
      %p192 = scmp.eq.s32.totalorder %s23, 1
      %p193 = por %p191, %p192
      %p194 = scmp.ne.s32.totalorder %s185, %s186
      %p195 = scmp.eq.s32.totalorder %s23, 0
      %p196 = por %p194, %p195
      %p197 = scmp.ne.s32.totalorder %s185, %s186
      %p198 = scmp.eq.s32.totalorder %s24, 1
      %p199 = por %p197, %p198
      %p201 = scmp.ne.s32.totalorder %s186, %s200
      %p202 = scmp.eq.s32.totalorder %s24, 0
      %p203 = por %p201, %p202
      %s205 = sadd.s32 %s204, 1
      %p208 = scmp.eq.s32.totalorder %s18, 1
      %p209 = scmp.ne.s32.totalorder %s204, %s206
      %p210 = scmp.eq.s32.totalorder %s18, 0
      %p211 = por %p209, %p210
      %p212 = scmp.ne.s32.totalorder %s204, %s206
      %p213 = scmp.eq.s32.totalorder %s23, 1
      %p214 = por %p212, %p213
      %p215 = scmp.ne.s32.totalorder %s206, %s207
      %p216 = scmp.eq.s32.totalorder %s23, 0
      %p217 = por %p215, %p216
      %p218 = scmp.ne.s32.totalorder %s206, %s207
      %p219 = scmp.eq.s32.totalorder %s24, 1
      %p220 = por %p218, %p219
      %p222 = scmp.ne.s32.totalorder %s207, %s221
      %p223 = scmp.eq.s32.totalorder %s24, 0
      %p224 = por %p222, %p223
      %s225 = ssub.s32 %s18, %s25
      %p226 = scmp.eq.s32.totalorder %s225, 0
      %s228 = sadd.s32 %s227, 1
      %s229 = scalar_select %p226, %s227, %s228
      %p232 = pneg %p226
      %p233 = scmp.eq.s32.totalorder %s18, 1
      %p234 = por %p232, %p233
      %p235 = scmp.ne.s32.totalorder %s227, %s230
      %p236 = scmp.eq.s32.totalorder %s18, 0
      %p237 = por %p235, %p236
      %p238 = scmp.ne.s32.totalorder %s227, %s230
      %p239 = scmp.eq.s32.totalorder %s23, 1
      %p240 = por %p238, %p239
      %p241 = scmp.ne.s32.totalorder %s230, %s231
      %p242 = scmp.eq.s32.totalorder %s23, 0
      %p243 = por %p241, %p242
      %p244 = scmp.ne.s32.totalorder %s230, %s231
      %p245 = scmp.eq.s32.totalorder %s24, 1
      %p246 = por %p244, %p245
      %p248 = scmp.ne.s32.totalorder %s231, %s247
      %p249 = scmp.eq.s32.totalorder %s24, 0
      %p250 = por %p248, %p249
      %p251 = scmp.le.s32.totalorder 1, %s18
      %p252 = scmp.lt.s32.totalorder %s18, 3
      %p253 = pnand %p251, %p252
      %p254 = pneg %p253
      // Predicated region
      $region9: #{tpu_custom_call.1} parent=5 // pred_check
        _
      $region10: #{tpu_custom_call.1} parent=5 // pred_check_branch
        %256 = sbr.rel (%p253) target = $region12
      $region11: #{tpu_custom_call.1} parent=5 // pred_region
        %s257 = ssub.s32 %s18, 1
        // Predicated region
        $region13: #{tpu_custom_call.1} parent=11 // pred_check
          %p258 = pneg %p91
        $region14: #{tpu_custom_call.1} parent=11 // pred_check_branch
          %260 = sbr.rel (%p258) target = $region16
        $region15: #{tpu_custom_call.1} parent=11 // pred_region
          _
        $region16: #{tpu_custom_call.1} parent=11 // pred_fallthru
          _
        // Predicated region
        $region17: #{tpu_custom_call.1} parent=11 // pred_check
          %p261 = pneg %p112
        $region18: #{tpu_custom_call.1} parent=11 // pred_check_branch
          %263 = sbr.rel (%p261) target = $region20
        $region19: #{tpu_custom_call.1} parent=11 // pred_region
          _
        $region20: #{tpu_custom_call.1} parent=11 // pred_fallthru
          _
        // Predicated region
        $region21: #{tpu_custom_call.1} parent=11 // pred_check
          %p264 = pneg %p133
        $region22: #{tpu_custom_call.1} parent=11 // pred_check_branch
          %266 = sbr.rel (%p264) target = $region24
        $region23: #{tpu_custom_call.1} parent=11 // pred_region
          _
        $region24: #{tpu_custom_call.1} parent=11 // pred_fallthru
          _
        // Predicated region
        $region25: #{tpu_custom_call.1} parent=11 // pred_check
          %p267 = pneg %p154
        $region26: #{tpu_custom_call.1} parent=11 // pred_check_branch
          %269 = sbr.rel (%p267) target = $region28
        $region27: #{tpu_custom_call.1} parent=11 // pred_region
          _
        $region28: #{tpu_custom_call.1} parent=11 // pred_fallthru
          _
        // Predicated region
        $region29: #{tpu_custom_call.1} parent=11 // pred_check
          %p270 = pneg %p175
        $region30: #{tpu_custom_call.1} parent=11 // pred_check_branch
          %272 = sbr.rel (%p270) target = $region32
        $region31: #{tpu_custom_call.1} parent=11 // pred_region
          _
        $region32: #{tpu_custom_call.1} parent=11 // pred_fallthru
          _
        // Predicated region
        $region33: #{tpu_custom_call.1} parent=11 // pred_check
          %p273 = pneg %p196
        $region34: #{tpu_custom_call.1} parent=11 // pred_check_branch
          %275 = sbr.rel (%p273) target = $region36
        $region35: #{tpu_custom_call.1} parent=11 // pred_region
          _
        $region36: #{tpu_custom_call.1} parent=11 // pred_fallthru
          _
        // Predicated region
        $region37: #{tpu_custom_call.1} parent=11 // pred_check
          %p276 = pneg %p217
        $region38: #{tpu_custom_call.1} parent=11 // pred_check_branch
          %278 = sbr.rel (%p276) target = $region40
        $region39: #{tpu_custom_call.1} parent=11 // pred_region
          _
        $region40: #{tpu_custom_call.1} parent=11 // pred_fallthru
          _
      $region12: #{tpu_custom_call.1} parent=5 // pred_fallthru
        _
      %p279 = scmp.lt.s32.totalorder %s18, 2
      // Predicated region
      $region41: #{tpu_custom_call.1} parent=5 // pred_check
        %p280 = pneg %p279
      $region42: #{tpu_custom_call.1} parent=5 // pred_check_branch
        %282 = sbr.rel (%p280) target = $region44
      $region43: #{tpu_custom_call.1} parent=5 // pred_region
        // Predicated region
        $region45: #{tpu_custom_call.1} parent=43 // pred_check
          %p283 = pneg %p38
        $region46: #{tpu_custom_call.1} parent=43 // pred_check_branch
          %285 = sbr.rel (%p283) target = $region48
        $region47: #{tpu_custom_call.1} parent=43 // pred_region
          %p286 = scmp.lt.s32.totalorder %s18, 1
          %s287 = scalar_select %p286, %s18, 1
          %s288 = smul.addr %s287, 8
          %s289 = scalar_lea.vmem %s0, %s288
        $region48: #{tpu_custom_call.1} parent=43 // pred_fallthru
          _
        // Predicated region
        $region49: #{tpu_custom_call.1} parent=43 // pred_check
          %p290 = pneg %p64
        $region50: #{tpu_custom_call.1} parent=43 // pred_check_branch
          %292 = sbr.rel (%p290) target = $region52
        $region51: #{tpu_custom_call.1} parent=43 // pred_region
          %p293 = scmp.lt.s32.totalorder %s18, 1
          %s294 = scalar_select %p293, %s18, 1
          %s295 = smul.addr %s294, 8
          %s296 = scalar_lea.vmem %s1, %s295
        $region52: #{tpu_custom_call.1} parent=43 // pred_fallthru
          _
      $region44: #{tpu_custom_call.1} parent=5 // pred_fallthru
        _
      %p297 = scmp.le.s32.totalorder 1, %s18
      %p298 = scmp.lt.s32.totalorder %s18, 3
      %p299 = pnand %p297, %p298
      %p300 = pneg %p299
      // Predicated region
      $region53: #{tpu_custom_call.1} parent=5 // pred_check
        _
      $region54: #{tpu_custom_call.1} parent=5 // pred_check_branch
        %302 = sbr.rel (%p299) target = $region56
      $region55: #{tpu_custom_call.1} parent=5 // pred_region
        %s303 = ssub.s32 %s18, 1
        %p304 = scmp.lt.s32.totalorder %s23, 1
        %s305 = scalar_select %p304, %s23, 1
        %s306 = smul.addr %s305, 8
        %s307 = scalar_lea.vmem %s0, %s306
        %p308 = pneg %p44
        %p309 = pneg %p41
        %p310 = scmp.lt.s32.totalorder %s23, 1
        %s311 = scalar_select %p310, %s23, 1
        %s312 = smul.addr %s311, 8
        %s313 = scalar_lea.vmem %s1, %s312
        %p314 = pneg %p70
        %p315 = pneg %p67
        %p316 = pneg %p91
        %p317 = pneg %p88
        %p318 = pneg %p112
        %p319 = pneg %p109
        %p320 = pneg %p133
        %p321 = pneg %p130
        %p322 = pneg %p154
        %p323 = pneg %p151
        %p324 = pneg %p175
        %p325 = pneg %p172
        %p326 = pneg %p196
        %p327 = pneg %p193
        %p328 = pneg %p217
        %p329 = pneg %p214
        %p330 = pneg %p243
        %p331 = pneg %p240
        %s332 = sand.u32 %s230, 1
        %s333 = scalar_lea.sflag [#allocation3], %s332
        %s334 = sand.u32 %s230, 1
        %s335 = smul.addr %s334, 8
        %s336 = scalar_lea.vmem [#allocation2], %s335
        %p337 = scmp.lt.s32.totalorder %s23, 1
        %s338 = scalar_select %p337, %s23, 1
        %s339 = smul.addr %s338, 8
        %s340 = scalar_lea.vmem %s0, %s339
        %p341 = scmp.lt.s32.totalorder %s23, 1
        %s342 = scalar_select %p341, %s23, 1
        %s343 = smul.addr %s342, 8
        %s344 = scalar_lea.vmem %s1, %s343
        %v345 = vld [vmem:[%s340] sm:$0xff]
        %v346 = vld [vmem:[%s2] sm:$0xff]
        %vm347 = vcmask 261120
        %v348 = vsel %vm347, %v345, 0.0
        %349 = vadd.xlane.f32.xlu0 %v348
        %v350 = vpop.xlane.xlu0 %349
        %v351 = vrcp.pop 32.0
        %v352 = vmul.f32 %v350, %v351
        %v353 = vsub.f32 %v345, %v352
        %v354 = vmul.f32 %v353, %v353
        %v355 = vsel %vm347, %v354, 0.0
        %356 = vadd.xlane.f32.xlu0 %v355
        %v357 = vpop.xlane.xlu0 %356
        %v358 = vmul.f32 %v357, %v351
        %v359 = vadd.f32 %v358, 1e-06
        %v360 = vrsqrt.pop %v359
        %v361 = vmul.f32 %v353, %v360
        %v362 = vlaneseq
        %v363 = vshrl.u32 %v362, 7
        %v364 = vsub.s32 0, %v363
        %v365 = vrot.slane %v346, %v364
        %v366 = vmul.f32 %v361, %v365
        %v367 = vlaneseq
        %v368 = vshrl.u32 %v367, 7
        %v369 = vsub.s32 1, %v368
        %v370 = vrot.slane %v346, %v369
        %v371 = vadd.f32 %v366, %v370
        %v372 = vld [vmem:[%s3] sm:$0xff]
        %v373 = vld [vmem:[%s3 + $0x8] sm:$0xff]
        %v374 = vld [vmem:[%s3 + $0x10] sm:$0xff]
        %v375 = vld [vmem:[%s3 + $0x18] sm:$0xff]
        %v376 = vld [vmem:[%s3 + $0x20] sm:$0xff]
        %v377 = vld [vmem:[%s3 + $0x28] sm:$0xff]
        %v378 = vld [vmem:[%s3 + $0x30] sm:$0xff]
        %v379 = vld [vmem:[%s3 + $0x38] sm:$0xff]
        %v380 = vld [vmem:[%s3 + $0x40] sm:$0xff]
        %v381 = vld [vmem:[%s3 + $0x48] sm:$0xff]
        %v382 = vld [vmem:[%s3 + $0x50] sm:$0xff]
        %v383 = vld [vmem:[%s3 + $0x58] sm:$0xff]
        %v384 = vld [vmem:[%s3 + $0x60] sm:$0xff]
        %v385 = vld [vmem:[%s3 + $0x68] sm:$0xff]
        %v386 = vld [vmem:[%s3 + $0x70] sm:$0xff]
        %v387 = vld [vmem:[%s3 + $0x78] sm:$0xff]
        %v388 = vld [vmem:[%s3 + $0x80] sm:$0xff]
        %v389 = vld [vmem:[%s3 + $0x88] sm:$0xff]
        %v390 = vld [vmem:[%s3 + $0x90] sm:$0xff]
        %v391 = vld [vmem:[%s3 + $0x98] sm:$0xff]
        %v392 = vld [vmem:[%s3 + $0xa0] sm:$0xff]
        %v393 = vld [vmem:[%s3 + $0xa8] sm:$0xff]
        %v394 = vld [vmem:[%s3 + $0xb0] sm:$0xff]
        %v395 = vld [vmem:[%s3 + $0xb8] sm:$0xff]
        %v396 = vld [vmem:[%s3 + $0xc0] sm:$0xff]
        %v397 = vld [vmem:[%s3 + $0xc8] sm:$0xff]
        %v398 = vld [vmem:[%s3 + $0xd0] sm:$0xff]
        %v399 = vld [vmem:[%s3 + $0xd8] sm:$0xff]
        %v400 = vld [vmem:[%s3 + $0xe0] sm:$0xff]
        %v401 = vld [vmem:[%s3 + $0xe8] sm:$0xff]
        %v402 = vld [vmem:[%s3 + $0xf0] sm:$0xff]
        %v403 = vld [vmem:[%s3 + $0xf8] sm:$0xff]
        %v404 = vld [vmem:[%s3 + $0x100] sm:$0xff]
        %v405 = vld [vmem:[%s3 + $0x108] sm:$0xff]
        %v406 = vld [vmem:[%s3 + $0x110] sm:$0xff]
        %v407 = vld [vmem:[%s3 + $0x118] sm:$0xff]
        %v408 = vld [vmem:[%s3 + $0x120] sm:$0xff]
        %v409 = vld [vmem:[%s3 + $0x128] sm:$0xff]
        %v410 = vld [vmem:[%s3 + $0x130] sm:$0xff]
        %v411 = vld [vmem:[%s3 + $0x138] sm:$0xff]
        %v412 = vld [vmem:[%s3 + $0x140] sm:$0xff]
        %v413 = vld [vmem:[%s3 + $0x148] sm:$0xff]
        %v414 = vld [vmem:[%s3 + $0x150] sm:$0xff]
        %v415 = vld [vmem:[%s3 + $0x158] sm:$0xff]
        %v416 = vld [vmem:[%s3 + $0x160] sm:$0xff]
        %v417 = vld [vmem:[%s3 + $0x168] sm:$0xff]
        %v418 = vld [vmem:[%s3 + $0x170] sm:$0xff]
        %v419 = vld [vmem:[%s3 + $0x178] sm:$0xff]
        %v420 = vld [vmem:[%s4] sm:$0x1]
        %v421 = vld [vmem:[%s4 + $0x1] sm:$0x1]
        %v422 = vld [vmem:[%s4 + $0x2] sm:$0x1]
        %v423 = vld [vmem:[%s4 + $0x3] sm:$0x1]
        %v424 = vld [vmem:[%s4 + $0x4] sm:$0x1]
        %v425 = vld [vmem:[%s4 + $0x5] sm:$0x1]
        %v426 = vld [vmem:[%s4 + $0x6] sm:$0x1]
        %v427 = vld [vmem:[%s4 + $0x7] sm:$0x1]
        %v428 = vld [vmem:[%s4 + $0x8] sm:$0x1]
        %v429 = vld [vmem:[%s4 + $0x9] sm:$0x1]
        %v430 = vld [vmem:[%s4 + $0xa] sm:$0x1]
        %v431 = vld [vmem:[%s4 + $0xb] sm:$0x1]
        %v436 = vlaneseq
        %v437 = vshrl.u32 %v436, 7
        %v438 = vsub.s32 0, %v437
        %v439 = vrot.slane %v420, %v438
        %v440 = vlaneseq
        %v441 = vshrl.u32 %v440, 7
        %v442 = vsub.s32 0, %v441
        %v443 = vrot.slane %v421, %v442
        %v444 = vlaneseq
        %v445 = vshrl.u32 %v444, 7
        %v446 = vsub.s32 0, %v445
        %v447 = vrot.slane %v422, %v446
        %v448 = vlaneseq
        %v449 = vshrl.u32 %v448, 7
        %v450 = vsub.s32 0, %v449
        %v451 = vrot.slane %v423, %v450
        %v457 = vsel %vm347, %v371, 0
        %459 = vmatprep.subr.mxu0 0.0
        %460 = vmatpush1.msra.mxu0 %v372
        %461 = vmatprep.subr.mxu0 0.0
        %462 = vmatpush1.msra.mxu0 %v373
        %463 = vmatprep.subr.mxu0 0.0
        %464 = vmatpush1.msra.mxu0 %v374
        %465 = vmatprep.subr.mxu0 0.0
        %466 = vmatpush1.msra.mxu0 %v375
        %467 = vmatprep.subr.mxu0 0.0
        %468 = vmatpush1.msra.mxu0 0.0
        %469 = vmatprep.subr.mxu0 0.0
        %470 = vmatpush1.msra.mxu0 0.0
        %471 = vmatprep.subr.mxu0 0.0
        %472 = vmatpush1.msra.mxu0 0.0
        %473 = vmatprep.subr.mxu0 0.0
        %474 = vmatpush1.msra.mxu0 0.0
        %475 = vmatprep.subr.mxu0 0.0
        %476 = vmatpush1.msra.mxu0 0.0
        %477 = vmatprep.subr.mxu0 0.0
        %478 = vmatpush1.msra.mxu0 0.0
        %479 = vmatprep.subr.mxu0 0.0
        %480 = vmatpush1.msra.mxu0 0.0
        %481 = vmatprep.subr.mxu0 0.0
        %482 = vmatpush1.msra.mxu0 0.0
        %483 = vmatprep.subr.mxu0 0.0
        %484 = vmatpush1.msra.mxu0 0.0
        %485 = vmatprep.subr.mxu0 0.0
        %486 = vmatpush1.msra.mxu0 0.0
        %487 = vmatprep.subr.mxu0 0.0
        %488 = vmatpush1.msra.mxu0 0.0
        %489 = vmatprep.subr.mxu0 0.0
        %490 = vmatpush1.msra.mxu0 0.0
        %491 = vmatprep.subr.mxu0 0.0
        %492 = vmatpush1.msra.mxu0 0.0
        %493 = vmatprep.subr.mxu0 0.0
        %494 = vmatpush1.msra.mxu0 0.0
        %495 = vmatprep.subr.mxu0 0.0
        %496 = vmatpush1.msra.mxu0 0.0
        %497 = vmatprep.subr.mxu0 0.0
        %498 = vmatpush1.msra.mxu0 0.0
        %499 = vmatprep.subr.mxu0 0.0
        %500 = vmatpush1.msra.mxu0 0.0
        %501 = vmatprep.subr.mxu0 0.0
        %502 = vmatpush1.msra.mxu0 0.0
        %503 = vmatprep.subr.mxu0 0.0
        %504 = vmatpush1.msra.mxu0 0.0
        %505 = vmatprep.subr.mxu0 0.0
        %506 = vmatpush1.msra.mxu0 0.0
        %507 = vmatprep.subr.mxu0 0.0
        %508 = vmatpush1.msra.mxu0 0.0
        %509 = vmatprep.subr.mxu0 0.0
        %510 = vmatpush1.msra.mxu0 0.0
        %511 = vmatprep.subr.mxu0 0.0
        %512 = vmatpush1.msra.mxu0 0.0
        %513 = vmatprep.subr.mxu0 0.0
        %514 = vmatpush1.msra.mxu0 0.0
        %515 = vmatprep.subr.mxu0 0.0
        %516 = vmatpush1.msra.mxu0 0.0
        %517 = vmatprep.subr.mxu0 0.0
        %518 = vmatpush1.msra.mxu0 0.0
        %519 = vmatprep.subr.mxu0 0.0
        %520 = vmatpush1.msra.mxu0 0.0
        %521 = vmatprep.subr.mxu0 0.0
        %522 = vmatpush1.msra.mxu0 0.0
        %523 = vmatprep.mubr.f32.mxu0 0.0
        %524 = vmatmul.mubr.f32.gmra.mrb[0].mxu0 %v457
        %v525 = vpop.f32.mrb[0].mxu0
        %v526 = vadd.f32 %v439, %v525
        %v527 = vpop.f32.mrb[0].mxu0
        %528 = vdwg.mxu0
        %529 = vmatprep.subr.mxu0 0.0
        %530 = vmatpush1.msra.mxu0 %v376
        %531 = vmatprep.subr.mxu0 0.0
        %532 = vmatpush1.msra.mxu0 %v377
        %533 = vmatprep.subr.mxu0 0.0
        %534 = vmatpush1.msra.mxu0 %v378
        %535 = vmatprep.subr.mxu0 0.0
        %536 = vmatpush1.msra.mxu0 %v379
        %537 = vmatprep.subr.mxu0 0.0
        %538 = vmatpush1.msra.mxu0 0.0
        %539 = vmatprep.subr.mxu0 0.0
        %540 = vmatpush1.msra.mxu0 0.0
        %541 = vmatprep.subr.mxu0 0.0
        %542 = vmatpush1.msra.mxu0 0.0
        %543 = vmatprep.subr.mxu0 0.0
        %544 = vmatpush1.msra.mxu0 0.0
        %545 = vmatprep.subr.mxu0 0.0
        %546 = vmatpush1.msra.mxu0 0.0
        %547 = vmatprep.subr.mxu0 0.0
        %548 = vmatpush1.msra.mxu0 0.0
        %549 = vmatprep.subr.mxu0 0.0
        %550 = vmatpush1.msra.mxu0 0.0
        %551 = vmatprep.subr.mxu0 0.0
        %552 = vmatpush1.msra.mxu0 0.0
        %553 = vmatprep.subr.mxu0 0.0
        %554 = vmatpush1.msra.mxu0 0.0
        %555 = vmatprep.subr.mxu0 0.0
        %556 = vmatpush1.msra.mxu0 0.0
        %557 = vmatprep.subr.mxu0 0.0
        %558 = vmatpush1.msra.mxu0 0.0
        %559 = vmatprep.subr.mxu0 0.0
        %560 = vmatpush1.msra.mxu0 0.0
        %561 = vmatprep.subr.mxu0 0.0
        %562 = vmatpush1.msra.mxu0 0.0
        %563 = vmatprep.subr.mxu0 0.0
        %564 = vmatpush1.msra.mxu0 0.0
        %565 = vmatprep.subr.mxu0 0.0
        %566 = vmatpush1.msra.mxu0 0.0
        %567 = vmatprep.subr.mxu0 0.0
        %568 = vmatpush1.msra.mxu0 0.0
        %569 = vmatprep.subr.mxu0 0.0
        %570 = vmatpush1.msra.mxu0 0.0
        %571 = vmatprep.subr.mxu0 0.0
        %572 = vmatpush1.msra.mxu0 0.0
        %573 = vmatprep.subr.mxu0 0.0
        %574 = vmatpush1.msra.mxu0 0.0
        %575 = vmatprep.subr.mxu0 0.0
        %576 = vmatpush1.msra.mxu0 0.0
        %577 = vmatprep.subr.mxu0 0.0
        %578 = vmatpush1.msra.mxu0 0.0
        %579 = vmatprep.subr.mxu0 0.0
        %580 = vmatpush1.msra.mxu0 0.0
        %581 = vmatprep.subr.mxu0 0.0
        %582 = vmatpush1.msra.mxu0 0.0
        %583 = vmatprep.subr.mxu0 0.0
        %584 = vmatpush1.msra.mxu0 0.0
        %585 = vmatprep.subr.mxu0 0.0
        %586 = vmatpush1.msra.mxu0 0.0
        %587 = vmatprep.subr.mxu0 0.0
        %588 = vmatpush1.msra.mxu0 0.0
        %589 = vmatprep.subr.mxu0 0.0
        %590 = vmatpush1.msra.mxu0 0.0
        %591 = vmatprep.subr.mxu0 0.0
        %592 = vmatpush1.msra.mxu0 0.0
        %593 = vmatprep.mubr.f32.mxu0 0.0
        %594 = vmatmul.mubr.f32.gmra.mrb[0].mxu0 %v457
        %v595 = vpop.f32.mrb[0].mxu0
        %v596 = vadd.f32 %v443, %v595
        %v597 = vpop.f32.mrb[0].mxu0
        %598 = vdwg.mxu0
        %599 = vmatprep.subr.mxu0 0.0
        %600 = vmatpush1.msra.mxu0 %v380
        %601 = vmatprep.subr.mxu0 0.0
        %602 = vmatpush1.msra.mxu0 %v381
        %603 = vmatprep.subr.mxu0 0.0
        %604 = vmatpush1.msra.mxu0 %v382
        %605 = vmatprep.subr.mxu0 0.0
        %606 = vmatpush1.msra.mxu0 %v383
        %607 = vmatprep.subr.mxu0 0.0
        %608 = vmatpush1.msra.mxu0 0.0
        %609 = vmatprep.subr.mxu0 0.0
        %610 = vmatpush1.msra.mxu0 0.0
        %611 = vmatprep.subr.mxu0 0.0
        %612 = vmatpush1.msra.mxu0 0.0
        %613 = vmatprep.subr.mxu0 0.0
        %614 = vmatpush1.msra.mxu0 0.0
        %615 = vmatprep.subr.mxu0 0.0
        %616 = vmatpush1.msra.mxu0 0.0
        %617 = vmatprep.subr.mxu0 0.0
        %618 = vmatpush1.msra.mxu0 0.0
        %619 = vmatprep.subr.mxu0 0.0
        %620 = vmatpush1.msra.mxu0 0.0
        %621 = vmatprep.subr.mxu0 0.0
        %622 = vmatpush1.msra.mxu0 0.0
        %623 = vmatprep.subr.mxu0 0.0
        %624 = vmatpush1.msra.mxu0 0.0
        %625 = vmatprep.subr.mxu0 0.0
        %626 = vmatpush1.msra.mxu0 0.0
        %627 = vmatprep.subr.mxu0 0.0
        %628 = vmatpush1.msra.mxu0 0.0
        %629 = vmatprep.subr.mxu0 0.0
        %630 = vmatpush1.msra.mxu0 0.0
        %631 = vmatprep.subr.mxu0 0.0
        %632 = vmatpush1.msra.mxu0 0.0
        %633 = vmatprep.subr.mxu0 0.0
        %634 = vmatpush1.msra.mxu0 0.0
        %635 = vmatprep.subr.mxu0 0.0
        %636 = vmatpush1.msra.mxu0 0.0
        %637 = vmatprep.subr.mxu0 0.0
        %638 = vmatpush1.msra.mxu0 0.0
        %639 = vmatprep.subr.mxu0 0.0
        %640 = vmatpush1.msra.mxu0 0.0
        %641 = vmatprep.subr.mxu0 0.0
        %642 = vmatpush1.msra.mxu0 0.0
        %643 = vmatprep.subr.mxu0 0.0
        %644 = vmatpush1.msra.mxu0 0.0
        %645 = vmatprep.subr.mxu0 0.0
        %646 = vmatpush1.msra.mxu0 0.0
        %647 = vmatprep.subr.mxu0 0.0
        %648 = vmatpush1.msra.mxu0 0.0
        %649 = vmatprep.subr.mxu0 0.0
        %650 = vmatpush1.msra.mxu0 0.0
        %651 = vmatprep.subr.mxu0 0.0
        %652 = vmatpush1.msra.mxu0 0.0
        %653 = vmatprep.subr.mxu0 0.0
        %654 = vmatpush1.msra.mxu0 0.0
        %655 = vmatprep.subr.mxu0 0.0
        %656 = vmatpush1.msra.mxu0 0.0
        %657 = vmatprep.subr.mxu0 0.0
        %658 = vmatpush1.msra.mxu0 0.0
        %659 = vmatprep.subr.mxu0 0.0
        %660 = vmatpush1.msra.mxu0 0.0
        %661 = vmatprep.subr.mxu0 0.0
        %662 = vmatpush1.msra.mxu0 0.0
        %663 = vmatprep.mubr.f32.mxu0 0.0
        %664 = vmatmul.mubr.f32.gmra.mrb[0].mxu0 %v457
        %v665 = vpop.f32.mrb[0].mxu0
        %v666 = vadd.f32 %v447, %v665
        %v667 = vpop.f32.mrb[0].mxu0
        %668 = vdwg.mxu0
        %669 = vmatprep.subr.mxu0 0.0
        %670 = vmatpush1.msra.mxu0 %v384
        %671 = vmatprep.subr.mxu0 0.0
        %672 = vmatpush1.msra.mxu0 %v385
        %673 = vmatprep.subr.mxu0 0.0
        %674 = vmatpush1.msra.mxu0 %v386
        %675 = vmatprep.subr.mxu0 0.0
        %676 = vmatpush1.msra.mxu0 %v387
        %677 = vmatprep.subr.mxu0 0.0
        %678 = vmatpush1.msra.mxu0 0.0
        %679 = vmatprep.subr.mxu0 0.0
        %680 = vmatpush1.msra.mxu0 0.0
        %681 = vmatprep.subr.mxu0 0.0
        %682 = vmatpush1.msra.mxu0 0.0
        %683 = vmatprep.subr.mxu0 0.0
        %684 = vmatpush1.msra.mxu0 0.0
        %685 = vmatprep.subr.mxu0 0.0
        %686 = vmatpush1.msra.mxu0 0.0
        %687 = vmatprep.subr.mxu0 0.0
        %688 = vmatpush1.msra.mxu0 0.0
        %689 = vmatprep.subr.mxu0 0.0
        %690 = vmatpush1.msra.mxu0 0.0
        %691 = vmatprep.subr.mxu0 0.0
        %692 = vmatpush1.msra.mxu0 0.0
        %693 = vmatprep.subr.mxu0 0.0
        %694 = vmatpush1.msra.mxu0 0.0
        %695 = vmatprep.subr.mxu0 0.0
        %696 = vmatpush1.msra.mxu0 0.0
        %697 = vmatprep.subr.mxu0 0.0
        %698 = vmatpush1.msra.mxu0 0.0
        %699 = vmatprep.subr.mxu0 0.0
        %700 = vmatpush1.msra.mxu0 0.0
        %701 = vmatprep.subr.mxu0 0.0
        %702 = vmatpush1.msra.mxu0 0.0
        %703 = vmatprep.subr.mxu0 0.0
        %704 = vmatpush1.msra.mxu0 0.0
        %705 = vmatprep.subr.mxu0 0.0
        %706 = vmatpush1.msra.mxu0 0.0
        %707 = vmatprep.subr.mxu0 0.0
        %708 = vmatpush1.msra.mxu0 0.0
        %709 = vmatprep.subr.mxu0 0.0
        %710 = vmatpush1.msra.mxu0 0.0
        %711 = vmatprep.subr.mxu0 0.0
        %712 = vmatpush1.msra.mxu0 0.0
        %713 = vmatprep.subr.mxu0 0.0
        %714 = vmatpush1.msra.mxu0 0.0
        %715 = vmatprep.subr.mxu0 0.0
        %716 = vmatpush1.msra.mxu0 0.0
        %717 = vmatprep.subr.mxu0 0.0
        %718 = vmatpush1.msra.mxu0 0.0
        %719 = vmatprep.subr.mxu0 0.0
        %720 = vmatpush1.msra.mxu0 0.0
        %721 = vmatprep.subr.mxu0 0.0
        %722 = vmatpush1.msra.mxu0 0.0
        %723 = vmatprep.subr.mxu0 0.0
        %724 = vmatpush1.msra.mxu0 0.0
        %725 = vmatprep.subr.mxu0 0.0
        %726 = vmatpush1.msra.mxu0 0.0
        %727 = vmatprep.subr.mxu0 0.0
        %728 = vmatpush1.msra.mxu0 0.0
        %729 = vmatprep.subr.mxu0 0.0
        %730 = vmatpush1.msra.mxu0 0.0
        %731 = vmatprep.subr.mxu0 0.0
        %732 = vmatpush1.msra.mxu0 0.0
        %733 = vmatprep.mubr.f32.mxu0 0.0
        %734 = vmatmul.mubr.f32.gmra.mrb[0].mxu0 %v457
        %v735 = vpop.f32.mrb[0].mxu0
        %v736 = vadd.f32 %v451, %v735
        %v737 = vpop.f32.mrb[0].mxu0
        %738 = vdwg.mxu0
        %v743 = vlaneseq
        %v744 = vshrl.u32 %v743, 7
        %v745 = vsub.s32 0, %v744
        %v746 = vrot.slane %v424, %v745
        %v747 = vlaneseq
        %v748 = vshrl.u32 %v747, 7
        %v749 = vsub.s32 0, %v748
        %v750 = vrot.slane %v425, %v749
        %v751 = vlaneseq
        %v752 = vshrl.u32 %v751, 7
        %v753 = vsub.s32 0, %v752
        %v754 = vrot.slane %v426, %v753
        %v755 = vlaneseq
        %v756 = vshrl.u32 %v755, 7
        %v757 = vsub.s32 0, %v756
        %v758 = vrot.slane %v427, %v757
        %763 = vmatprep.subr.mxu0 0.0
        %764 = vmatpush1.msra.mxu0 %v388
        %765 = vmatprep.subr.mxu0 0.0
        %766 = vmatpush1.msra.mxu0 %v389
        %767 = vmatprep.subr.mxu0 0.0
        %768 = vmatpush1.msra.mxu0 %v390
        %769 = vmatprep.subr.mxu0 0.0
        %770 = vmatpush1.msra.mxu0 %v391
        %771 = vmatprep.subr.mxu0 0.0
        %772 = vmatpush1.msra.mxu0 0.0
        %773 = vmatprep.subr.mxu0 0.0
        %774 = vmatpush1.msra.mxu0 0.0
        %775 = vmatprep.subr.mxu0 0.0
        %776 = vmatpush1.msra.mxu0 0.0
        %777 = vmatprep.subr.mxu0 0.0
        %778 = vmatpush1.msra.mxu0 0.0
        %779 = vmatprep.subr.mxu0 0.0
        %780 = vmatpush1.msra.mxu0 0.0
        %781 = vmatprep.subr.mxu0 0.0
        %782 = vmatpush1.msra.mxu0 0.0
        %783 = vmatprep.subr.mxu0 0.0
        %784 = vmatpush1.msra.mxu0 0.0
        %785 = vmatprep.subr.mxu0 0.0
        %786 = vmatpush1.msra.mxu0 0.0
        %787 = vmatprep.subr.mxu0 0.0
        %788 = vmatpush1.msra.mxu0 0.0
        %789 = vmatprep.subr.mxu0 0.0
        %790 = vmatpush1.msra.mxu0 0.0
        %791 = vmatprep.subr.mxu0 0.0
        %792 = vmatpush1.msra.mxu0 0.0
        %793 = vmatprep.subr.mxu0 0.0
        %794 = vmatpush1.msra.mxu0 0.0
        %795 = vmatprep.subr.mxu0 0.0
        %796 = vmatpush1.msra.mxu0 0.0
        %797 = vmatprep.subr.mxu0 0.0
        %798 = vmatpush1.msra.mxu0 0.0
        %799 = vmatprep.subr.mxu0 0.0
        %800 = vmatpush1.msra.mxu0 0.0
        %801 = vmatprep.subr.mxu0 0.0
        %802 = vmatpush1.msra.mxu0 0.0
        %803 = vmatprep.subr.mxu0 0.0
        %804 = vmatpush1.msra.mxu0 0.0
        %805 = vmatprep.subr.mxu0 0.0
        %806 = vmatpush1.msra.mxu0 0.0
        %807 = vmatprep.subr.mxu0 0.0
        %808 = vmatpush1.msra.mxu0 0.0
        %809 = vmatprep.subr.mxu0 0.0
        %810 = vmatpush1.msra.mxu0 0.0
        %811 = vmatprep.subr.mxu0 0.0
        %812 = vmatpush1.msra.mxu0 0.0
        %813 = vmatprep.subr.mxu0 0.0
        %814 = vmatpush1.msra.mxu0 0.0
        %815 = vmatprep.subr.mxu0 0.0
        %816 = vmatpush1.msra.mxu0 0.0
        %817 = vmatprep.subr.mxu0 0.0
        %818 = vmatpush1.msra.mxu0 0.0
        %819 = vmatprep.subr.mxu0 0.0
        %820 = vmatpush1.msra.mxu0 0.0
        %821 = vmatprep.subr.mxu0 0.0
        %822 = vmatpush1.msra.mxu0 0.0
        %823 = vmatprep.subr.mxu0 0.0
        %824 = vmatpush1.msra.mxu0 0.0
        %825 = vmatprep.subr.mxu0 0.0
        %826 = vmatpush1.msra.mxu0 0.0
        %827 = vmatprep.mubr.f32.mxu0 0.0
        %828 = vmatmul.mubr.f32.gmra.mrb[0].mxu0 %v457
        %v829 = vpop.f32.mrb[0].mxu0
        %v830 = vadd.f32 %v746, %v829
        %v831 = vpop.f32.mrb[0].mxu0
        %832 = vdwg.mxu0
        %833 = vmatprep.subr.mxu0 0.0
        %834 = vmatpush1.msra.mxu0 %v392
        %835 = vmatprep.subr.mxu0 0.0
        %836 = vmatpush1.msra.mxu0 %v393
        %837 = vmatprep.subr.mxu0 0.0
        %838 = vmatpush1.msra.mxu0 %v394
        %839 = vmatprep.subr.mxu0 0.0
        %840 = vmatpush1.msra.mxu0 %v395
        %841 = vmatprep.subr.mxu0 0.0
        %842 = vmatpush1.msra.mxu0 0.0
        %843 = vmatprep.subr.mxu0 0.0
        %844 = vmatpush1.msra.mxu0 0.0
        %845 = vmatprep.subr.mxu0 0.0
        %846 = vmatpush1.msra.mxu0 0.0
        %847 = vmatprep.subr.mxu0 0.0
        %848 = vmatpush1.msra.mxu0 0.0
        %849 = vmatprep.subr.mxu0 0.0
        %850 = vmatpush1.msra.mxu0 0.0
        %851 = vmatprep.subr.mxu0 0.0
        %852 = vmatpush1.msra.mxu0 0.0
        %853 = vmatprep.subr.mxu0 0.0
        %854 = vmatpush1.msra.mxu0 0.0
        %855 = vmatprep.subr.mxu0 0.0
        %856 = vmatpush1.msra.mxu0 0.0
        %857 = vmatprep.subr.mxu0 0.0
        %858 = vmatpush1.msra.mxu0 0.0
        %859 = vmatprep.subr.mxu0 0.0
        %860 = vmatpush1.msra.mxu0 0.0
        %861 = vmatprep.subr.mxu0 0.0
        %862 = vmatpush1.msra.mxu0 0.0
        %863 = vmatprep.subr.mxu0 0.0
        %864 = vmatpush1.msra.mxu0 0.0
        %865 = vmatprep.subr.mxu0 0.0
        %866 = vmatpush1.msra.mxu0 0.0
        %867 = vmatprep.subr.mxu0 0.0
        %868 = vmatpush1.msra.mxu0 0.0
        %869 = vmatprep.subr.mxu0 0.0
        %870 = vmatpush1.msra.mxu0 0.0
        %871 = vmatprep.subr.mxu0 0.0
        %872 = vmatpush1.msra.mxu0 0.0
        %873 = vmatprep.subr.mxu0 0.0
        %874 = vmatpush1.msra.mxu0 0.0
        %875 = vmatprep.subr.mxu0 0.0
        %876 = vmatpush1.msra.mxu0 0.0
        %877 = vmatprep.subr.mxu0 0.0
        %878 = vmatpush1.msra.mxu0 0.0
        %879 = vmatprep.subr.mxu0 0.0
        %880 = vmatpush1.msra.mxu0 0.0
        %881 = vmatprep.subr.mxu0 0.0
        %882 = vmatpush1.msra.mxu0 0.0
        %883 = vmatprep.subr.mxu0 0.0
        %884 = vmatpush1.msra.mxu0 0.0
        %885 = vmatprep.subr.mxu0 0.0
        %886 = vmatpush1.msra.mxu0 0.0
        %887 = vmatprep.subr.mxu0 0.0
        %888 = vmatpush1.msra.mxu0 0.0
        %889 = vmatprep.subr.mxu0 0.0
        %890 = vmatpush1.msra.mxu0 0.0
        %891 = vmatprep.subr.mxu0 0.0
        %892 = vmatpush1.msra.mxu0 0.0
        %893 = vmatprep.subr.mxu0 0.0
        %894 = vmatpush1.msra.mxu0 0.0
        %895 = vmatprep.subr.mxu0 0.0
        %896 = vmatpush1.msra.mxu0 0.0
        %897 = vmatprep.mubr.f32.mxu0 0.0
        %898 = vmatmul.mubr.f32.gmra.mrb[0].mxu0 %v457
        %v899 = vpop.f32.mrb[0].mxu0
        %v900 = vadd.f32 %v750, %v899
        %v901 = vpop.f32.mrb[0].mxu0
        %902 = vdwg.mxu0
        %903 = vmatprep.subr.mxu0 0.0
        %904 = vmatpush1.msra.mxu0 %v396
        %905 = vmatprep.subr.mxu0 0.0
        %906 = vmatpush1.msra.mxu0 %v397
        %907 = vmatprep.subr.mxu0 0.0
        %908 = vmatpush1.msra.mxu0 %v398
        %909 = vmatprep.subr.mxu0 0.0
        %910 = vmatpush1.msra.mxu0 %v399
        %911 = vmatprep.subr.mxu0 0.0
        %912 = vmatpush1.msra.mxu0 0.0
        %913 = vmatprep.subr.mxu0 0.0
        %914 = vmatpush1.msra.mxu0 0.0
        %915 = vmatprep.subr.mxu0 0.0
        %916 = vmatpush1.msra.mxu0 0.0
        %917 = vmatprep.subr.mxu0 0.0
        %918 = vmatpush1.msra.mxu0 0.0
        %919 = vmatprep.subr.mxu0 0.0
        %920 = vmatpush1.msra.mxu0 0.0
        %921 = vmatprep.subr.mxu0 0.0
        %922 = vmatpush1.msra.mxu0 0.0
        %923 = vmatprep.subr.mxu0 0.0
        %924 = vmatpush1.msra.mxu0 0.0
        %925 = vmatprep.subr.mxu0 0.0
        %926 = vmatpush1.msra.mxu0 0.0
        %927 = vmatprep.subr.mxu0 0.0
        %928 = vmatpush1.msra.mxu0 0.0
        %929 = vmatprep.subr.mxu0 0.0
        %930 = vmatpush1.msra.mxu0 0.0
        %931 = vmatprep.subr.mxu0 0.0
        %932 = vmatpush1.msra.mxu0 0.0
        %933 = vmatprep.subr.mxu0 0.0
        %934 = vmatpush1.msra.mxu0 0.0
        %935 = vmatprep.subr.mxu0 0.0
        %936 = vmatpush1.msra.mxu0 0.0
        %937 = vmatprep.subr.mxu0 0.0
        %938 = vmatpush1.msra.mxu0 0.0
        %939 = vmatprep.subr.mxu0 0.0
        %940 = vmatpush1.msra.mxu0 0.0
        %941 = vmatprep.subr.mxu0 0.0
        %942 = vmatpush1.msra.mxu0 0.0
        %943 = vmatprep.subr.mxu0 0.0
        %944 = vmatpush1.msra.mxu0 0.0
        %945 = vmatprep.subr.mxu0 0.0
        %946 = vmatpush1.msra.mxu0 0.0
        %947 = vmatprep.subr.mxu0 0.0
        %948 = vmatpush1.msra.mxu0 0.0
        %949 = vmatprep.subr.mxu0 0.0
        %950 = vmatpush1.msra.mxu0 0.0
        %951 = vmatprep.subr.mxu0 0.0
        %952 = vmatpush1.msra.mxu0 0.0
        %953 = vmatprep.subr.mxu0 0.0
        %954 = vmatpush1.msra.mxu0 0.0
        %955 = vmatprep.subr.mxu0 0.0
        %956 = vmatpush1.msra.mxu0 0.0
        %957 = vmatprep.subr.mxu0 0.0
        %958 = vmatpush1.msra.mxu0 0.0
        %959 = vmatprep.subr.mxu0 0.0
        %960 = vmatpush1.msra.mxu0 0.0
        %961 = vmatprep.subr.mxu0 0.0
        %962 = vmatpush1.msra.mxu0 0.0
        %963 = vmatprep.subr.mxu0 0.0
        %964 = vmatpush1.msra.mxu0 0.0
        %965 = vmatprep.subr.mxu0 0.0
        %966 = vmatpush1.msra.mxu0 0.0
        %967 = vmatprep.mubr.f32.mxu0 0.0
        %968 = vmatmul.mubr.f32.gmra.mrb[0].mxu0 %v457
        %v969 = vpop.f32.mrb[0].mxu0
        %v970 = vadd.f32 %v754, %v969
        %v971 = vpop.f32.mrb[0].mxu0
        %972 = vdwg.mxu0
        %973 = vmatprep.subr.mxu0 0.0
        %974 = vmatpush1.msra.mxu0 %v400
        %975 = vmatprep.subr.mxu0 0.0
        %976 = vmatpush1.msra.mxu0 %v401
        %977 = vmatprep.subr.mxu0 0.0
        %978 = vmatpush1.msra.mxu0 %v402
        %979 = vmatprep.subr.mxu0 0.0
        %980 = vmatpush1.msra.mxu0 %v403
        %981 = vmatprep.subr.mxu0 0.0
        %982 = vmatpush1.msra.mxu0 0.0
        %983 = vmatprep.subr.mxu0 0.0
        %984 = vmatpush1.msra.mxu0 0.0
        %985 = vmatprep.subr.mxu0 0.0
        %986 = vmatpush1.msra.mxu0 0.0
        %987 = vmatprep.subr.mxu0 0.0
        %988 = vmatpush1.msra.mxu0 0.0
        %989 = vmatprep.subr.mxu0 0.0
        %990 = vmatpush1.msra.mxu0 0.0
        %991 = vmatprep.subr.mxu0 0.0
        %992 = vmatpush1.msra.mxu0 0.0
        %993 = vmatprep.subr.mxu0 0.0
        %994 = vmatpush1.msra.mxu0 0.0
        %995 = vmatprep.subr.mxu0 0.0
        %996 = vmatpush1.msra.mxu0 0.0
        %997 = vmatprep.subr.mxu0 0.0
        %998 = vmatpush1.msra.mxu0 0.0
        %999 = vmatprep.subr.mxu0 0.0
        %1000 = vmatpush1.msra.mxu0 0.0
        %1001 = vmatprep.subr.mxu0 0.0
        %1002 = vmatpush1.msra.mxu0 0.0
        %1003 = vmatprep.subr.mxu0 0.0
        %1004 = vmatpush1.msra.mxu0 0.0
        %1005 = vmatprep.subr.mxu0 0.0
        %1006 = vmatpush1.msra.mxu0 0.0
        %1007 = vmatprep.subr.mxu0 0.0
        %1008 = vmatpush1.msra.mxu0 0.0
        %1009 = vmatprep.subr.mxu0 0.0
        %1010 = vmatpush1.msra.mxu0 0.0
        %1011 = vmatprep.subr.mxu0 0.0
        %1012 = vmatpush1.msra.mxu0 0.0
        %1013 = vmatprep.subr.mxu0 0.0
        %1014 = vmatpush1.msra.mxu0 0.0
        %1015 = vmatprep.subr.mxu0 0.0
        %1016 = vmatpush1.msra.mxu0 0.0
        %1017 = vmatprep.subr.mxu0 0.0
        %1018 = vmatpush1.msra.mxu0 0.0
        %1019 = vmatprep.subr.mxu0 0.0
        %1020 = vmatpush1.msra.mxu0 0.0
        %1021 = vmatprep.subr.mxu0 0.0
        %1022 = vmatpush1.msra.mxu0 0.0
        %1023 = vmatprep.subr.mxu0 0.0
        %1024 = vmatpush1.msra.mxu0 0.0
        %1025 = vmatprep.subr.mxu0 0.0
        %1026 = vmatpush1.msra.mxu0 0.0
        %1027 = vmatprep.subr.mxu0 0.0
        %1028 = vmatpush1.msra.mxu0 0.0
        %1029 = vmatprep.subr.mxu0 0.0
        %1030 = vmatpush1.msra.mxu0 0.0
        %1031 = vmatprep.subr.mxu0 0.0
        %1032 = vmatpush1.msra.mxu0 0.0
        %1033 = vmatprep.subr.mxu0 0.0
        %1034 = vmatpush1.msra.mxu0 0.0
        %1035 = vmatprep.subr.mxu0 0.0
        %1036 = vmatpush1.msra.mxu0 0.0
        %1037 = vmatprep.mubr.f32.mxu0 0.0
        %1038 = vmatmul.mubr.f32.gmra.mrb[0].mxu0 %v457
        %v1039 = vpop.f32.mrb[0].mxu0
        %v1040 = vadd.f32 %v758, %v1039
        %v1041 = vpop.f32.mrb[0].mxu0
        %1042 = vdwg.mxu0
        %v1047 = vlaneseq
        %v1048 = vshrl.u32 %v1047, 7
        %v1049 = vsub.s32 0, %v1048
        %v1050 = vrot.slane %v428, %v1049
        %v1051 = vlaneseq
        %v1052 = vshrl.u32 %v1051, 7
        %v1053 = vsub.s32 0, %v1052
        %v1054 = vrot.slane %v429, %v1053
        %v1055 = vlaneseq
        %v1056 = vshrl.u32 %v1055, 7
        %v1057 = vsub.s32 0, %v1056
        %v1058 = vrot.slane %v430, %v1057
        %v1059 = vlaneseq
        %v1060 = vshrl.u32 %v1059, 7
        %v1061 = vsub.s32 0, %v1060
        %v1062 = vrot.slane %v431, %v1061
        %1067 = vmatprep.subr.mxu0 0.0
        %1068 = vmatpush1.msra.mxu0 %v404
        %1069 = vmatprep.subr.mxu0 0.0
        %1070 = vmatpush1.msra.mxu0 %v405
        %1071 = vmatprep.subr.mxu0 0.0
        %1072 = vmatpush1.msra.mxu0 %v406
        %1073 = vmatprep.subr.mxu0 0.0
        %1074 = vmatpush1.msra.mxu0 %v407
        %1075 = vmatprep.subr.mxu0 0.0
        %1076 = vmatpush1.msra.mxu0 0.0
        %1077 = vmatprep.subr.mxu0 0.0
        %1078 = vmatpush1.msra.mxu0 0.0
        %1079 = vmatprep.subr.mxu0 0.0
        %1080 = vmatpush1.msra.mxu0 0.0
        %1081 = vmatprep.subr.mxu0 0.0
        %1082 = vmatpush1.msra.mxu0 0.0
        %1083 = vmatprep.subr.mxu0 0.0
        %1084 = vmatpush1.msra.mxu0 0.0
        %1085 = vmatprep.subr.mxu0 0.0
        %1086 = vmatpush1.msra.mxu0 0.0
        %1087 = vmatprep.subr.mxu0 0.0
        %1088 = vmatpush1.msra.mxu0 0.0
        %1089 = vmatprep.subr.mxu0 0.0
        %1090 = vmatpush1.msra.mxu0 0.0
        %1091 = vmatprep.subr.mxu0 0.0
        %1092 = vmatpush1.msra.mxu0 0.0
        %1093 = vmatprep.subr.mxu0 0.0
        %1094 = vmatpush1.msra.mxu0 0.0
        %1095 = vmatprep.subr.mxu0 0.0
        %1096 = vmatpush1.msra.mxu0 0.0
        %1097 = vmatprep.subr.mxu0 0.0
        %1098 = vmatpush1.msra.mxu0 0.0
        %1099 = vmatprep.subr.mxu0 0.0
        %1100 = vmatpush1.msra.mxu0 0.0
        %1101 = vmatprep.subr.mxu0 0.0
        %1102 = vmatpush1.msra.mxu0 0.0
        %1103 = vmatprep.subr.mxu0 0.0
        %1104 = vmatpush1.msra.mxu0 0.0
        %1105 = vmatprep.subr.mxu0 0.0
        %1106 = vmatpush1.msra.mxu0 0.0
        %1107 = vmatprep.subr.mxu0 0.0
        %1108 = vmatpush1.msra.mxu0 0.0
        %1109 = vmatprep.subr.mxu0 0.0
        %1110 = vmatpush1.msra.mxu0 0.0
        %1111 = vmatprep.subr.mxu0 0.0
        %1112 = vmatpush1.msra.mxu0 0.0
        %1113 = vmatprep.subr.mxu0 0.0
        %1114 = vmatpush1.msra.mxu0 0.0
        %1115 = vmatprep.subr.mxu0 0.0
        %1116 = vmatpush1.msra.mxu0 0.0
        %1117 = vmatprep.subr.mxu0 0.0
        %1118 = vmatpush1.msra.mxu0 0.0
        %1119 = vmatprep.subr.mxu0 0.0
        %1120 = vmatpush1.msra.mxu0 0.0
        %1121 = vmatprep.subr.mxu0 0.0
        %1122 = vmatpush1.msra.mxu0 0.0
        %1123 = vmatprep.subr.mxu0 0.0
        %1124 = vmatpush1.msra.mxu0 0.0
        %1125 = vmatprep.subr.mxu0 0.0
        %1126 = vmatpush1.msra.mxu0 0.0
        %1127 = vmatprep.subr.mxu0 0.0
        %1128 = vmatpush1.msra.mxu0 0.0
        %1129 = vmatprep.subr.mxu0 0.0
        %1130 = vmatpush1.msra.mxu0 0.0
        %1131 = vmatprep.mubr.f32.mxu0 0.0
        %1132 = vmatmul.mubr.f32.gmra.mrb[0].mxu0 %v457
        %v1133 = vpop.f32.mrb[0].mxu0
        %v1134 = vadd.f32 %v1050, %v1133
        %v1135 = vpop.f32.mrb[0].mxu0
        %1136 = vdwg.mxu0
        %1137 = vmatprep.subr.mxu0 0.0
        %1138 = vmatpush1.msra.mxu0 %v408
        %1139 = vmatprep.subr.mxu0 0.0
        %1140 = vmatpush1.msra.mxu0 %v409
        %1141 = vmatprep.subr.mxu0 0.0
        %1142 = vmatpush1.msra.mxu0 %v410
        %1143 = vmatprep.subr.mxu0 0.0
        %1144 = vmatpush1.msra.mxu0 %v411
        %1145 = vmatprep.subr.mxu0 0.0
        %1146 = vmatpush1.msra.mxu0 0.0
        %1147 = vmatprep.subr.mxu0 0.0
        %1148 = vmatpush1.msra.mxu0 0.0
        %1149 = vmatprep.subr.mxu0 0.0
        %1150 = vmatpush1.msra.mxu0 0.0
        %1151 = vmatprep.subr.mxu0 0.0
        %1152 = vmatpush1.msra.mxu0 0.0
        %1153 = vmatprep.subr.mxu0 0.0
        %1154 = vmatpush1.msra.mxu0 0.0
        %1155 = vmatprep.subr.mxu0 0.0
        %1156 = vmatpush1.msra.mxu0 0.0
        %1157 = vmatprep.subr.mxu0 0.0
        %1158 = vmatpush1.msra.mxu0 0.0
        %1159 = vmatprep.subr.mxu0 0.0
        %1160 = vmatpush1.msra.mxu0 0.0
        %1161 = vmatprep.subr.mxu0 0.0
        %1162 = vmatpush1.msra.mxu0 0.0
        %1163 = vmatprep.subr.mxu0 0.0
        %1164 = vmatpush1.msra.mxu0 0.0
        %1165 = vmatprep.subr.mxu0 0.0
        %1166 = vmatpush1.msra.mxu0 0.0
        %1167 = vmatprep.subr.mxu0 0.0
        %1168 = vmatpush1.msra.mxu0 0.0
        %1169 = vmatprep.subr.mxu0 0.0
        %1170 = vmatpush1.msra.mxu0 0.0
        %1171 = vmatprep.subr.mxu0 0.0
        %1172 = vmatpush1.msra.mxu0 0.0
        %1173 = vmatprep.subr.mxu0 0.0
        %1174 = vmatpush1.msra.mxu0 0.0
        %1175 = vmatprep.subr.mxu0 0.0
        %1176 = vmatpush1.msra.mxu0 0.0
        %1177 = vmatprep.subr.mxu0 0.0
        %1178 = vmatpush1.msra.mxu0 0.0
        %1179 = vmatprep.subr.mxu0 0.0
        %1180 = vmatpush1.msra.mxu0 0.0
        %1181 = vmatprep.subr.mxu0 0.0
        %1182 = vmatpush1.msra.mxu0 0.0
        %1183 = vmatprep.subr.mxu0 0.0
        %1184 = vmatpush1.msra.mxu0 0.0
        %1185 = vmatprep.subr.mxu0 0.0
        %1186 = vmatpush1.msra.mxu0 0.0
        %1187 = vmatprep.subr.mxu0 0.0
        %1188 = vmatpush1.msra.mxu0 0.0
        %1189 = vmatprep.subr.mxu0 0.0
        %1190 = vmatpush1.msra.mxu0 0.0
        %1191 = vmatprep.subr.mxu0 0.0
        %1192 = vmatpush1.msra.mxu0 0.0
        %1193 = vmatprep.subr.mxu0 0.0
        %1194 = vmatpush1.msra.mxu0 0.0
        %1195 = vmatprep.subr.mxu0 0.0
        %1196 = vmatpush1.msra.mxu0 0.0
        %1197 = vmatprep.subr.mxu0 0.0
        %1198 = vmatpush1.msra.mxu0 0.0
        %1199 = vmatprep.subr.mxu0 0.0
        %1200 = vmatpush1.msra.mxu0 0.0
        %1201 = vmatprep.mubr.f32.mxu0 0.0
        %1202 = vmatmul.mubr.f32.gmra.mrb[0].mxu0 %v457
        %v1203 = vpop.f32.mrb[0].mxu0
        %v1204 = vadd.f32 %v1054, %v1203
        %v1205 = vpop.f32.mrb[0].mxu0
        %1206 = vdwg.mxu0
        %1207 = vmatprep.subr.mxu0 0.0
        %1208 = vmatpush1.msra.mxu0 %v412
        %1209 = vmatprep.subr.mxu0 0.0
        %1210 = vmatpush1.msra.mxu0 %v413
        %1211 = vmatprep.subr.mxu0 0.0
        %1212 = vmatpush1.msra.mxu0 %v414
        %1213 = vmatprep.subr.mxu0 0.0
        %1214 = vmatpush1.msra.mxu0 %v415
        %1215 = vmatprep.subr.mxu0 0.0
        %1216 = vmatpush1.msra.mxu0 0.0
        %1217 = vmatprep.subr.mxu0 0.0
        %1218 = vmatpush1.msra.mxu0 0.0
        %1219 = vmatprep.subr.mxu0 0.0
        %1220 = vmatpush1.msra.mxu0 0.0
        %1221 = vmatprep.subr.mxu0 0.0
        %1222 = vmatpush1.msra.mxu0 0.0
        %1223 = vmatprep.subr.mxu0 0.0
        %1224 = vmatpush1.msra.mxu0 0.0
        %1225 = vmatprep.subr.mxu0 0.0
        %1226 = vmatpush1.msra.mxu0 0.0
        %1227 = vmatprep.subr.mxu0 0.0
        %1228 = vmatpush1.msra.mxu0 0.0
        %1229 = vmatprep.subr.mxu0 0.0
        %1230 = vmatpush1.msra.mxu0 0.0
        %1231 = vmatprep.subr.mxu0 0.0
        %1232 = vmatpush1.msra.mxu0 0.0
        %1233 = vmatprep.subr.mxu0 0.0
        %1234 = vmatpush1.msra.mxu0 0.0
        %1235 = vmatprep.subr.mxu0 0.0
        %1236 = vmatpush1.msra.mxu0 0.0
        %1237 = vmatprep.subr.mxu0 0.0
        %1238 = vmatpush1.msra.mxu0 0.0
        %1239 = vmatprep.subr.mxu0 0.0
        %1240 = vmatpush1.msra.mxu0 0.0
        %1241 = vmatprep.subr.mxu0 0.0
        %1242 = vmatpush1.msra.mxu0 0.0
        %1243 = vmatprep.subr.mxu0 0.0
        %1244 = vmatpush1.msra.mxu0 0.0
        %1245 = vmatprep.subr.mxu0 0.0
        %1246 = vmatpush1.msra.mxu0 0.0
        %1247 = vmatprep.subr.mxu0 0.0
        %1248 = vmatpush1.msra.mxu0 0.0
        %1249 = vmatprep.subr.mxu0 0.0
        %1250 = vmatpush1.msra.mxu0 0.0
        %1251 = vmatprep.subr.mxu0 0.0
        %1252 = vmatpush1.msra.mxu0 0.0
        %1253 = vmatprep.subr.mxu0 0.0
        %1254 = vmatpush1.msra.mxu0 0.0
        %1255 = vmatprep.subr.mxu0 0.0
        %1256 = vmatpush1.msra.mxu0 0.0
        %1257 = vmatprep.subr.mxu0 0.0
        %1258 = vmatpush1.msra.mxu0 0.0
        %1259 = vmatprep.subr.mxu0 0.0
        %1260 = vmatpush1.msra.mxu0 0.0
        %1261 = vmatprep.subr.mxu0 0.0
        %1262 = vmatpush1.msra.mxu0 0.0
        %1263 = vmatprep.subr.mxu0 0.0
        %1264 = vmatpush1.msra.mxu0 0.0
        %1265 = vmatprep.subr.mxu0 0.0
        %1266 = vmatpush1.msra.mxu0 0.0
        %1267 = vmatprep.subr.mxu0 0.0
        %1268 = vmatpush1.msra.mxu0 0.0
        %1269 = vmatprep.subr.mxu0 0.0
        %1270 = vmatpush1.msra.mxu0 0.0
        %1271 = vmatprep.mubr.f32.mxu0 0.0
        %1272 = vmatmul.mubr.f32.gmra.mrb[0].mxu0 %v457
        %v1273 = vpop.f32.mrb[0].mxu0
        %v1274 = vadd.f32 %v1058, %v1273
        %v1275 = vpop.f32.mrb[0].mxu0
        %1276 = vdwg.mxu0
        %1277 = vmatprep.subr.mxu0 0.0
        %1278 = vmatpush1.msra.mxu0 %v416
        %1279 = vmatprep.subr.mxu0 0.0
        %1280 = vmatpush1.msra.mxu0 %v417
        %1281 = vmatprep.subr.mxu0 0.0
        %1282 = vmatpush1.msra.mxu0 %v418
        %1283 = vmatprep.subr.mxu0 0.0
        %1284 = vmatpush1.msra.mxu0 %v419
        %1285 = vmatprep.subr.mxu0 0.0
        %1286 = vmatpush1.msra.mxu0 0.0
        %1287 = vmatprep.subr.mxu0 0.0
        %1288 = vmatpush1.msra.mxu0 0.0
        %1289 = vmatprep.subr.mxu0 0.0
        %1290 = vmatpush1.msra.mxu0 0.0
        %1291 = vmatprep.subr.mxu0 0.0
        %1292 = vmatpush1.msra.mxu0 0.0
        %1293 = vmatprep.subr.mxu0 0.0
        %1294 = vmatpush1.msra.mxu0 0.0
        %1295 = vmatprep.subr.mxu0 0.0
        %1296 = vmatpush1.msra.mxu0 0.0
        %1297 = vmatprep.subr.mxu0 0.0
        %1298 = vmatpush1.msra.mxu0 0.0
        %1299 = vmatprep.subr.mxu0 0.0
        %1300 = vmatpush1.msra.mxu0 0.0
        %1301 = vmatprep.subr.mxu0 0.0
        %1302 = vmatpush1.msra.mxu0 0.0
        %1303 = vmatprep.subr.mxu0 0.0
        %1304 = vmatpush1.msra.mxu0 0.0
        %1305 = vmatprep.subr.mxu0 0.0
        %1306 = vmatpush1.msra.mxu0 0.0
        %1307 = vmatprep.subr.mxu0 0.0
        %1308 = vmatpush1.msra.mxu0 0.0
        %1309 = vmatprep.subr.mxu0 0.0
        %1310 = vmatpush1.msra.mxu0 0.0
        %1311 = vmatprep.subr.mxu0 0.0
        %1312 = vmatpush1.msra.mxu0 0.0
        %1313 = vmatprep.subr.mxu0 0.0
        %1314 = vmatpush1.msra.mxu0 0.0
        %1315 = vmatprep.subr.mxu0 0.0
        %1316 = vmatpush1.msra.mxu0 0.0
        %1317 = vmatprep.subr.mxu0 0.0
        %1318 = vmatpush1.msra.mxu0 0.0
        %1319 = vmatprep.subr.mxu0 0.0
        %1320 = vmatpush1.msra.mxu0 0.0
        %1321 = vmatprep.subr.mxu0 0.0
        %1322 = vmatpush1.msra.mxu0 0.0
        %1323 = vmatprep.subr.mxu0 0.0
        %1324 = vmatpush1.msra.mxu0 0.0
        %1325 = vmatprep.subr.mxu0 0.0
        %1326 = vmatpush1.msra.mxu0 0.0
        %1327 = vmatprep.subr.mxu0 0.0
        %1328 = vmatpush1.msra.mxu0 0.0
        %1329 = vmatprep.subr.mxu0 0.0
        %1330 = vmatpush1.msra.mxu0 0.0
        %1331 = vmatprep.subr.mxu0 0.0
        %1332 = vmatpush1.msra.mxu0 0.0
        %1333 = vmatprep.subr.mxu0 0.0
        %1334 = vmatpush1.msra.mxu0 0.0
        %1335 = vmatprep.subr.mxu0 0.0
        %1336 = vmatpush1.msra.mxu0 0.0
        %1337 = vmatprep.subr.mxu0 0.0
        %1338 = vmatpush1.msra.mxu0 0.0
        %1339 = vmatprep.subr.mxu0 0.0
        %1340 = vmatpush1.msra.mxu0 0.0
        %1341 = vmatprep.mubr.f32.mxu0 0.0
        %1342 = vmatmul.mubr.f32.gmra.mrb[0].mxu0 %v457
        %v1343 = vpop.f32.mrb[0].mxu0
        %v1344 = vadd.f32 %v1062, %v1343
        %v1345 = vpop.f32.mrb[0].mxu0
        %1346 = vdwg.mxu0
        %v1347 = vld [vmem:[%s5] sm:$0xff]
        %v1348 = vld [vmem:[%s5 + $0x8] sm:$0xff]
        %v1349 = vld [vmem:[%s5 + $0x10] sm:$0xff]
        %v1350 = vld [vmem:[%s5 + $0x18] sm:$0xff]
        %vm1351 = vcmask 64512
        %v1353 = vsel %vm1351, %v526, 0
        %v1356 = vsel %vm1351, %v1347, 0
        %1358 = vmatprep.subr.mxu0 0.0
        %1359 = vmatpush1.xpose.msra.mxu0 %v1356
        %1360 = vmatprep.subr.mxu0 0.0
        %1361 = vmatpush1.xpose.msra.mxu0 0.0
        %1362 = vmatprep.subr.mxu0 0.0
        %1363 = vmatpush1.xpose.msra.mxu0 0.0
        %1364 = vmatprep.subr.mxu0 0.0
        %1365 = vmatpush1.xpose.msra.mxu0 0.0
        %1366 = vmatprep.subr.mxu0 0.0
        %1367 = vmatpush1.xpose.msra.mxu0 0.0
        %1368 = vmatprep.subr.mxu0 0.0
        %1369 = vmatpush1.xpose.msra.mxu0 0.0
        %1370 = vmatprep.subr.mxu0 0.0
        %1371 = vmatpush1.xpose.msra.mxu0 0.0
        %1372 = vmatprep.subr.mxu0 0.0
        %1373 = vmatpush1.xpose.msra.mxu0 0.0
        %1374 = vmatprep.subr.mxu0 0.0
        %1375 = vmatpush1.xpose.msra.mxu0 0.0
        %1376 = vmatprep.subr.mxu0 0.0
        %1377 = vmatpush1.xpose.msra.mxu0 0.0
        %1378 = vmatprep.subr.mxu0 0.0
        %1379 = vmatpush1.xpose.msra.mxu0 0.0
        %1380 = vmatprep.subr.mxu0 0.0
        %1381 = vmatpush1.xpose.msra.mxu0 0.0
        %1382 = vmatprep.subr.mxu0 0.0
        %1383 = vmatpush1.xpose.msra.mxu0 0.0
        %1384 = vmatprep.subr.mxu0 0.0
        %1385 = vmatpush1.xpose.msra.mxu0 0.0
        %1386 = vmatprep.subr.mxu0 0.0
        %1387 = vmatpush1.xpose.msra.mxu0 0.0
        %1388 = vmatprep.subr.mxu0 0.0
        %1389 = vmatpush1.xpose.msra.mxu0 0.0
        %1390 = vmatprep.subr.mxu0 0.0
        %1391 = vmatpush1.xpose.msra.mxu0 0.0
        %1392 = vmatprep.subr.mxu0 0.0
        %1393 = vmatpush1.xpose.msra.mxu0 0.0
        %1394 = vmatprep.subr.mxu0 0.0
        %1395 = vmatpush1.xpose.msra.mxu0 0.0
        %1396 = vmatprep.subr.mxu0 0.0
        %1397 = vmatpush1.xpose.msra.mxu0 0.0
        %1398 = vmatprep.subr.mxu0 0.0
        %1399 = vmatpush1.xpose.msra.mxu0 0.0
        %1400 = vmatprep.subr.mxu0 0.0
        %1401 = vmatpush1.xpose.msra.mxu0 0.0
        %1402 = vmatprep.subr.mxu0 0.0
        %1403 = vmatpush1.xpose.msra.mxu0 0.0
        %1404 = vmatprep.subr.mxu0 0.0
        %1405 = vmatpush1.xpose.msra.mxu0 0.0
        %1406 = vmatprep.subr.mxu0 0.0
        %1407 = vmatpush1.xpose.msra.mxu0 0.0
        %1408 = vmatprep.subr.mxu0 0.0
        %1409 = vmatpush1.xpose.msra.mxu0 0.0
        %1410 = vmatprep.subr.mxu0 0.0
        %1411 = vmatpush1.xpose.msra.mxu0 0.0
        %1412 = vmatprep.subr.mxu0 0.0
        %1413 = vmatpush1.xpose.msra.mxu0 0.0
        %1414 = vmatprep.subr.mxu0 0.0
        %1415 = vmatpush1.xpose.msra.mxu0 0.0
        %1416 = vmatprep.subr.mxu0 0.0
        %1417 = vmatpush1.xpose.msra.mxu0 0.0
        %1418 = vmatprep.subr.mxu0 0.0
        %1419 = vmatpush1.xpose.msra.mxu0 0.0
        %1420 = vmatprep.subr.mxu0 0.0
        %1421 = vmatpush1.xpose.msra.mxu0 0.0
        %1422 = vmatprep.mubr.f32.mxu0 0.0
        %1423 = vmatmul.mubr.f32.gmra.mrb[0].mxu0 %v1353
        %v1424 = vpop.f32.mrb[0].mxu0
        %v1425 = vadd.f32 0.0, %v1424
        %v1426 = vpop.f32.mrb[0].mxu0
        %1427 = vdwg.mxu0
        %v1429 = vsel %vm1351, %v596, 0
        %v1432 = vsel %vm1351, %v1348, 0
        %1434 = vmatprep.subr.mxu0 0.0
        %1435 = vmatpush1.xpose.msra.mxu0 %v1432
        %1436 = vmatprep.subr.mxu0 0.0
        %1437 = vmatpush1.xpose.msra.mxu0 0.0
        %1438 = vmatprep.subr.mxu0 0.0
        %1439 = vmatpush1.xpose.msra.mxu0 0.0
        %1440 = vmatprep.subr.mxu0 0.0
        %1441 = vmatpush1.xpose.msra.mxu0 0.0
        %1442 = vmatprep.subr.mxu0 0.0
        %1443 = vmatpush1.xpose.msra.mxu0 0.0
        %1444 = vmatprep.subr.mxu0 0.0
        %1445 = vmatpush1.xpose.msra.mxu0 0.0
        %1446 = vmatprep.subr.mxu0 0.0
        %1447 = vmatpush1.xpose.msra.mxu0 0.0
        %1448 = vmatprep.subr.mxu0 0.0
        %1449 = vmatpush1.xpose.msra.mxu0 0.0
        %1450 = vmatprep.subr.mxu0 0.0
        %1451 = vmatpush1.xpose.msra.mxu0 0.0
        %1452 = vmatprep.subr.mxu0 0.0
        %1453 = vmatpush1.xpose.msra.mxu0 0.0
        %1454 = vmatprep.subr.mxu0 0.0
        %1455 = vmatpush1.xpose.msra.mxu0 0.0
        %1456 = vmatprep.subr.mxu0 0.0
        %1457 = vmatpush1.xpose.msra.mxu0 0.0
        %1458 = vmatprep.subr.mxu0 0.0
        %1459 = vmatpush1.xpose.msra.mxu0 0.0
        %1460 = vmatprep.subr.mxu0 0.0
        %1461 = vmatpush1.xpose.msra.mxu0 0.0
        %1462 = vmatprep.subr.mxu0 0.0
        %1463 = vmatpush1.xpose.msra.mxu0 0.0
        %1464 = vmatprep.subr.mxu0 0.0
        %1465 = vmatpush1.xpose.msra.mxu0 0.0
        %1466 = vmatprep.subr.mxu0 0.0
        %1467 = vmatpush1.xpose.msra.mxu0 0.0
        %1468 = vmatprep.subr.mxu0 0.0
        %1469 = vmatpush1.xpose.msra.mxu0 0.0
        %1470 = vmatprep.subr.mxu0 0.0
        %1471 = vmatpush1.xpose.msra.mxu0 0.0
        %1472 = vmatprep.subr.mxu0 0.0
        %1473 = vmatpush1.xpose.msra.mxu0 0.0
        %1474 = vmatprep.subr.mxu0 0.0
        %1475 = vmatpush1.xpose.msra.mxu0 0.0
        %1476 = vmatprep.subr.mxu0 0.0
        %1477 = vmatpush1.xpose.msra.mxu0 0.0
        %1478 = vmatprep.subr.mxu0 0.0
        %1479 = vmatpush1.xpose.msra.mxu0 0.0
        %1480 = vmatprep.subr.mxu0 0.0
        %1481 = vmatpush1.xpose.msra.mxu0 0.0
        %1482 = vmatprep.subr.mxu0 0.0
        %1483 = vmatpush1.xpose.msra.mxu0 0.0
        %1484 = vmatprep.subr.mxu0 0.0
        %1485 = vmatpush1.xpose.msra.mxu0 0.0
        %1486 = vmatprep.subr.mxu0 0.0
        %1487 = vmatpush1.xpose.msra.mxu0 0.0
        %1488 = vmatprep.subr.mxu0 0.0
        %1489 = vmatpush1.xpose.msra.mxu0 0.0
        %1490 = vmatprep.subr.mxu0 0.0
        %1491 = vmatpush1.xpose.msra.mxu0 0.0
        %1492 = vmatprep.subr.mxu0 0.0
        %1493 = vmatpush1.xpose.msra.mxu0 0.0
        %1494 = vmatprep.subr.mxu0 0.0
        %1495 = vmatpush1.xpose.msra.mxu0 0.0
        %1496 = vmatprep.subr.mxu0 0.0
        %1497 = vmatpush1.xpose.msra.mxu0 0.0
        %1498 = vmatprep.mubr.f32.mxu0 0.0
        %1499 = vmatmul.mubr.f32.gmra.mrb[0].mxu0 %v1429
        %v1500 = vpop.f32.mrb[0].mxu0
        %v1501 = vadd.f32 0.0, %v1500
        %v1502 = vpop.f32.mrb[0].mxu0
        %1503 = vdwg.mxu0
        %v1505 = vsel %vm1351, %v666, 0
        %v1508 = vsel %vm1351, %v1349, 0
        %1510 = vmatprep.subr.mxu0 0.0
        %1511 = vmatpush1.xpose.msra.mxu0 %v1508
        %1512 = vmatprep.subr.mxu0 0.0
        %1513 = vmatpush1.xpose.msra.mxu0 0.0
        %1514 = vmatprep.subr.mxu0 0.0
        %1515 = vmatpush1.xpose.msra.mxu0 0.0
        %1516 = vmatprep.subr.mxu0 0.0
        %1517 = vmatpush1.xpose.msra.mxu0 0.0
        %1518 = vmatprep.subr.mxu0 0.0
        %1519 = vmatpush1.xpose.msra.mxu0 0.0
        %1520 = vmatprep.subr.mxu0 0.0
        %1521 = vmatpush1.xpose.msra.mxu0 0.0
        %1522 = vmatprep.subr.mxu0 0.0
        %1523 = vmatpush1.xpose.msra.mxu0 0.0
        %1524 = vmatprep.subr.mxu0 0.0
        %1525 = vmatpush1.xpose.msra.mxu0 0.0
        %1526 = vmatprep.subr.mxu0 0.0
        %1527 = vmatpush1.xpose.msra.mxu0 0.0
        %1528 = vmatprep.subr.mxu0 0.0
        %1529 = vmatpush1.xpose.msra.mxu0 0.0
        %1530 = vmatprep.subr.mxu0 0.0
        %1531 = vmatpush1.xpose.msra.mxu0 0.0
        %1532 = vmatprep.subr.mxu0 0.0
        %1533 = vmatpush1.xpose.msra.mxu0 0.0
        %1534 = vmatprep.subr.mxu0 0.0
        %1535 = vmatpush1.xpose.msra.mxu0 0.0
        %1536 = vmatprep.subr.mxu0 0.0
        %1537 = vmatpush1.xpose.msra.mxu0 0.0
        %1538 = vmatprep.subr.mxu0 0.0
        %1539 = vmatpush1.xpose.msra.mxu0 0.0
        %1540 = vmatprep.subr.mxu0 0.0
        %1541 = vmatpush1.xpose.msra.mxu0 0.0
        %1542 = vmatprep.subr.mxu0 0.0
        %1543 = vmatpush1.xpose.msra.mxu0 0.0
        %1544 = vmatprep.subr.mxu0 0.0
        %1545 = vmatpush1.xpose.msra.mxu0 0.0
        %1546 = vmatprep.subr.mxu0 0.0
        %1547 = vmatpush1.xpose.msra.mxu0 0.0
        %1548 = vmatprep.subr.mxu0 0.0
        %1549 = vmatpush1.xpose.msra.mxu0 0.0
        %1550 = vmatprep.subr.mxu0 0.0
        %1551 = vmatpush1.xpose.msra.mxu0 0.0
        %1552 = vmatprep.subr.mxu0 0.0
        %1553 = vmatpush1.xpose.msra.mxu0 0.0
        %1554 = vmatprep.subr.mxu0 0.0
        %1555 = vmatpush1.xpose.msra.mxu0 0.0
        %1556 = vmatprep.subr.mxu0 0.0
        %1557 = vmatpush1.xpose.msra.mxu0 0.0
        %1558 = vmatprep.subr.mxu0 0.0
        %1559 = vmatpush1.xpose.msra.mxu0 0.0
        %1560 = vmatprep.subr.mxu0 0.0
        %1561 = vmatpush1.xpose.msra.mxu0 0.0
        %1562 = vmatprep.subr.mxu0 0.0
        %1563 = vmatpush1.xpose.msra.mxu0 0.0
        %1564 = vmatprep.subr.mxu0 0.0
        %1565 = vmatpush1.xpose.msra.mxu0 0.0
        %1566 = vmatprep.subr.mxu0 0.0
        %1567 = vmatpush1.xpose.msra.mxu0 0.0
        %1568 = vmatprep.subr.mxu0 0.0
        %1569 = vmatpush1.xpose.msra.mxu0 0.0
        %1570 = vmatprep.subr.mxu0 0.0
        %1571 = vmatpush1.xpose.msra.mxu0 0.0
        %1572 = vmatprep.subr.mxu0 0.0
        %1573 = vmatpush1.xpose.msra.mxu0 0.0
        %1574 = vmatprep.mubr.f32.mxu0 0.0
        %1575 = vmatmul.mubr.f32.gmra.mrb[0].mxu0 %v1505
        %v1576 = vpop.f32.mrb[0].mxu0
        %v1577 = vadd.f32 0.0, %v1576
        %v1578 = vpop.f32.mrb[0].mxu0
        %1579 = vdwg.mxu0
        %v1581 = vsel %vm1351, %v736, 0
        %v1584 = vsel %vm1351, %v1350, 0
        %1586 = vmatprep.subr.mxu0 0.0
        %1587 = vmatpush1.xpose.msra.mxu0 %v1584
        %1588 = vmatprep.subr.mxu0 0.0
        %1589 = vmatpush1.xpose.msra.mxu0 0.0
        %1590 = vmatprep.subr.mxu0 0.0
        %1591 = vmatpush1.xpose.msra.mxu0 0.0
        %1592 = vmatprep.subr.mxu0 0.0
        %1593 = vmatpush1.xpose.msra.mxu0 0.0
        %1594 = vmatprep.subr.mxu0 0.0
        %1595 = vmatpush1.xpose.msra.mxu0 0.0
        %1596 = vmatprep.subr.mxu0 0.0
        %1597 = vmatpush1.xpose.msra.mxu0 0.0
        %1598 = vmatprep.subr.mxu0 0.0
        %1599 = vmatpush1.xpose.msra.mxu0 0.0
        %1600 = vmatprep.subr.mxu0 0.0
        %1601 = vmatpush1.xpose.msra.mxu0 0.0
        %1602 = vmatprep.subr.mxu0 0.0
        %1603 = vmatpush1.xpose.msra.mxu0 0.0
        %1604 = vmatprep.subr.mxu0 0.0
        %1605 = vmatpush1.xpose.msra.mxu0 0.0
        %1606 = vmatprep.subr.mxu0 0.0
        %1607 = vmatpush1.xpose.msra.mxu0 0.0
        %1608 = vmatprep.subr.mxu0 0.0
        %1609 = vmatpush1.xpose.msra.mxu0 0.0
        %1610 = vmatprep.subr.mxu0 0.0
        %1611 = vmatpush1.xpose.msra.mxu0 0.0
        %1612 = vmatprep.subr.mxu0 0.0
        %1613 = vmatpush1.xpose.msra.mxu0 0.0
        %1614 = vmatprep.subr.mxu0 0.0
        %1615 = vmatpush1.xpose.msra.mxu0 0.0
        %1616 = vmatprep.subr.mxu0 0.0
        %1617 = vmatpush1.xpose.msra.mxu0 0.0
        %1618 = vmatprep.subr.mxu0 0.0
        %1619 = vmatpush1.xpose.msra.mxu0 0.0
        %1620 = vmatprep.subr.mxu0 0.0
        %1621 = vmatpush1.xpose.msra.mxu0 0.0
        %1622 = vmatprep.subr.mxu0 0.0
        %1623 = vmatpush1.xpose.msra.mxu0 0.0
        %1624 = vmatprep.subr.mxu0 0.0
        %1625 = vmatpush1.xpose.msra.mxu0 0.0
        %1626 = vmatprep.subr.mxu0 0.0
        %1627 = vmatpush1.xpose.msra.mxu0 0.0
        %1628 = vmatprep.subr.mxu0 0.0
        %1629 = vmatpush1.xpose.msra.mxu0 0.0
        %1630 = vmatprep.subr.mxu0 0.0
        %1631 = vmatpush1.xpose.msra.mxu0 0.0
        %1632 = vmatprep.subr.mxu0 0.0
        %1633 = vmatpush1.xpose.msra.mxu0 0.0
        %1634 = vmatprep.subr.mxu0 0.0
        %1635 = vmatpush1.xpose.msra.mxu0 0.0
        %1636 = vmatprep.subr.mxu0 0.0
        %1637 = vmatpush1.xpose.msra.mxu0 0.0
        %1638 = vmatprep.subr.mxu0 0.0
        %1639 = vmatpush1.xpose.msra.mxu0 0.0
        %1640 = vmatprep.subr.mxu0 0.0
        %1641 = vmatpush1.xpose.msra.mxu0 0.0
        %1642 = vmatprep.subr.mxu0 0.0
        %1643 = vmatpush1.xpose.msra.mxu0 0.0
        %1644 = vmatprep.subr.mxu0 0.0
        %1645 = vmatpush1.xpose.msra.mxu0 0.0
        %1646 = vmatprep.subr.mxu0 0.0
        %1647 = vmatpush1.xpose.msra.mxu0 0.0
        %1648 = vmatprep.subr.mxu0 0.0
        %1649 = vmatpush1.xpose.msra.mxu0 0.0
        %1650 = vmatprep.mubr.f32.mxu0 0.0
        %1651 = vmatmul.mubr.f32.gmra.mrb[0].mxu0 %v1581
        %v1652 = vpop.f32.mrb[0].mxu0
        %v1653 = vadd.f32 0.0, %v1652
        %v1654 = vpop.f32.mrb[0].mxu0
        %1655 = vdwg.mxu0
        %v1656 = vlaneseq
        %v1657 = vshrl.u32 %v1656, 7
        %v1658 = vlaneseq
        %v1659 = vand.u32 %v1658, 127
        %1664 = vrot.lane.b32.xlu0 %v1425, 121
        %v1665 = vpop.permute.xlu0 %1664
        %1666 = vrot.lane.b32.xlu0 %v1501, 121
        %v1667 = vpop.permute.xlu0 %1666
        %1668 = vrot.lane.b32.xlu0 %v1577, 121
        %v1669 = vpop.permute.xlu0 %1668
        %1670 = vrot.lane.b32.xlu0 %v1653, 121
        %v1671 = vpop.permute.xlu0 %1670
        %1676 = vrot.lane.b32.xlu0 %v1425, 1
        %v1677 = vpop.permute.xlu0 %1676
        %1678 = vrot.lane.b32.xlu0 %v1501, 1
        %v1679 = vpop.permute.xlu0 %1678
        %1680 = vrot.lane.b32.xlu0 %v1577, 1
        %v1681 = vpop.permute.xlu0 %1680
        %1682 = vrot.lane.b32.xlu0 %v1653, 1
        %v1683 = vpop.permute.xlu0 %1682
        %vm1688 = vcmask 7168
        %v1689 = vsel %vm1688, %v1665, %v1677
        %v1690 = vsel %vm1688, %v1667, %v1679
        %v1691 = vsel %vm1688, %v1669, %v1681
        %v1692 = vsel %vm1688, %v1671, %v1683
        %v1693 = vand.u32 %v1657, 1
        %vm1694 = vcmp.gt.s32.totalorder %v1693, 0
        %1699 = vrot.lane.b32.xlu0 %v1689, 121
        %v1700 = vpop.permute.xlu0 %1699
        %1701 = vrot.lane.b32.xlu0 %v1690, 121
        %v1702 = vpop.permute.xlu0 %1701
        %1703 = vrot.lane.b32.xlu0 %v1691, 121
        %v1704 = vpop.permute.xlu0 %1703
        %1705 = vrot.lane.b32.xlu0 %v1692, 121
        %v1706 = vpop.permute.xlu0 %1705
        %1711 = vrot.lane.b32.xlu0 %v1689, 1
        %v1712 = vpop.permute.xlu0 %1711
        %1713 = vrot.lane.b32.xlu0 %v1690, 1
        %v1714 = vpop.permute.xlu0 %1713
        %1715 = vrot.lane.b32.xlu0 %v1691, 1
        %v1716 = vpop.permute.xlu0 %1715
        %1717 = vrot.lane.b32.xlu0 %v1692, 1
        %v1718 = vpop.permute.xlu0 %1717
        %v1723 = vsel %vm1688, %v1700, %v1712
        %v1724 = vsel %vm1688, %v1702, %v1714
        %v1725 = vsel %vm1688, %v1704, %v1716
        %v1726 = vsel %vm1688, %v1706, %v1718
        %v1727 = vsel %vm1694, 1, 0
        %vm1728 = vcmp.eq.s32.totalorder %v1727, 1
        %v1729 = vsel %vm1728, %v1723, %v1689
        %v1730 = vsel %vm1728, %v1724, %v1690
        %v1731 = vsel %vm1728, %v1725, %v1691
        %v1732 = vsel %vm1728, %v1726, %v1692
        %v1733 = vand.u32 %v1657, 2
        %vm1734 = vcmp.gt.s32.totalorder %v1733, 0
        %1739 = vrot.lane.b32.xlu0 %v1729, 122
        %v1740 = vpop.permute.xlu0 %1739
        %1741 = vrot.lane.b32.xlu0 %v1730, 122
        %v1742 = vpop.permute.xlu0 %1741
        %1743 = vrot.lane.b32.xlu0 %v1731, 122
        %v1744 = vpop.permute.xlu0 %1743
        %1745 = vrot.lane.b32.xlu0 %v1732, 122
        %v1746 = vpop.permute.xlu0 %1745
        %1751 = vrot.lane.b32.xlu0 %v1729, 2
        %v1752 = vpop.permute.xlu0 %1751
        %1753 = vrot.lane.b32.xlu0 %v1730, 2
        %v1754 = vpop.permute.xlu0 %1753
        %1755 = vrot.lane.b32.xlu0 %v1731, 2
        %v1756 = vpop.permute.xlu0 %1755
        %1757 = vrot.lane.b32.xlu0 %v1732, 2
        %v1758 = vpop.permute.xlu0 %1757
        %vm1763 = vcmask 15360
        %v1764 = vsel %vm1763, %v1740, %v1752
        %v1765 = vsel %vm1763, %v1742, %v1754
        %v1766 = vsel %vm1763, %v1744, %v1756
        %v1767 = vsel %vm1763, %v1746, %v1758
        %v1768 = vsel %vm1734, 1, 0
        %vm1769 = vcmp.eq.s32.totalorder %v1768, 1
        %v1770 = vsel %vm1769, %v1764, %v1729
        %v1771 = vsel %vm1769, %v1765, %v1730
        %v1772 = vsel %vm1769, %v1766, %v1731
        %v1773 = vsel %vm1769, %v1767, %v1732
        %v1774 = vand.u32 %v1657, 4
        %vm1775 = vcmp.gt.s32.totalorder %v1774, 0
        %1780 = vrot.lane.b32.xlu0 %v1770, 124
        %v1781 = vpop.permute.xlu0 %1780
        %1782 = vrot.lane.b32.xlu0 %v1771, 124
        %v1783 = vpop.permute.xlu0 %1782
        %1784 = vrot.lane.b32.xlu0 %v1772, 124
        %v1785 = vpop.permute.xlu0 %1784
        %1786 = vrot.lane.b32.xlu0 %v1773, 124
        %v1787 = vpop.permute.xlu0 %1786
        %1792 = vrot.lane.b32.xlu0 %v1770, 4
        %v1793 = vpop.permute.xlu0 %1792
        %1794 = vrot.lane.b32.xlu0 %v1771, 4
        %v1795 = vpop.permute.xlu0 %1794
        %1796 = vrot.lane.b32.xlu0 %v1772, 4
        %v1797 = vpop.permute.xlu0 %1796
        %1798 = vrot.lane.b32.xlu0 %v1773, 4
        %v1799 = vpop.permute.xlu0 %1798
        %vm1804 = vcmask 31744
        %v1805 = vsel %vm1804, %v1781, %v1793
        %v1806 = vsel %vm1804, %v1783, %v1795
        %v1807 = vsel %vm1804, %v1785, %v1797
        %v1808 = vsel %vm1804, %v1787, %v1799
        %v1809 = vsel %vm1775, 1, 0
        %vm1810 = vcmp.eq.s32.totalorder %v1809, 1
        %v1811 = vsel %vm1810, %v1805, %v1770
        %v1812 = vsel %vm1810, %v1806, %v1771
        %v1813 = vsel %vm1810, %v1807, %v1772
        %v1814 = vsel %vm1810, %v1808, %v1773
        %v1819 = vrot.slane %v1811, 1
        %v1820 = vrot.slane %v1812, 1
        %v1821 = vrot.slane %v1813, 1
        %v1822 = vrot.slane %v1814, 1
        %vm1827 = vcmask 1046528
        %v1828 = vsel %vm1827, %v1819, %v1819
        %v1829 = vsel %vm1827, %v1820, %v1820
        %v1830 = vsel %vm1827, %v1821, %v1821
        %v1831 = vsel %vm1827, %v1822, %v1822
        %vm1832 = vcmp.le.s32.totalorder %v1659, %v1657
        %v1833 = vadd.s32 %v1657, 1
        %vm1834 = vcmp.eq.s32.totalorder %v1659, %v1833
        %v1835 = vsel %vm1834, 1, 0
        %vm1836 = vcmp.eq.s32.totalorder %v1835, 1
        %v1837 = vsel %vm1836, 0.0, %v1828
        %v1838 = vsel %vm1836, 0.0, %v1829
        %v1839 = vsel %vm1836, 0.0, %v1830
        %v1840 = vsel %vm1836, 0.0, %v1831
        %v1841 = vsel %vm1832, 1, 0
        %vm1842 = vcmp.eq.s32.totalorder %v1841, 1
        %v1843 = vsel %vm1842, %v1811, %v1837
        %v1844 = vsel %vm1842, %v1812, %v1838
        %v1845 = vsel %vm1842, %v1813, %v1839
        %v1846 = vsel %vm1842, %v1814, %v1840
        %v1847 = vld [vmem:[%s344] sm:$0xff]
        %v1849 = vsel %vm1351, %v830, 0
        %1851 = vmatprep.subr.mxu0 0.0
        %1852 = vmatpush1.xpose.msra.mxu0 %v1849
        %1853 = vmatprep.subr.mxu0 0.0
        %1854 = vmatpush1.xpose.msra.mxu0 0.0
        %1855 = vmatprep.subr.mxu0 0.0
        %1856 = vmatpush1.xpose.msra.mxu0 0.0
        %1857 = vmatprep.subr.mxu0 0.0
        %1858 = vmatpush1.xpose.msra.mxu0 0.0
        %1859 = vmatprep.subr.mxu0 0.0
        %1860 = vmatpush1.xpose.msra.mxu0 0.0
        %1861 = vmatprep.subr.mxu0 0.0
        %1862 = vmatpush1.xpose.msra.mxu0 0.0
        %1863 = vmatprep.subr.mxu0 0.0
        %1864 = vmatpush1.xpose.msra.mxu0 0.0
        %1865 = vmatprep.subr.mxu0 0.0
        %1866 = vmatpush1.xpose.msra.mxu0 0.0
        %1867 = vmatprep.subr.mxu0 0.0
        %1868 = vmatpush1.xpose.msra.mxu0 0.0
        %1869 = vmatprep.subr.mxu0 0.0
        %1870 = vmatpush1.xpose.msra.mxu0 0.0
        %1871 = vmatprep.subr.mxu0 0.0
        %1872 = vmatpush1.xpose.msra.mxu0 0.0
        %1873 = vmatprep.subr.mxu0 0.0
        %1874 = vmatpush1.xpose.msra.mxu0 0.0
        %1875 = vmatprep.subr.mxu0 0.0
        %1876 = vmatpush1.xpose.msra.mxu0 0.0
        %1877 = vmatprep.subr.mxu0 0.0
        %1878 = vmatpush1.xpose.msra.mxu0 0.0
        %1879 = vmatprep.subr.mxu0 0.0
        %1880 = vmatpush1.xpose.msra.mxu0 0.0
        %1881 = vmatprep.subr.mxu0 0.0
        %1882 = vmatpush1.xpose.msra.mxu0 0.0
        %1883 = vmatprep.subr.mxu0 0.0
        %1884 = vmatpush1.xpose.msra.mxu0 0.0
        %1885 = vmatprep.subr.mxu0 0.0
        %1886 = vmatpush1.xpose.msra.mxu0 0.0
        %1887 = vmatprep.subr.mxu0 0.0
        %1888 = vmatpush1.xpose.msra.mxu0 0.0
        %1889 = vmatprep.subr.mxu0 0.0
        %1890 = vmatpush1.xpose.msra.mxu0 0.0
        %1891 = vmatprep.subr.mxu0 0.0
        %1892 = vmatpush1.xpose.msra.mxu0 0.0
        %1893 = vmatprep.subr.mxu0 0.0
        %1894 = vmatpush1.xpose.msra.mxu0 0.0
        %1895 = vmatprep.subr.mxu0 0.0
        %1896 = vmatpush1.xpose.msra.mxu0 0.0
        %1897 = vmatprep.subr.mxu0 0.0
        %1898 = vmatpush1.xpose.msra.mxu0 0.0
        %1899 = vmatprep.subr.mxu0 0.0
        %1900 = vmatpush1.xpose.msra.mxu0 0.0
        %1901 = vmatprep.subr.mxu0 0.0
        %1902 = vmatpush1.xpose.msra.mxu0 0.0
        %1903 = vmatprep.subr.mxu0 0.0
        %1904 = vmatpush1.xpose.msra.mxu0 0.0
        %1905 = vmatprep.subr.mxu0 0.0
        %1906 = vmatpush1.xpose.msra.mxu0 0.0
        %1907 = vmatprep.subr.mxu0 0.0
        %1908 = vmatpush1.xpose.msra.mxu0 0.0
        %1909 = vmatprep.subr.mxu0 0.0
        %1910 = vmatpush1.xpose.msra.mxu0 0.0
        %1911 = vmatprep.subr.mxu0 0.0
        %1912 = vmatpush1.xpose.msra.mxu0 0.0
        %1913 = vmatprep.subr.mxu0 0.0
        %1914 = vmatpush1.xpose.msra.mxu0 0.0
        %1915 = vmatprep.mubr.f32.mxu0 0.0
        %1916 = vmatmul.mubr.f32.gmra.mrb[0].mxu0 %v1353
        %v1917 = vpop.f32.mrb[0].mxu0
        %v1918 = vadd.f32 %v1843, %v1917
        %v1919 = vpop.f32.mrb[0].mxu0
        %1920 = vdwg.mxu0
        %v1922 = vsel %vm1351, %v900, 0
        %1924 = vmatprep.subr.mxu0 0.0
        %1925 = vmatpush1.xpose.msra.mxu0 %v1922
        %1926 = vmatprep.subr.mxu0 0.0
        %1927 = vmatpush1.xpose.msra.mxu0 0.0
        %1928 = vmatprep.subr.mxu0 0.0
        %1929 = vmatpush1.xpose.msra.mxu0 0.0
        %1930 = vmatprep.subr.mxu0 0.0
        %1931 = vmatpush1.xpose.msra.mxu0 0.0
        %1932 = vmatprep.subr.mxu0 0.0
        %1933 = vmatpush1.xpose.msra.mxu0 0.0
        %1934 = vmatprep.subr.mxu0 0.0
        %1935 = vmatpush1.xpose.msra.mxu0 0.0
        %1936 = vmatprep.subr.mxu0 0.0
        %1937 = vmatpush1.xpose.msra.mxu0 0.0
        %1938 = vmatprep.subr.mxu0 0.0
        %1939 = vmatpush1.xpose.msra.mxu0 0.0
        %1940 = vmatprep.subr.mxu0 0.0
        %1941 = vmatpush1.xpose.msra.mxu0 0.0
        %1942 = vmatprep.subr.mxu0 0.0
        %1943 = vmatpush1.xpose.msra.mxu0 0.0
        %1944 = vmatprep.subr.mxu0 0.0
        %1945 = vmatpush1.xpose.msra.mxu0 0.0
        %1946 = vmatprep.subr.mxu0 0.0
        %1947 = vmatpush1.xpose.msra.mxu0 0.0
        %1948 = vmatprep.subr.mxu0 0.0
        %1949 = vmatpush1.xpose.msra.mxu0 0.0
        %1950 = vmatprep.subr.mxu0 0.0
        %1951 = vmatpush1.xpose.msra.mxu0 0.0
        %1952 = vmatprep.subr.mxu0 0.0
        %1953 = vmatpush1.xpose.msra.mxu0 0.0
        %1954 = vmatprep.subr.mxu0 0.0
        %1955 = vmatpush1.xpose.msra.mxu0 0.0
        %1956 = vmatprep.subr.mxu0 0.0
        %1957 = vmatpush1.xpose.msra.mxu0 0.0
        %1958 = vmatprep.subr.mxu0 0.0
        %1959 = vmatpush1.xpose.msra.mxu0 0.0
        %1960 = vmatprep.subr.mxu0 0.0
        %1961 = vmatpush1.xpose.msra.mxu0 0.0
        %1962 = vmatprep.subr.mxu0 0.0
        %1963 = vmatpush1.xpose.msra.mxu0 0.0
        %1964 = vmatprep.subr.mxu0 0.0
        %1965 = vmatpush1.xpose.msra.mxu0 0.0
        %1966 = vmatprep.subr.mxu0 0.0
        %1967 = vmatpush1.xpose.msra.mxu0 0.0
        %1968 = vmatprep.subr.mxu0 0.0
        %1969 = vmatpush1.xpose.msra.mxu0 0.0
        %1970 = vmatprep.subr.mxu0 0.0
        %1971 = vmatpush1.xpose.msra.mxu0 0.0
        %1972 = vmatprep.subr.mxu0 0.0
        %1973 = vmatpush1.xpose.msra.mxu0 0.0
        %1974 = vmatprep.subr.mxu0 0.0
        %1975 = vmatpush1.xpose.msra.mxu0 0.0
        %1976 = vmatprep.subr.mxu0 0.0
        %1977 = vmatpush1.xpose.msra.mxu0 0.0
        %1978 = vmatprep.subr.mxu0 0.0
        %1979 = vmatpush1.xpose.msra.mxu0 0.0
        %1980 = vmatprep.subr.mxu0 0.0
        %1981 = vmatpush1.xpose.msra.mxu0 0.0
        %1982 = vmatprep.subr.mxu0 0.0
        %1983 = vmatpush1.xpose.msra.mxu0 0.0
        %1984 = vmatprep.subr.mxu0 0.0
        %1985 = vmatpush1.xpose.msra.mxu0 0.0
        %1986 = vmatprep.subr.mxu0 0.0
        %1987 = vmatpush1.xpose.msra.mxu0 0.0
        %1988 = vmatprep.mubr.f32.mxu0 0.0
        %1989 = vmatmul.mubr.f32.gmra.mrb[0].mxu0 %v1429
        %v1990 = vpop.f32.mrb[0].mxu0
        %v1991 = vadd.f32 %v1844, %v1990
        %v1992 = vpop.f32.mrb[0].mxu0
        %1993 = vdwg.mxu0
        %v1995 = vsel %vm1351, %v970, 0
        %1997 = vmatprep.subr.mxu0 0.0
        %1998 = vmatpush1.xpose.msra.mxu0 %v1995
        %1999 = vmatprep.subr.mxu0 0.0
        %2000 = vmatpush1.xpose.msra.mxu0 0.0
        %2001 = vmatprep.subr.mxu0 0.0
        %2002 = vmatpush1.xpose.msra.mxu0 0.0
        %2003 = vmatprep.subr.mxu0 0.0
        %2004 = vmatpush1.xpose.msra.mxu0 0.0
        %2005 = vmatprep.subr.mxu0 0.0
        %2006 = vmatpush1.xpose.msra.mxu0 0.0
        %2007 = vmatprep.subr.mxu0 0.0
        %2008 = vmatpush1.xpose.msra.mxu0 0.0
        %2009 = vmatprep.subr.mxu0 0.0
        %2010 = vmatpush1.xpose.msra.mxu0 0.0
        %2011 = vmatprep.subr.mxu0 0.0
        %2012 = vmatpush1.xpose.msra.mxu0 0.0
        %2013 = vmatprep.subr.mxu0 0.0
        %2014 = vmatpush1.xpose.msra.mxu0 0.0
        %2015 = vmatprep.subr.mxu0 0.0
        %2016 = vmatpush1.xpose.msra.mxu0 0.0
        %2017 = vmatprep.subr.mxu0 0.0
        %2018 = vmatpush1.xpose.msra.mxu0 0.0
        %2019 = vmatprep.subr.mxu0 0.0
        %2020 = vmatpush1.xpose.msra.mxu0 0.0
        %2021 = vmatprep.subr.mxu0 0.0
        %2022 = vmatpush1.xpose.msra.mxu0 0.0
        %2023 = vmatprep.subr.mxu0 0.0
        %2024 = vmatpush1.xpose.msra.mxu0 0.0
        %2025 = vmatprep.subr.mxu0 0.0
        %2026 = vmatpush1.xpose.msra.mxu0 0.0
        %2027 = vmatprep.subr.mxu0 0.0
        %2028 = vmatpush1.xpose.msra.mxu0 0.0
        %2029 = vmatprep.subr.mxu0 0.0
        %2030 = vmatpush1.xpose.msra.mxu0 0.0
        %2031 = vmatprep.subr.mxu0 0.0
        %2032 = vmatpush1.xpose.msra.mxu0 0.0
        %2033 = vmatprep.subr.mxu0 0.0
        %2034 = vmatpush1.xpose.msra.mxu0 0.0
        %2035 = vmatprep.subr.mxu0 0.0
        %2036 = vmatpush1.xpose.msra.mxu0 0.0
        %2037 = vmatprep.subr.mxu0 0.0
        %2038 = vmatpush1.xpose.msra.mxu0 0.0
        %2039 = vmatprep.subr.mxu0 0.0
        %2040 = vmatpush1.xpose.msra.mxu0 0.0
        %2041 = vmatprep.subr.mxu0 0.0
        %2042 = vmatpush1.xpose.msra.mxu0 0.0
        %2043 = vmatprep.subr.mxu0 0.0
        %2044 = vmatpush1.xpose.msra.mxu0 0.0
        %2045 = vmatprep.subr.mxu0 0.0
        %2046 = vmatpush1.xpose.msra.mxu0 0.0
        %2047 = vmatprep.subr.mxu0 0.0
        %2048 = vmatpush1.xpose.msra.mxu0 0.0
        %2049 = vmatprep.subr.mxu0 0.0
        %2050 = vmatpush1.xpose.msra.mxu0 0.0
        %2051 = vmatprep.subr.mxu0 0.0
        %2052 = vmatpush1.xpose.msra.mxu0 0.0
        %2053 = vmatprep.subr.mxu0 0.0
        %2054 = vmatpush1.xpose.msra.mxu0 0.0
        %2055 = vmatprep.subr.mxu0 0.0
        %2056 = vmatpush1.xpose.msra.mxu0 0.0
        %2057 = vmatprep.subr.mxu0 0.0
        %2058 = vmatpush1.xpose.msra.mxu0 0.0
        %2059 = vmatprep.subr.mxu0 0.0
        %2060 = vmatpush1.xpose.msra.mxu0 0.0
        %2061 = vmatprep.mubr.f32.mxu0 0.0
        %2062 = vmatmul.mubr.f32.gmra.mrb[0].mxu0 %v1505
        %v2063 = vpop.f32.mrb[0].mxu0
        %v2064 = vadd.f32 %v1845, %v2063
        %v2065 = vpop.f32.mrb[0].mxu0
        %2066 = vdwg.mxu0
        %v2068 = vsel %vm1351, %v1040, 0
        %2070 = vmatprep.subr.mxu0 0.0
        %2071 = vmatpush1.xpose.msra.mxu0 %v2068
        %2072 = vmatprep.subr.mxu0 0.0
        %2073 = vmatpush1.xpose.msra.mxu0 0.0
        %2074 = vmatprep.subr.mxu0 0.0
        %2075 = vmatpush1.xpose.msra.mxu0 0.0
        %2076 = vmatprep.subr.mxu0 0.0
        %2077 = vmatpush1.xpose.msra.mxu0 0.0
        %2078 = vmatprep.subr.mxu0 0.0
        %2079 = vmatpush1.xpose.msra.mxu0 0.0
        %2080 = vmatprep.subr.mxu0 0.0
        %2081 = vmatpush1.xpose.msra.mxu0 0.0
        %2082 = vmatprep.subr.mxu0 0.0
        %2083 = vmatpush1.xpose.msra.mxu0 0.0
        %2084 = vmatprep.subr.mxu0 0.0
        %2085 = vmatpush1.xpose.msra.mxu0 0.0
        %2086 = vmatprep.subr.mxu0 0.0
        %2087 = vmatpush1.xpose.msra.mxu0 0.0
        %2088 = vmatprep.subr.mxu0 0.0
        %2089 = vmatpush1.xpose.msra.mxu0 0.0
        %2090 = vmatprep.subr.mxu0 0.0
        %2091 = vmatpush1.xpose.msra.mxu0 0.0
        %2092 = vmatprep.subr.mxu0 0.0
        %2093 = vmatpush1.xpose.msra.mxu0 0.0
        %2094 = vmatprep.subr.mxu0 0.0
        %2095 = vmatpush1.xpose.msra.mxu0 0.0
        %2096 = vmatprep.subr.mxu0 0.0
        %2097 = vmatpush1.xpose.msra.mxu0 0.0
        %2098 = vmatprep.subr.mxu0 0.0
        %2099 = vmatpush1.xpose.msra.mxu0 0.0
        %2100 = vmatprep.subr.mxu0 0.0
        %2101 = vmatpush1.xpose.msra.mxu0 0.0
        %2102 = vmatprep.subr.mxu0 0.0
        %2103 = vmatpush1.xpose.msra.mxu0 0.0
        %2104 = vmatprep.subr.mxu0 0.0
        %2105 = vmatpush1.xpose.msra.mxu0 0.0
        %2106 = vmatprep.subr.mxu0 0.0
        %2107 = vmatpush1.xpose.msra.mxu0 0.0
        %2108 = vmatprep.subr.mxu0 0.0
        %2109 = vmatpush1.xpose.msra.mxu0 0.0
        %2110 = vmatprep.subr.mxu0 0.0
        %2111 = vmatpush1.xpose.msra.mxu0 0.0
        %2112 = vmatprep.subr.mxu0 0.0
        %2113 = vmatpush1.xpose.msra.mxu0 0.0
        %2114 = vmatprep.subr.mxu0 0.0
        %2115 = vmatpush1.xpose.msra.mxu0 0.0
        %2116 = vmatprep.subr.mxu0 0.0
        %2117 = vmatpush1.xpose.msra.mxu0 0.0
        %2118 = vmatprep.subr.mxu0 0.0
        %2119 = vmatpush1.xpose.msra.mxu0 0.0
        %2120 = vmatprep.subr.mxu0 0.0
        %2121 = vmatpush1.xpose.msra.mxu0 0.0
        %2122 = vmatprep.subr.mxu0 0.0
        %2123 = vmatpush1.xpose.msra.mxu0 0.0
        %2124 = vmatprep.subr.mxu0 0.0
        %2125 = vmatpush1.xpose.msra.mxu0 0.0
        %2126 = vmatprep.subr.mxu0 0.0
        %2127 = vmatpush1.xpose.msra.mxu0 0.0
        %2128 = vmatprep.subr.mxu0 0.0
        %2129 = vmatpush1.xpose.msra.mxu0 0.0
        %2130 = vmatprep.subr.mxu0 0.0
        %2131 = vmatpush1.xpose.msra.mxu0 0.0
        %2132 = vmatprep.subr.mxu0 0.0
        %2133 = vmatpush1.xpose.msra.mxu0 0.0
        %2134 = vmatprep.mubr.f32.mxu0 0.0
        %2135 = vmatmul.mubr.f32.gmra.mrb[0].mxu0 %v1581
        %v2136 = vpop.f32.mrb[0].mxu0
        %v2137 = vadd.f32 %v1846, %v2136
        %v2138 = vpop.f32.mrb[0].mxu0
        %2139 = vdwg.mxu0
        %v2140 = vmul.f32 %v1918, 0.35355338
        %v2141 = vmul.f32 %v1991, 0.35355338
        %v2142 = vmul.f32 %v2064, 0.35355338
        %v2143 = vmul.f32 %v2137, 0.35355338
        %v2144 = vmul.f32 %v1847, -1e+09
        %v2145 = vadd.f32 %v2140, %v2144
        %v2146 = vadd.f32 %v2141, %v2144
        %v2147 = vadd.f32 %v2142, %v2144
        %v2148 = vadd.f32 %v2143, %v2144
        %v2149 = vsel %vm1351, %v2145, -inf
        %2150 = vmax.xlane.f32.xlu0 %v2149
        %v2151 = vpop.xlane.xlu0 %2150
        %v2152 = vsel %vm1351, %v2146, -inf
        %2153 = vmax.xlane.f32.xlu0 %v2152
        %v2154 = vpop.xlane.xlu0 %2153
        %v2155 = vsel %vm1351, %v2147, -inf
        %2156 = vmax.xlane.f32.xlu0 %v2155
        %v2157 = vpop.xlane.xlu0 %2156
        %v2158 = vsel %vm1351, %v2148, -inf
        %2159 = vmax.xlane.f32.xlu0 %v2158
        %v2160 = vpop.xlane.xlu0 %2159
        %v2161 = vsub.f32 %v2145, %v2151
        %v2162 = vsub.f32 %v2146, %v2154
        %v2163 = vsub.f32 %v2147, %v2157
        %v2164 = vsub.f32 %v2148, %v2160
        %v2165 = vmul.f32 %v2161, 1.442695
        %v2166 = vpow.pop %v2165
        %v2167 = vmul.f32 %v2162, 1.442695
        %v2168 = vpow.pop %v2167
        %v2169 = vmul.f32 %v2163, 1.442695
        %v2170 = vpow.pop %v2169
        %v2171 = vmul.f32 %v2164, 1.442695
        %v2172 = vpow.pop %v2171
        %v2173 = vsel %vm1351, %v2166, 0.0
        %2174 = vadd.xlane.f32.xlu0 %v2173
        %v2175 = vpop.xlane.xlu0 %2174
        %v2176 = vsel %vm1351, %v2168, 0.0
        %2177 = vadd.xlane.f32.xlu0 %v2176
        %v2178 = vpop.xlane.xlu0 %2177
        %v2179 = vsel %vm1351, %v2170, 0.0
        %2180 = vadd.xlane.f32.xlu0 %v2179
        %v2181 = vpop.xlane.xlu0 %2180
        %v2182 = vsel %vm1351, %v2172, 0.0
        %2183 = vadd.xlane.f32.xlu0 %v2182
        %v2184 = vpop.xlane.xlu0 %2183
        %v2185 = vrcp.pop %v2175
        %v2186 = vrcp.pop %v2178
        %v2187 = vrcp.pop %v2181
        %v2188 = vrcp.pop %v2184
        %v2189 = vmul.f32 %v2166, %v2185
        %v2190 = vmul.f32 %v2168, %v2186
        %v2191 = vmul.f32 %v2170, %v2187
        %v2192 = vmul.f32 %v2172, %v2188
        %v2194 = vsel %vm1351, %v2189, 0
        %2196 = vmatprep.subr.mxu0 0.0
        %2197 = vmatpush1.msra.mxu0 %v1134
        %2198 = vmatprep.subr.mxu0 0.0
        %2199 = vmatpush1.msra.mxu0 0.0
        %2200 = vmatprep.subr.mxu0 0.0
        %2201 = vmatpush1.msra.mxu0 0.0
        %2202 = vmatprep.subr.mxu0 0.0
        %2203 = vmatpush1.msra.mxu0 0.0
        %2204 = vmatprep.subr.mxu0 0.0
        %2205 = vmatpush1.msra.mxu0 0.0
        %2206 = vmatprep.subr.mxu0 0.0
        %2207 = vmatpush1.msra.mxu0 0.0
        %2208 = vmatprep.subr.mxu0 0.0
        %2209 = vmatpush1.msra.mxu0 0.0
        %2210 = vmatprep.subr.mxu0 0.0
        %2211 = vmatpush1.msra.mxu0 0.0
        %2212 = vmatprep.subr.mxu0 0.0
        %2213 = vmatpush1.msra.mxu0 0.0
        %2214 = vmatprep.subr.mxu0 0.0
        %2215 = vmatpush1.msra.mxu0 0.0
        %2216 = vmatprep.subr.mxu0 0.0
        %2217 = vmatpush1.msra.mxu0 0.0
        %2218 = vmatprep.subr.mxu0 0.0
        %2219 = vmatpush1.msra.mxu0 0.0
        %2220 = vmatprep.subr.mxu0 0.0
        %2221 = vmatpush1.msra.mxu0 0.0
        %2222 = vmatprep.subr.mxu0 0.0
        %2223 = vmatpush1.msra.mxu0 0.0
        %2224 = vmatprep.subr.mxu0 0.0
        %2225 = vmatpush1.msra.mxu0 0.0
        %2226 = vmatprep.subr.mxu0 0.0
        %2227 = vmatpush1.msra.mxu0 0.0
        %2228 = vmatprep.subr.mxu0 0.0
        %2229 = vmatpush1.msra.mxu0 0.0
        %2230 = vmatprep.subr.mxu0 0.0
        %2231 = vmatpush1.msra.mxu0 0.0
        %2232 = vmatprep.subr.mxu0 0.0
        %2233 = vmatpush1.msra.mxu0 0.0
        %2234 = vmatprep.subr.mxu0 0.0
        %2235 = vmatpush1.msra.mxu0 0.0
        %2236 = vmatprep.subr.mxu0 0.0
        %2237 = vmatpush1.msra.mxu0 0.0
        %2238 = vmatprep.subr.mxu0 0.0
        %2239 = vmatpush1.msra.mxu0 0.0
        %2240 = vmatprep.subr.mxu0 0.0
        %2241 = vmatpush1.msra.mxu0 0.0
        %2242 = vmatprep.subr.mxu0 0.0
        %2243 = vmatpush1.msra.mxu0 0.0
        %2244 = vmatprep.subr.mxu0 0.0
        %2245 = vmatpush1.msra.mxu0 0.0
        %2246 = vmatprep.subr.mxu0 0.0
        %2247 = vmatpush1.msra.mxu0 0.0
        %2248 = vmatprep.subr.mxu0 0.0
        %2249 = vmatpush1.msra.mxu0 0.0
        %2250 = vmatprep.subr.mxu0 0.0
        %2251 = vmatpush1.msra.mxu0 0.0
        %2252 = vmatprep.subr.mxu0 0.0
        %2253 = vmatpush1.msra.mxu0 0.0
        %2254 = vmatprep.subr.mxu0 0.0
        %2255 = vmatpush1.msra.mxu0 0.0
        %2256 = vmatprep.subr.mxu0 0.0
        %2257 = vmatpush1.msra.mxu0 0.0
        %2258 = vmatprep.subr.mxu0 0.0
        %2259 = vmatpush1.msra.mxu0 0.0
        %2260 = vmatprep.mubr.f32.mxu0 0.0
        %2261 = vmatmul.mubr.f32.gmra.mrb[0].mxu0 %v2194
        %v2262 = vpop.f32.mrb[0].mxu0
        %v2263 = vadd.f32 0.0, %v2262
        %v2264 = vpop.f32.mrb[0].mxu0
        %2265 = vdwg.mxu0
        %v2267 = vsel %vm1351, %v2190, 0
        %2269 = vmatprep.subr.mxu0 0.0
        %2270 = vmatpush1.msra.mxu0 %v1204
        %2271 = vmatprep.subr.mxu0 0.0
        %2272 = vmatpush1.msra.mxu0 0.0
        %2273 = vmatprep.subr.mxu0 0.0
        %2274 = vmatpush1.msra.mxu0 0.0
        %2275 = vmatprep.subr.mxu0 0.0
        %2276 = vmatpush1.msra.mxu0 0.0
        %2277 = vmatprep.subr.mxu0 0.0
        %2278 = vmatpush1.msra.mxu0 0.0
        %2279 = vmatprep.subr.mxu0 0.0
        %2280 = vmatpush1.msra.mxu0 0.0
        %2281 = vmatprep.subr.mxu0 0.0
        %2282 = vmatpush1.msra.mxu0 0.0
        %2283 = vmatprep.subr.mxu0 0.0
        %2284 = vmatpush1.msra.mxu0 0.0
        %2285 = vmatprep.subr.mxu0 0.0
        %2286 = vmatpush1.msra.mxu0 0.0
        %2287 = vmatprep.subr.mxu0 0.0
        %2288 = vmatpush1.msra.mxu0 0.0
        %2289 = vmatprep.subr.mxu0 0.0
        %2290 = vmatpush1.msra.mxu0 0.0
        %2291 = vmatprep.subr.mxu0 0.0
        %2292 = vmatpush1.msra.mxu0 0.0
        %2293 = vmatprep.subr.mxu0 0.0
        %2294 = vmatpush1.msra.mxu0 0.0
        %2295 = vmatprep.subr.mxu0 0.0
        %2296 = vmatpush1.msra.mxu0 0.0
        %2297 = vmatprep.subr.mxu0 0.0
        %2298 = vmatpush1.msra.mxu0 0.0
        %2299 = vmatprep.subr.mxu0 0.0
        %2300 = vmatpush1.msra.mxu0 0.0
        %2301 = vmatprep.subr.mxu0 0.0
        %2302 = vmatpush1.msra.mxu0 0.0
        %2303 = vmatprep.subr.mxu0 0.0
        %2304 = vmatpush1.msra.mxu0 0.0
        %2305 = vmatprep.subr.mxu0 0.0
        %2306 = vmatpush1.msra.mxu0 0.0
        %2307 = vmatprep.subr.mxu0 0.0
        %2308 = vmatpush1.msra.mxu0 0.0
        %2309 = vmatprep.subr.mxu0 0.0
        %2310 = vmatpush1.msra.mxu0 0.0
        %2311 = vmatprep.subr.mxu0 0.0
        %2312 = vmatpush1.msra.mxu0 0.0
        %2313 = vmatprep.subr.mxu0 0.0
        %2314 = vmatpush1.msra.mxu0 0.0
        %2315 = vmatprep.subr.mxu0 0.0
        %2316 = vmatpush1.msra.mxu0 0.0
        %2317 = vmatprep.subr.mxu0 0.0
        %2318 = vmatpush1.msra.mxu0 0.0
        %2319 = vmatprep.subr.mxu0 0.0
        %2320 = vmatpush1.msra.mxu0 0.0
        %2321 = vmatprep.subr.mxu0 0.0
        %2322 = vmatpush1.msra.mxu0 0.0
        %2323 = vmatprep.subr.mxu0 0.0
        %2324 = vmatpush1.msra.mxu0 0.0
        %2325 = vmatprep.subr.mxu0 0.0
        %2326 = vmatpush1.msra.mxu0 0.0
        %2327 = vmatprep.subr.mxu0 0.0
        %2328 = vmatpush1.msra.mxu0 0.0
        %2329 = vmatprep.subr.mxu0 0.0
        %2330 = vmatpush1.msra.mxu0 0.0
        %2331 = vmatprep.subr.mxu0 0.0
        %2332 = vmatpush1.msra.mxu0 0.0
        %2333 = vmatprep.mubr.f32.mxu0 0.0
        %2334 = vmatmul.mubr.f32.gmra.mrb[0].mxu0 %v2267
        %v2335 = vpop.f32.mrb[0].mxu0
        %v2336 = vadd.f32 0.0, %v2335
        %v2337 = vpop.f32.mrb[0].mxu0
        %2338 = vdwg.mxu0
        %v2340 = vsel %vm1351, %v2191, 0
        %2342 = vmatprep.subr.mxu0 0.0
        %2343 = vmatpush1.msra.mxu0 %v1274
        %2344 = vmatprep.subr.mxu0 0.0
        %2345 = vmatpush1.msra.mxu0 0.0
        %2346 = vmatprep.subr.mxu0 0.0
        %2347 = vmatpush1.msra.mxu0 0.0
        %2348 = vmatprep.subr.mxu0 0.0
        %2349 = vmatpush1.msra.mxu0 0.0
        %2350 = vmatprep.subr.mxu0 0.0
        %2351 = vmatpush1.msra.mxu0 0.0
        %2352 = vmatprep.subr.mxu0 0.0
        %2353 = vmatpush1.msra.mxu0 0.0
        %2354 = vmatprep.subr.mxu0 0.0
        %2355 = vmatpush1.msra.mxu0 0.0
        %2356 = vmatprep.subr.mxu0 0.0
        %2357 = vmatpush1.msra.mxu0 0.0
        %2358 = vmatprep.subr.mxu0 0.0
        %2359 = vmatpush1.msra.mxu0 0.0
        %2360 = vmatprep.subr.mxu0 0.0
        %2361 = vmatpush1.msra.mxu0 0.0
        %2362 = vmatprep.subr.mxu0 0.0
        %2363 = vmatpush1.msra.mxu0 0.0
        %2364 = vmatprep.subr.mxu0 0.0
        %2365 = vmatpush1.msra.mxu0 0.0
        %2366 = vmatprep.subr.mxu0 0.0
        %2367 = vmatpush1.msra.mxu0 0.0
        %2368 = vmatprep.subr.mxu0 0.0
        %2369 = vmatpush1.msra.mxu0 0.0
        %2370 = vmatprep.subr.mxu0 0.0
        %2371 = vmatpush1.msra.mxu0 0.0
        %2372 = vmatprep.subr.mxu0 0.0
        %2373 = vmatpush1.msra.mxu0 0.0
        %2374 = vmatprep.subr.mxu0 0.0
        %2375 = vmatpush1.msra.mxu0 0.0
        %2376 = vmatprep.subr.mxu0 0.0
        %2377 = vmatpush1.msra.mxu0 0.0
        %2378 = vmatprep.subr.mxu0 0.0
        %2379 = vmatpush1.msra.mxu0 0.0
        %2380 = vmatprep.subr.mxu0 0.0
        %2381 = vmatpush1.msra.mxu0 0.0
        %2382 = vmatprep.subr.mxu0 0.0
        %2383 = vmatpush1.msra.mxu0 0.0
        %2384 = vmatprep.subr.mxu0 0.0
        %2385 = vmatpush1.msra.mxu0 0.0
        %2386 = vmatprep.subr.mxu0 0.0
        %2387 = vmatpush1.msra.mxu0 0.0
        %2388 = vmatprep.subr.mxu0 0.0
        %2389 = vmatpush1.msra.mxu0 0.0
        %2390 = vmatprep.subr.mxu0 0.0
        %2391 = vmatpush1.msra.mxu0 0.0
        %2392 = vmatprep.subr.mxu0 0.0
        %2393 = vmatpush1.msra.mxu0 0.0
        %2394 = vmatprep.subr.mxu0 0.0
        %2395 = vmatpush1.msra.mxu0 0.0
        %2396 = vmatprep.subr.mxu0 0.0
        %2397 = vmatpush1.msra.mxu0 0.0
        %2398 = vmatprep.subr.mxu0 0.0
        %2399 = vmatpush1.msra.mxu0 0.0
        %2400 = vmatprep.subr.mxu0 0.0
        %2401 = vmatpush1.msra.mxu0 0.0
        %2402 = vmatprep.subr.mxu0 0.0
        %2403 = vmatpush1.msra.mxu0 0.0
        %2404 = vmatprep.subr.mxu0 0.0
        %2405 = vmatpush1.msra.mxu0 0.0
        %2406 = vmatprep.mubr.f32.mxu0 0.0
        %2407 = vmatmul.mubr.f32.gmra.mrb[0].mxu0 %v2340
        %v2408 = vpop.f32.mrb[0].mxu0
        %v2409 = vadd.f32 0.0, %v2408
        %v2410 = vpop.f32.mrb[0].mxu0
        %2411 = vdwg.mxu0
        %v2413 = vsel %vm1351, %v2192, 0
        %2415 = vmatprep.subr.mxu0 0.0
        %2416 = vmatpush1.msra.mxu0 %v1344
        %2417 = vmatprep.subr.mxu0 0.0
        %2418 = vmatpush1.msra.mxu0 0.0
        %2419 = vmatprep.subr.mxu0 0.0
        %2420 = vmatpush1.msra.mxu0 0.0
        %2421 = vmatprep.subr.mxu0 0.0
        %2422 = vmatpush1.msra.mxu0 0.0
        %2423 = vmatprep.subr.mxu0 0.0
        %2424 = vmatpush1.msra.mxu0 0.0
        %2425 = vmatprep.subr.mxu0 0.0
        %2426 = vmatpush1.msra.mxu0 0.0
        %2427 = vmatprep.subr.mxu0 0.0
        %2428 = vmatpush1.msra.mxu0 0.0
        %2429 = vmatprep.subr.mxu0 0.0
        %2430 = vmatpush1.msra.mxu0 0.0
        %2431 = vmatprep.subr.mxu0 0.0
        %2432 = vmatpush1.msra.mxu0 0.0
        %2433 = vmatprep.subr.mxu0 0.0
        %2434 = vmatpush1.msra.mxu0 0.0
        %2435 = vmatprep.subr.mxu0 0.0
        %2436 = vmatpush1.msra.mxu0 0.0
        %2437 = vmatprep.subr.mxu0 0.0
        %2438 = vmatpush1.msra.mxu0 0.0
        %2439 = vmatprep.subr.mxu0 0.0
        %2440 = vmatpush1.msra.mxu0 0.0
        %2441 = vmatprep.subr.mxu0 0.0
        %2442 = vmatpush1.msra.mxu0 0.0
        %2443 = vmatprep.subr.mxu0 0.0
        %2444 = vmatpush1.msra.mxu0 0.0
        %2445 = vmatprep.subr.mxu0 0.0
        %2446 = vmatpush1.msra.mxu0 0.0
        %2447 = vmatprep.subr.mxu0 0.0
        %2448 = vmatpush1.msra.mxu0 0.0
        %2449 = vmatprep.subr.mxu0 0.0
        %2450 = vmatpush1.msra.mxu0 0.0
        %2451 = vmatprep.subr.mxu0 0.0
        %2452 = vmatpush1.msra.mxu0 0.0
        %2453 = vmatprep.subr.mxu0 0.0
        %2454 = vmatpush1.msra.mxu0 0.0
        %2455 = vmatprep.subr.mxu0 0.0
        %2456 = vmatpush1.msra.mxu0 0.0
        %2457 = vmatprep.subr.mxu0 0.0
        %2458 = vmatpush1.msra.mxu0 0.0
        %2459 = vmatprep.subr.mxu0 0.0
        %2460 = vmatpush1.msra.mxu0 0.0
        %2461 = vmatprep.subr.mxu0 0.0
        %2462 = vmatpush1.msra.mxu0 0.0
        %2463 = vmatprep.subr.mxu0 0.0
        %2464 = vmatpush1.msra.mxu0 0.0
        %2465 = vmatprep.subr.mxu0 0.0
        %2466 = vmatpush1.msra.mxu0 0.0
        %2467 = vmatprep.subr.mxu0 0.0
        %2468 = vmatpush1.msra.mxu0 0.0
        %2469 = vmatprep.subr.mxu0 0.0
        %2470 = vmatpush1.msra.mxu0 0.0
        %2471 = vmatprep.subr.mxu0 0.0
        %2472 = vmatpush1.msra.mxu0 0.0
        %2473 = vmatprep.subr.mxu0 0.0
        %2474 = vmatpush1.msra.mxu0 0.0
        %2475 = vmatprep.subr.mxu0 0.0
        %2476 = vmatpush1.msra.mxu0 0.0
        %2477 = vmatprep.subr.mxu0 0.0
        %2478 = vmatpush1.msra.mxu0 0.0
        %2479 = vmatprep.mubr.f32.mxu0 0.0
        %2480 = vmatmul.mubr.f32.gmra.mrb[0].mxu0 %v2413
        %v2481 = vpop.f32.mrb[0].mxu0
        %v2482 = vadd.f32 0.0, %v2481
        %v2483 = vpop.f32.mrb[0].mxu0
        %2484 = vdwg.mxu0
        %v2485 = vld [vmem:[%s6] sm:$0xff]
        %v2486 = vld [vmem:[%s6 + $0x8] sm:$0xff]
        %v2487 = vld [vmem:[%s6 + $0x10] sm:$0xff]
        %v2488 = vld [vmem:[%s6 + $0x18] sm:$0xff]
        %v2490 = vsel %vm1351, %v2263, 0
        %2492 = vmatprep.subr.mxu0 0.0
        %2493 = vmatpush1.msra.mxu0 %v2485
        %2494 = vmatprep.subr.mxu0 0.0
        %2495 = vmatpush1.msra.mxu0 0.0
        %2496 = vmatprep.subr.mxu0 0.0
        %2497 = vmatpush1.msra.mxu0 0.0
        %2498 = vmatprep.subr.mxu0 0.0
        %2499 = vmatpush1.msra.mxu0 0.0
        %2500 = vmatprep.subr.mxu0 0.0
        %2501 = vmatpush1.msra.mxu0 0.0
        %2502 = vmatprep.subr.mxu0 0.0
        %2503 = vmatpush1.msra.mxu0 0.0
        %2504 = vmatprep.subr.mxu0 0.0
        %2505 = vmatpush1.msra.mxu0 0.0
        %2506 = vmatprep.subr.mxu0 0.0
        %2507 = vmatpush1.msra.mxu0 0.0
        %2508 = vmatprep.subr.mxu0 0.0
        %2509 = vmatpush1.msra.mxu0 0.0
        %2510 = vmatprep.subr.mxu0 0.0
        %2511 = vmatpush1.msra.mxu0 0.0
        %2512 = vmatprep.subr.mxu0 0.0
        %2513 = vmatpush1.msra.mxu0 0.0
        %2514 = vmatprep.subr.mxu0 0.0
        %2515 = vmatpush1.msra.mxu0 0.0
        %2516 = vmatprep.subr.mxu0 0.0
        %2517 = vmatpush1.msra.mxu0 0.0
        %2518 = vmatprep.subr.mxu0 0.0
        %2519 = vmatpush1.msra.mxu0 0.0
        %2520 = vmatprep.subr.mxu0 0.0
        %2521 = vmatpush1.msra.mxu0 0.0
        %2522 = vmatprep.subr.mxu0 0.0
        %2523 = vmatpush1.msra.mxu0 0.0
        %2524 = vmatprep.subr.mxu0 0.0
        %2525 = vmatpush1.msra.mxu0 0.0
        %2526 = vmatprep.subr.mxu0 0.0
        %2527 = vmatpush1.msra.mxu0 0.0
        %2528 = vmatprep.subr.mxu0 0.0
        %2529 = vmatpush1.msra.mxu0 0.0
        %2530 = vmatprep.subr.mxu0 0.0
        %2531 = vmatpush1.msra.mxu0 0.0
        %2532 = vmatprep.subr.mxu0 0.0
        %2533 = vmatpush1.msra.mxu0 0.0
        %2534 = vmatprep.subr.mxu0 0.0
        %2535 = vmatpush1.msra.mxu0 0.0
        %2536 = vmatprep.subr.mxu0 0.0
        %2537 = vmatpush1.msra.mxu0 0.0
        %2538 = vmatprep.subr.mxu0 0.0
        %2539 = vmatpush1.msra.mxu0 0.0
        %2540 = vmatprep.subr.mxu0 0.0
        %2541 = vmatpush1.msra.mxu0 0.0
        %2542 = vmatprep.subr.mxu0 0.0
        %2543 = vmatpush1.msra.mxu0 0.0
        %2544 = vmatprep.subr.mxu0 0.0
        %2545 = vmatpush1.msra.mxu0 0.0
        %2546 = vmatprep.subr.mxu0 0.0
        %2547 = vmatpush1.msra.mxu0 0.0
        %2548 = vmatprep.subr.mxu0 0.0
        %2549 = vmatpush1.msra.mxu0 0.0
        %2550 = vmatprep.subr.mxu0 0.0
        %2551 = vmatpush1.msra.mxu0 0.0
        %2552 = vmatprep.subr.mxu0 0.0
        %2553 = vmatpush1.msra.mxu0 0.0
        %2554 = vmatprep.subr.mxu0 0.0
        %2555 = vmatpush1.msra.mxu0 0.0
        %2556 = vmatprep.mubr.f32.mxu0 0.0
        %2557 = vmatmul.mubr.f32.gmra.mrb[0].mxu0 %v2490
        %v2558 = vpop.f32.mrb[0].mxu0
        %v2559 = vadd.f32 0.0, %v2558
        %v2560 = vpop.f32.mrb[0].mxu0
        %2561 = vdwg.mxu0
        %v2563 = vsel %vm1351, %v2336, 0
        %2565 = vmatprep.subr.mxu0 0.0
        %2566 = vmatpush1.msra.mxu0 %v2486
        %2567 = vmatprep.subr.mxu0 0.0
        %2568 = vmatpush1.msra.mxu0 0.0
        %2569 = vmatprep.subr.mxu0 0.0
        %2570 = vmatpush1.msra.mxu0 0.0
        %2571 = vmatprep.subr.mxu0 0.0
        %2572 = vmatpush1.msra.mxu0 0.0
        %2573 = vmatprep.subr.mxu0 0.0
        %2574 = vmatpush1.msra.mxu0 0.0
        %2575 = vmatprep.subr.mxu0 0.0
        %2576 = vmatpush1.msra.mxu0 0.0
        %2577 = vmatprep.subr.mxu0 0.0
        %2578 = vmatpush1.msra.mxu0 0.0
        %2579 = vmatprep.subr.mxu0 0.0
        %2580 = vmatpush1.msra.mxu0 0.0
        %2581 = vmatprep.subr.mxu0 0.0
        %2582 = vmatpush1.msra.mxu0 0.0
        %2583 = vmatprep.subr.mxu0 0.0
        %2584 = vmatpush1.msra.mxu0 0.0
        %2585 = vmatprep.subr.mxu0 0.0
        %2586 = vmatpush1.msra.mxu0 0.0
        %2587 = vmatprep.subr.mxu0 0.0
        %2588 = vmatpush1.msra.mxu0 0.0
        %2589 = vmatprep.subr.mxu0 0.0
        %2590 = vmatpush1.msra.mxu0 0.0
        %2591 = vmatprep.subr.mxu0 0.0
        %2592 = vmatpush1.msra.mxu0 0.0
        %2593 = vmatprep.subr.mxu0 0.0
        %2594 = vmatpush1.msra.mxu0 0.0
        %2595 = vmatprep.subr.mxu0 0.0
        %2596 = vmatpush1.msra.mxu0 0.0
        %2597 = vmatprep.subr.mxu0 0.0
        %2598 = vmatpush1.msra.mxu0 0.0
        %2599 = vmatprep.subr.mxu0 0.0
        %2600 = vmatpush1.msra.mxu0 0.0
        %2601 = vmatprep.subr.mxu0 0.0
        %2602 = vmatpush1.msra.mxu0 0.0
        %2603 = vmatprep.subr.mxu0 0.0
        %2604 = vmatpush1.msra.mxu0 0.0
        %2605 = vmatprep.subr.mxu0 0.0
        %2606 = vmatpush1.msra.mxu0 0.0
        %2607 = vmatprep.subr.mxu0 0.0
        %2608 = vmatpush1.msra.mxu0 0.0
        %2609 = vmatprep.subr.mxu0 0.0
        %2610 = vmatpush1.msra.mxu0 0.0
        %2611 = vmatprep.subr.mxu0 0.0
        %2612 = vmatpush1.msra.mxu0 0.0
        %2613 = vmatprep.subr.mxu0 0.0
        %2614 = vmatpush1.msra.mxu0 0.0
        %2615 = vmatprep.subr.mxu0 0.0
        %2616 = vmatpush1.msra.mxu0 0.0
        %2617 = vmatprep.subr.mxu0 0.0
        %2618 = vmatpush1.msra.mxu0 0.0
        %2619 = vmatprep.subr.mxu0 0.0
        %2620 = vmatpush1.msra.mxu0 0.0
        %2621 = vmatprep.subr.mxu0 0.0
        %2622 = vmatpush1.msra.mxu0 0.0
        %2623 = vmatprep.subr.mxu0 0.0
        %2624 = vmatpush1.msra.mxu0 0.0
        %2625 = vmatprep.subr.mxu0 0.0
        %2626 = vmatpush1.msra.mxu0 0.0
        %2627 = vmatprep.subr.mxu0 0.0
        %2628 = vmatpush1.msra.mxu0 0.0
        %2629 = vmatprep.mubr.f32.mxu0 0.0
        %2630 = vmatmul.mubr.f32.gmra.mrb[0].mxu0 %v2563
        %v2631 = vpop.f32.mrb[0].mxu0
        %v2632 = vadd.f32 0.0, %v2631
        %v2633 = vpop.f32.mrb[0].mxu0
        %2634 = vdwg.mxu0
        %v2636 = vsel %vm1351, %v2409, 0
        %2638 = vmatprep.subr.mxu0 0.0
        %2639 = vmatpush1.msra.mxu0 %v2487
        %2640 = vmatprep.subr.mxu0 0.0
        %2641 = vmatpush1.msra.mxu0 0.0
        %2642 = vmatprep.subr.mxu0 0.0
        %2643 = vmatpush1.msra.mxu0 0.0
        %2644 = vmatprep.subr.mxu0 0.0
        %2645 = vmatpush1.msra.mxu0 0.0
        %2646 = vmatprep.subr.mxu0 0.0
        %2647 = vmatpush1.msra.mxu0 0.0
        %2648 = vmatprep.subr.mxu0 0.0
        %2649 = vmatpush1.msra.mxu0 0.0
        %2650 = vmatprep.subr.mxu0 0.0
        %2651 = vmatpush1.msra.mxu0 0.0
        %2652 = vmatprep.subr.mxu0 0.0
        %2653 = vmatpush1.msra.mxu0 0.0
        %2654 = vmatprep.subr.mxu0 0.0
        %2655 = vmatpush1.msra.mxu0 0.0
        %2656 = vmatprep.subr.mxu0 0.0
        %2657 = vmatpush1.msra.mxu0 0.0
        %2658 = vmatprep.subr.mxu0 0.0
        %2659 = vmatpush1.msra.mxu0 0.0
        %2660 = vmatprep.subr.mxu0 0.0
        %2661 = vmatpush1.msra.mxu0 0.0
        %2662 = vmatprep.subr.mxu0 0.0
        %2663 = vmatpush1.msra.mxu0 0.0
        %2664 = vmatprep.subr.mxu0 0.0
        %2665 = vmatpush1.msra.mxu0 0.0
        %2666 = vmatprep.subr.mxu0 0.0
        %2667 = vmatpush1.msra.mxu0 0.0
        %2668 = vmatprep.subr.mxu0 0.0
        %2669 = vmatpush1.msra.mxu0 0.0
        %2670 = vmatprep.subr.mxu0 0.0
        %2671 = vmatpush1.msra.mxu0 0.0
        %2672 = vmatprep.subr.mxu0 0.0
        %2673 = vmatpush1.msra.mxu0 0.0
        %2674 = vmatprep.subr.mxu0 0.0
        %2675 = vmatpush1.msra.mxu0 0.0
        %2676 = vmatprep.subr.mxu0 0.0
        %2677 = vmatpush1.msra.mxu0 0.0
        %2678 = vmatprep.subr.mxu0 0.0
        %2679 = vmatpush1.msra.mxu0 0.0
        %2680 = vmatprep.subr.mxu0 0.0
        %2681 = vmatpush1.msra.mxu0 0.0
        %2682 = vmatprep.subr.mxu0 0.0
        %2683 = vmatpush1.msra.mxu0 0.0
        %2684 = vmatprep.subr.mxu0 0.0
        %2685 = vmatpush1.msra.mxu0 0.0
        %2686 = vmatprep.subr.mxu0 0.0
        %2687 = vmatpush1.msra.mxu0 0.0
        %2688 = vmatprep.subr.mxu0 0.0
        %2689 = vmatpush1.msra.mxu0 0.0
        %2690 = vmatprep.subr.mxu0 0.0
        %2691 = vmatpush1.msra.mxu0 0.0
        %2692 = vmatprep.subr.mxu0 0.0
        %2693 = vmatpush1.msra.mxu0 0.0
        %2694 = vmatprep.subr.mxu0 0.0
        %2695 = vmatpush1.msra.mxu0 0.0
        %2696 = vmatprep.subr.mxu0 0.0
        %2697 = vmatpush1.msra.mxu0 0.0
        %2698 = vmatprep.subr.mxu0 0.0
        %2699 = vmatpush1.msra.mxu0 0.0
        %2700 = vmatprep.subr.mxu0 0.0
        %2701 = vmatpush1.msra.mxu0 0.0
        %2702 = vmatprep.mubr.f32.mxu0 0.0
        %2703 = vmatmul.mubr.f32.gmra.mrb[0].mxu0 %v2636
        %v2704 = vpop.f32.mrb[0].mxu0
        %v2705 = vadd.f32 0.0, %v2704
        %v2706 = vpop.f32.mrb[0].mxu0
        %2707 = vdwg.mxu0
        %v2709 = vsel %vm1351, %v2482, 0
        %2711 = vmatprep.subr.mxu0 0.0
        %2712 = vmatpush1.msra.mxu0 %v2488
        %2713 = vmatprep.subr.mxu0 0.0
        %2714 = vmatpush1.msra.mxu0 0.0
        %2715 = vmatprep.subr.mxu0 0.0
        %2716 = vmatpush1.msra.mxu0 0.0
        %2717 = vmatprep.subr.mxu0 0.0
        %2718 = vmatpush1.msra.mxu0 0.0
        %2719 = vmatprep.subr.mxu0 0.0
        %2720 = vmatpush1.msra.mxu0 0.0
        %2721 = vmatprep.subr.mxu0 0.0
        %2722 = vmatpush1.msra.mxu0 0.0
        %2723 = vmatprep.subr.mxu0 0.0
        %2724 = vmatpush1.msra.mxu0 0.0
        %2725 = vmatprep.subr.mxu0 0.0
        %2726 = vmatpush1.msra.mxu0 0.0
        %2727 = vmatprep.subr.mxu0 0.0
        %2728 = vmatpush1.msra.mxu0 0.0
        %2729 = vmatprep.subr.mxu0 0.0
        %2730 = vmatpush1.msra.mxu0 0.0
        %2731 = vmatprep.subr.mxu0 0.0
        %2732 = vmatpush1.msra.mxu0 0.0
        %2733 = vmatprep.subr.mxu0 0.0
        %2734 = vmatpush1.msra.mxu0 0.0
        %2735 = vmatprep.subr.mxu0 0.0
        %2736 = vmatpush1.msra.mxu0 0.0
        %2737 = vmatprep.subr.mxu0 0.0
        %2738 = vmatpush1.msra.mxu0 0.0
        %2739 = vmatprep.subr.mxu0 0.0
        %2740 = vmatpush1.msra.mxu0 0.0
        %2741 = vmatprep.subr.mxu0 0.0
        %2742 = vmatpush1.msra.mxu0 0.0
        %2743 = vmatprep.subr.mxu0 0.0
        %2744 = vmatpush1.msra.mxu0 0.0
        %2745 = vmatprep.subr.mxu0 0.0
        %2746 = vmatpush1.msra.mxu0 0.0
        %2747 = vmatprep.subr.mxu0 0.0
        %2748 = vmatpush1.msra.mxu0 0.0
        %2749 = vmatprep.subr.mxu0 0.0
        %2750 = vmatpush1.msra.mxu0 0.0
        %2751 = vmatprep.subr.mxu0 0.0
        %2752 = vmatpush1.msra.mxu0 0.0
        %2753 = vmatprep.subr.mxu0 0.0
        %2754 = vmatpush1.msra.mxu0 0.0
        %2755 = vmatprep.subr.mxu0 0.0
        %2756 = vmatpush1.msra.mxu0 0.0
        %2757 = vmatprep.subr.mxu0 0.0
        %2758 = vmatpush1.msra.mxu0 0.0
        %2759 = vmatprep.subr.mxu0 0.0
        %2760 = vmatpush1.msra.mxu0 0.0
        %2761 = vmatprep.subr.mxu0 0.0
        %2762 = vmatpush1.msra.mxu0 0.0
        %2763 = vmatprep.subr.mxu0 0.0
        %2764 = vmatpush1.msra.mxu0 0.0
        %2765 = vmatprep.subr.mxu0 0.0
        %2766 = vmatpush1.msra.mxu0 0.0
        %2767 = vmatprep.subr.mxu0 0.0
        %2768 = vmatpush1.msra.mxu0 0.0
        %2769 = vmatprep.subr.mxu0 0.0
        %2770 = vmatpush1.msra.mxu0 0.0
        %2771 = vmatprep.subr.mxu0 0.0
        %2772 = vmatpush1.msra.mxu0 0.0
        %2773 = vmatprep.subr.mxu0 0.0
        %2774 = vmatpush1.msra.mxu0 0.0
        %2775 = vmatprep.mubr.f32.mxu0 0.0
        %2776 = vmatmul.mubr.f32.gmra.mrb[0].mxu0 %v2709
        %v2777 = vpop.f32.mrb[0].mxu0
        %v2778 = vadd.f32 0.0, %v2777
        %v2779 = vpop.f32.mrb[0].mxu0
        %2780 = vdwg.mxu0
        %v2781 = vsel %vm347, %v2559, 0.0
        %v2782 = vsel %vm347, %v2632, 0.0
        %v2783 = vadd.f32 %v2781, %v2782
        %v2784 = vsel %vm347, %v2705, 0.0
        %v2785 = vadd.f32 %v2783, %v2784
        %v2786 = vsel %vm347, %v2778, 0.0
        %v2787 = vadd.f32 %v2785, %v2786
        %v2788 = vlaneseq
        %v2789 = vshrl.u32 %v2788, 7
        %v2790 = vsub.s32 4, %v2789
        %v2791 = vrot.slane %v346, %v2790
        %v2792 = vadd.f32 %v2787, %v2791
        %v2793 = vadd.f32 %v345, %v2792
        %v2794 = vsel %vm347, %v2793, 0.0
        %2795 = vadd.xlane.f32.xlu0 %v2794
        %v2796 = vpop.xlane.xlu0 %2795
        %v2797 = vmul.f32 %v2796, %v351
        %v2798 = vsub.f32 %v2793, %v2797
        %v2799 = vmul.f32 %v2798, %v2798
        %v2800 = vsel %vm347, %v2799, 0.0
        %2801 = vadd.xlane.f32.xlu0 %v2800
        %v2802 = vpop.xlane.xlu0 %2801
        %v2803 = vmul.f32 %v2802, %v351
        %v2804 = vadd.f32 %v2803, 1e-06
        %v2805 = vrsqrt.pop %v2804
        %v2806 = vmul.f32 %v2798, %v2805
        %v2807 = vlaneseq
        %v2808 = vshrl.u32 %v2807, 7
        %v2809 = vsub.s32 2, %v2808
        %v2810 = vrot.slane %v346, %v2809
        %v2811 = vmul.f32 %v2806, %v2810
        %v2812 = vlaneseq
        %v2813 = vshrl.u32 %v2812, 7
        %v2814 = vsub.s32 3, %v2813
        %v2815 = vrot.slane %v346, %v2814
        %v2816 = vadd.f32 %v2811, %v2815
        %v2817 = vld [vmem:[%s7] sm:$0xff]
        %v2818 = vld [vmem:[%s7 + $0x8] sm:$0xff]
        %v2819 = vld [vmem:[%s7 + $0x10] sm:$0xff]
        %v2820 = vld [vmem:[%s7 + $0x18] sm:$0xff]
        %v2821 = vlaneseq
        %v2822 = vshrl.u32 %v2821, 7
        %v2823 = vsub.s32 6, %v2822
        %v2824 = vrot.slane %v346, %v2823
        %v2826 = vsel %vm347, %v2816, 0
        %2828 = vmatprep.subr.mxu0 0.0
        %2829 = vmatpush1.msra.mxu0 %v2817
        %2830 = vmatprep.subr.mxu0 0.0
        %2831 = vmatpush1.msra.mxu0 %v2818
        %2832 = vmatprep.subr.mxu0 0.0
        %2833 = vmatpush1.msra.mxu0 %v2819
        %2834 = vmatprep.subr.mxu0 0.0
        %2835 = vmatpush1.msra.mxu0 %v2820
        %2836 = vmatprep.subr.mxu0 0.0
        %2837 = vmatpush1.msra.mxu0 0.0
        %2838 = vmatprep.subr.mxu0 0.0
        %2839 = vmatpush1.msra.mxu0 0.0
        %2840 = vmatprep.subr.mxu0 0.0
        %2841 = vmatpush1.msra.mxu0 0.0
        %2842 = vmatprep.subr.mxu0 0.0
        %2843 = vmatpush1.msra.mxu0 0.0
        %2844 = vmatprep.subr.mxu0 0.0
        %2845 = vmatpush1.msra.mxu0 0.0
        %2846 = vmatprep.subr.mxu0 0.0
        %2847 = vmatpush1.msra.mxu0 0.0
        %2848 = vmatprep.subr.mxu0 0.0
        %2849 = vmatpush1.msra.mxu0 0.0
        %2850 = vmatprep.subr.mxu0 0.0
        %2851 = vmatpush1.msra.mxu0 0.0
        %2852 = vmatprep.subr.mxu0 0.0
        %2853 = vmatpush1.msra.mxu0 0.0
        %2854 = vmatprep.subr.mxu0 0.0
        %2855 = vmatpush1.msra.mxu0 0.0
        %2856 = vmatprep.subr.mxu0 0.0
        %2857 = vmatpush1.msra.mxu0 0.0
        %2858 = vmatprep.subr.mxu0 0.0
        %2859 = vmatpush1.msra.mxu0 0.0
        %2860 = vmatprep.subr.mxu0 0.0
        %2861 = vmatpush1.msra.mxu0 0.0
        %2862 = vmatprep.subr.mxu0 0.0
        %2863 = vmatpush1.msra.mxu0 0.0
        %2864 = vmatprep.subr.mxu0 0.0
        %2865 = vmatpush1.msra.mxu0 0.0
        %2866 = vmatprep.subr.mxu0 0.0
        %2867 = vmatpush1.msra.mxu0 0.0
        %2868 = vmatprep.subr.mxu0 0.0
        %2869 = vmatpush1.msra.mxu0 0.0
        %2870 = vmatprep.subr.mxu0 0.0
        %2871 = vmatpush1.msra.mxu0 0.0
        %2872 = vmatprep.subr.mxu0 0.0
        %2873 = vmatpush1.msra.mxu0 0.0
        %2874 = vmatprep.subr.mxu0 0.0
        %2875 = vmatpush1.msra.mxu0 0.0
        %2876 = vmatprep.subr.mxu0 0.0
        %2877 = vmatpush1.msra.mxu0 0.0
        %2878 = vmatprep.subr.mxu0 0.0
        %2879 = vmatpush1.msra.mxu0 0.0
        %2880 = vmatprep.subr.mxu0 0.0
        %2881 = vmatpush1.msra.mxu0 0.0
        %2882 = vmatprep.subr.mxu0 0.0
        %2883 = vmatpush1.msra.mxu0 0.0
        %2884 = vmatprep.subr.mxu0 0.0
        %2885 = vmatpush1.msra.mxu0 0.0
        %2886 = vmatprep.subr.mxu0 0.0
        %2887 = vmatpush1.msra.mxu0 0.0
        %2888 = vmatprep.subr.mxu0 0.0
        %2889 = vmatpush1.msra.mxu0 0.0
        %2890 = vmatprep.subr.mxu0 0.0
        %2891 = vmatpush1.msra.mxu0 0.0
        %2892 = vmatprep.mubr.f32.mxu0 0.0
        %2893 = vmatmul.mubr.f32.gmra.mrb[0].mxu0 %v2826
        %v2894 = vpop.f32.mrb[0].mxu0
        %v2895 = vadd.f32 %v2824, %v2894
        %v2896 = vpop.f32.mrb[0].mxu0
        %2897 = vdwg.mxu0
        %v2898 = vmax.f32 %v2895, 0.0
        %v2899 = vld [vmem:[%s8] sm:$0xff]
        %v2900 = vld [vmem:[%s8 + $0x8] sm:$0xff]
        %v2901 = vld [vmem:[%s8 + $0x10] sm:$0xff]
        %v2902 = vld [vmem:[%s8 + $0x18] sm:$0xff]
        %v2903 = vld [vmem:[%s8 + $0x20] sm:$0xff]
        %v2904 = vld [vmem:[%s8 + $0x28] sm:$0xff]
        %v2905 = vld [vmem:[%s8 + $0x30] sm:$0xff]
        %v2906 = vld [vmem:[%s8 + $0x38] sm:$0xff]
        %v2907 = vlaneseq
        %v2908 = vshrl.u32 %v2907, 7
        %v2909 = vsub.s32 5, %v2908
        %v2910 = vrot.slane %v346, %v2909
        %vm2911 = vcmask 523264
        %v2913 = vsel %vm2911, %v2898, 0
        %2915 = vmatprep.subr.mxu0 0.0
        %2916 = vmatpush1.msra.mxu0 %v2899
        %2917 = vmatprep.subr.mxu0 0.0
        %2918 = vmatpush1.msra.mxu0 %v2900
        %2919 = vmatprep.subr.mxu0 0.0
        %2920 = vmatpush1.msra.mxu0 %v2901
        %2921 = vmatprep.subr.mxu0 0.0
        %2922 = vmatpush1.msra.mxu0 %v2902
        %2923 = vmatprep.subr.mxu0 0.0
        %2924 = vmatpush1.msra.mxu0 %v2903
        %2925 = vmatprep.subr.mxu0 0.0
        %2926 = vmatpush1.msra.mxu0 %v2904
        %2927 = vmatprep.subr.mxu0 0.0
        %2928 = vmatpush1.msra.mxu0 %v2905
        %2929 = vmatprep.subr.mxu0 0.0
        %2930 = vmatpush1.msra.mxu0 %v2906
        %2931 = vmatprep.subr.mxu0 0.0
        %2932 = vmatpush1.msra.mxu0 0.0
        %2933 = vmatprep.subr.mxu0 0.0
        %2934 = vmatpush1.msra.mxu0 0.0
        %2935 = vmatprep.subr.mxu0 0.0
        %2936 = vmatpush1.msra.mxu0 0.0
        %2937 = vmatprep.subr.mxu0 0.0
        %2938 = vmatpush1.msra.mxu0 0.0
        %2939 = vmatprep.subr.mxu0 0.0
        %2940 = vmatpush1.msra.mxu0 0.0
        %2941 = vmatprep.subr.mxu0 0.0
        %2942 = vmatpush1.msra.mxu0 0.0
        %2943 = vmatprep.subr.mxu0 0.0
        %2944 = vmatpush1.msra.mxu0 0.0
        %2945 = vmatprep.subr.mxu0 0.0
        %2946 = vmatpush1.msra.mxu0 0.0
        %2947 = vmatprep.subr.mxu0 0.0
        %2948 = vmatpush1.msra.mxu0 0.0
        %2949 = vmatprep.subr.mxu0 0.0
        %2950 = vmatpush1.msra.mxu0 0.0
        %2951 = vmatprep.subr.mxu0 0.0
        %2952 = vmatpush1.msra.mxu0 0.0
        %2953 = vmatprep.subr.mxu0 0.0
        %2954 = vmatpush1.msra.mxu0 0.0
        %2955 = vmatprep.subr.mxu0 0.0
        %2956 = vmatpush1.msra.mxu0 0.0
        %2957 = vmatprep.subr.mxu0 0.0
        %2958 = vmatpush1.msra.mxu0 0.0
        %2959 = vmatprep.subr.mxu0 0.0
        %2960 = vmatpush1.msra.mxu0 0.0
        %2961 = vmatprep.subr.mxu0 0.0
        %2962 = vmatpush1.msra.mxu0 0.0
        %2963 = vmatprep.subr.mxu0 0.0
        %2964 = vmatpush1.msra.mxu0 0.0
        %2965 = vmatprep.subr.mxu0 0.0
        %2966 = vmatpush1.msra.mxu0 0.0
        %2967 = vmatprep.subr.mxu0 0.0
        %2968 = vmatpush1.msra.mxu0 0.0
        %2969 = vmatprep.subr.mxu0 0.0
        %2970 = vmatpush1.msra.mxu0 0.0
        %2971 = vmatprep.subr.mxu0 0.0
        %2972 = vmatpush1.msra.mxu0 0.0
        %2973 = vmatprep.subr.mxu0 0.0
        %2974 = vmatpush1.msra.mxu0 0.0
        %2975 = vmatprep.subr.mxu0 0.0
        %2976 = vmatpush1.msra.mxu0 0.0
        %2977 = vmatprep.subr.mxu0 0.0
        %2978 = vmatpush1.msra.mxu0 0.0
        %2979 = vmatprep.mubr.f32.mxu0 0.0
        %2980 = vmatmul.mubr.f32.gmra.mrb[0].mxu0 %v2913
        %v2981 = vpop.f32.mrb[0].mxu0
        %v2982 = vadd.f32 %v2910, %v2981
        %v2983 = vpop.f32.mrb[0].mxu0
        %2984 = vdwg.mxu0
        %v2985 = vadd.f32 %v2982, %v2793
        %2986 = vst.msk [vmem:[%s336] sm:$0xff] %vm347, %v2985
        %s2987 = sand.u32 %s230, 1
        %s2988 = scalar_lea.sflag [#allocation3], %s2987
        %s2989 = sand.u32 %s230, 1
        %s2990 = smul.addr %s2989, 8
        %s2991 = scalar_lea.vmem [#allocation2], %s2990
        // Predicated region
        $region57: #{tpu_custom_call.1} parent=55 // pred_check
          %p2992 = pneg %p240
        $region58: #{tpu_custom_call.1} parent=55 // pred_check_branch
          %2994 = sbr.rel (%p2992) target = $region60
        $region59: #{tpu_custom_call.1} parent=55 // pred_region
          %s2996 = ssub.s32 128, 128
          %2997 = vsyncadd %s2988, %s2996
          %s2998 = smul.addr %s23, 128
          %s2999 = scalar_lea.hbm %s9, %s2998
          %s3001 = sshll.u32 %s2991, 4
          %s3002 = int_to_ptr.vmem [resolvable:$true] %s3001
          %3004 = dma.vmem_to_hbm [thread:$0]  %s3002, 128, %s2999, %s2988
        $region60: #{tpu_custom_call.1} parent=55 // pred_fallthru
          _
      $region56: #{tpu_custom_call.1} parent=5 // pred_fallthru
        _
      %p3005 = scmp.le.s32.totalorder 2, %s18
      // Predicated region
      $region61: #{tpu_custom_call.1} parent=5 // pred_check
        %p3006 = pneg %p3005
      $region62: #{tpu_custom_call.1} parent=5 // pred_check_branch
        %3008 = sbr.rel (%p3006) target = $region64
      $region63: #{tpu_custom_call.1} parent=5 // pred_region
        %s3009 = ssub.s32 %s18, 2
        // Predicated region
        $region65: #{tpu_custom_call.1} parent=63 // pred_check
          %p3010 = pneg %p246
        $region66: #{tpu_custom_call.1} parent=63 // pred_check_branch
          %3012 = sbr.rel (%p3010) target = $region68
        $region67: #{tpu_custom_call.1} parent=63 // pred_region
          %s3013 = sand.u32 %s231, 1
          %s3014 = scalar_lea.sflag [#allocation3], %s3013
          %s3015 = sand.u32 %s231, 1
          %s3016 = smul.addr %s3015, 8
          %s3017 = scalar_lea.vmem [#allocation2], %s3016
          %3018 = dma.done %s3014, 128
        $region68: #{tpu_custom_call.1} parent=63 // pred_fallthru
          _
      $region64: #{tpu_custom_call.1} parent=5 // pred_fallthru
        _
    $region6: #{tpu_custom_call.1} parent=1 // loop_footer
      %s22 = sadd.s32 1, %s18
    $region7: #{tpu_custom_call.1} parent=1 // loop_footer_branch
      %17 = sbr.rel target = $region3
    $region8: #{tpu_custom_call.1} parent=1 // loop_exit
      _
    %3019 = vsyncpa [#allocation3], 1
    %s3020 = scalar_lea.sflag [#allocation3], 1
    %3021 = vsyncpa %s3020, 1

</llo_original>
